<compile_context>
chip_gen: v7x
topology: tpu7x:2x2x1
jax: 0.10.0
libtpu: 0.0.40
codegen_flags: <defaults>
</compile_context>

<pallas_src>
import functools

import numpy as np
import jax
import jax.numpy as jnp
from jax.experimental import pallas as pl
from jax.experimental.pallas import tpu as pltpu


F_PAD = 128        # padded feature width (lane-dense, MXU friendly)
CLASS_PAD = 8      # padded class width (f32 sublane multiple)
SEL_R, SEL_C = 8, 128   # tile-aligned slab for per-step selected-index output


# ----------------------------------------------------------------------------
# Fused BootGCN encoder: grid=(n_layers,), es/ps VMEM-resident across layers.
# TODO(synk): BootGCNLayer source is not provided; implemented as a standard
# bipartite GCN layer (pattern<-entity and entity<-pattern propagation + self
# transform + global seed-mean feature, ReLU).  'disable_global' is ignored.
# ----------------------------------------------------------------------------
def _gcn_stack_kernel(es_in_ref, ps_in_ref, ep_ref, pe_ref, sm_ref,
                      wp_ref, bp_ref, wes_ref, wg_ref, be_ref,
                      es_ref, ps_ref):
    layer = pl.program_id(0)

    @pl.when(layer == 0)
    def _():
        es_ref[...] = es_in_ref[...]
        ps_ref[...] = ps_in_ref[...]

    es = es_ref[...]                      # [E, Fp] f32 (VMEM-resident across layers)
    ps = ps_ref[...]                      # [P, Fp] f32
    es_b = es.astype(jnp.bfloat16)        # cast once per layer
    ps_b = ps.astype(jnp.bfloat16)

    # ---- pattern update: aggregate entities, K-concat [p_agg ‖ ps] @ [w_p; w_pp]
    p_agg = jnp.dot(pe_ref[...], es_b, preferred_element_type=jnp.float32)     # [P, Fp]
    p_cat = jnp.concatenate([p_agg.astype(jnp.bfloat16), ps_b], axis=1)        # [P, 2Fp] bf16
    ps_new = jnp.maximum(
        jnp.dot(p_cat, wp_ref[0], preferred_element_type=jnp.float32) + bp_ref[0],
        0.0)

    # ---- entity update: aggregate patterns + self; global term hoisted:
    #      (e_agg ‖ es) @ [w_e; w_s] + (g @ w_g) + b_e
    e_agg = jnp.dot(ep_ref[...], ps_new.astype(jnp.bfloat16),
                    preferred_element_type=jnp.float32)                        # [E, Fp]
    g = jnp.dot(sm_ref[...], es_b, preferred_element_type=jnp.float32)         # [1, Fp]
    g_w = jnp.dot(g.astype(jnp.bfloat16), wg_ref[0],
                  preferred_element_type=jnp.float32)                          # [1, Fp]
    e_cat = jnp.concatenate([e_agg.astype(jnp.bfloat16), es_b], axis=1)        # [E, 2Fp] bf16
    es_new = jnp.maximum(
        jnp.dot(e_cat, wes_ref[0], preferred_element_type=jnp.float32) + g_w + be_ref[0],
        0.0)

    es_ref[...] = es_new
    ps_ref[...] = ps_new


def bootgcn_encode(params, seeds, es, ps, ep_adj, pe_adj):
    E, Fp = es.shape
    P = ps.shape[0]
    L = params["gcn_w_p"].shape[0]
    num_seeds = seeds.shape[0]

    # global seed feature = mean of es[seeds], expressed as a constant 1/num_seeds
    # selection row so it is recomputed in-kernel from the updated es each layer.
    seed_mean = (jnp.zeros((1, E), jnp.float32)
                 .at[0, seeds].set(1.0 / num_seeds)
                 .astype(jnp.bfloat16))

    idx2 = lambda l: (0, 0)
    idx3 = lambda l: (l, 0, 0)

    es_out, ps_out = pl.pallas_call(
        _gcn_stack_kernel,
        grid=(L,),
        in_specs=[
            pl.BlockSpec((E, Fp), idx2),              # es_in   (f32)
            pl.BlockSpec((P, Fp), idx2),              # ps_in   (f32)
            pl.BlockSpec((E, P), idx2),               # ep_adj  (bf16)
            pl.BlockSpec((P, E), idx2),               # pe_adj  (bf16)
            pl.BlockSpec((1, E), idx2),               # seed_mean (bf16)
            pl.BlockSpec((1, 2 * Fp, Fp), idx3),      # [w_p; w_pp] per layer (bf16)
            pl.BlockSpec((1, 1, Fp), idx3),           # b_p per layer (f32)
            pl.BlockSpec((1, 2 * Fp, Fp), idx3),      # [w_e; w_s]  per layer (bf16)
            pl.BlockSpec((1, Fp, Fp), idx3),          # w_g per layer (bf16)
            pl.BlockSpec((1, 1, Fp), idx3),           # b_e per layer (f32)
        ],
        out_specs=[pl.BlockSpec((E, Fp), idx2),       # es stays VMEM-resident
                   pl.BlockSpec((P, Fp), idx2)],      # ps stays VMEM-resident
        out_shape=[jax.ShapeDtypeStruct((E, Fp), jnp.float32),
                   jax.ShapeDtypeStruct((P, Fp), jnp.float32)],
        compiler_params=pltpu.CompilerParams(dimension_semantics=("arbitrary",)),
    )(es, ps,
      ep_adj.astype(jnp.bfloat16), pe_adj.astype(jnp.bfloat16), seed_mean,
      params["gcn_w_p"], params["gcn_b_p"],
      params["gcn_w_es"], params["gcn_w_g"], params["gcn_b_e"])
    return es_out, ps_out


# ----------------------------------------------------------------------------
# Fully fused BootDecoder: ONE pallas_call, grid=(rnn_step,).
# Pooling + GRUCell + neighbor-match counts + cosine sims + per-class top-k
# selection + state updates all happen in-kernel; hx / sel_mat / cate_group /
# entity_mask / bf16+normalized es live in VMEM scratch across steps.
# ----------------------------------------------------------------------------
def _decoder_stack_kernel(mm_ref,                                      # SMEM schedule
                          es_ref, nb_ref, isel_ref, icg_ref, imask_ref,
                          wih_ref, whh_ref, bih_ref, bhh_ref,
                          hx_out, probs_out, selidx_out,
                          hx_s, sel_s, cg_s, mask_s, esb_s, esn_s,
                          *, n_class, select_num):
    step = pl.program_id(0)
    E, Fp = es_ref.shape
    Cp = hx_s.shape[0]
    SR, SC = selidx_out.shape[1], selidx_out.shape[2]

    @pl.when(step == 0)
    def _():
        es = es_ref[...]
        esb_s[...] = es.astype(jnp.bfloat16)                           # cast once
        esn_s[...] = (es * jax.lax.rsqrt(
            jnp.sum(es * es, axis=-1, keepdims=True) + 1e-12)).astype(jnp.bfloat16)
        hx_s[...] = jnp.zeros_like(hx_s)                               # GRU hx=None -> zeros
        sel_s[...] = isel_ref[...]
        cg_s[...] = icg_ref[...]
        mask_s[...] = imask_ref[...]

    min_match = mm_ref[step].astype(jnp.float32)                       # runtime scalar
    es_b = esb_s[...]

    # heuristic_pooling(es[last_selected], step, 'mean') via selection-mean matrix.
    # TODO(synk): original heuristic_pooling source not provided; 'mean' assumed.
    inp = jnp.dot(sel_s[...].astype(jnp.bfloat16), es_b,
                  preferred_element_type=jnp.float32)                  # [Cp, Fp]

    # GRUCell (PyTorch semantics); gate blocks are lane-aligned at Fp=128.
    h = hx_s[...]
    gi = jnp.dot(inp.astype(jnp.bfloat16), wih_ref[...],
                 preferred_element_type=jnp.float32) + bih_ref[...]
    gh = jnp.dot(h.astype(jnp.bfloat16), whh_ref[...],
                 preferred_element_type=jnp.float32) + bhh_ref[...]
    r = jax.nn.sigmoid(gi[:, :Fp] + gh[:, :Fp])
    z = jax.nn.sigmoid(gi[:, Fp:2 * Fp] + gh[:, Fp:2 * Fp])
    n = jnp.tanh(gi[:, 2 * Fp:] + r * gh[:, 2 * Fp:])
    hx_new = (1.0 - z) * n + z * h
    hx_s[...] = hx_new
    hx_out[0] = hx_new
    # NOTE: padded class rows C..Cp of hx pick up bias garbage; they only feed
    # padded sims columns that are never used for selection and are sliced off
    # outside the kernel.

    # per-class neighbor match counts: [E,E] @ [E,Cp]  (0/1 operands -> exact)
    counts = jnp.dot(nb_ref[...], cg_s[...].astype(jnp.bfloat16),
                     preferred_element_type=jnp.float32)               # [E, Cp]
    unselected = mask_s[...] < 0.5                                     # [E, 1]
    valid = (counts >= min_match) & unselected                         # [E, Cp]
    # padded cate_group columns are all-zero -> counts 0 < min_match(>=2) -> never pooled
    pooled = jnp.any(valid, axis=1, keepdims=True)                     # [E, 1]

    # cosine similarity of every entity vs every class hidden state.
    h_n = (hx_new * jax.lax.rsqrt(
        jnp.sum(hx_new * hx_new, axis=-1, keepdims=True) + 1e-12)).astype(jnp.bfloat16)
    sims = jax.lax.dot_general(esn_s[...], h_n, (((1,), (1,)), ((), ())),
                               preferred_element_type=jnp.float32)     # [E, Cp]
    probs = jnp.where(pooled, sims * 0.5 + 0.5, 0.0)
    probs_out[0] = probs
    scores = jnp.where(valid, probs, -jnp.inf)

    # per-class top-k via iterative argmax (select_num small & static), building
    # the next step's sel_mat / cate_group / entity_mask in-kernel.
    # TODO(synk): original group_select_eff returns variable-size groups with
    # conflict handling; fixed-size per-class top-k is used here (static shapes).
    col_iota = jax.lax.broadcasted_iota(jnp.int32, (E, 1), 0)
    col_iota_f = col_iota.astype(jnp.float32)
    row_iota = jax.lax.broadcasted_iota(jnp.int32, (1, E), 1)
    selr_iota = jax.lax.broadcasted_iota(jnp.int32, (Cp, E), 0)
    cgc_iota = jax.lax.broadcasted_iota(jnp.int32, (E, Cp), 1)
    sr_iota = jax.lax.broadcasted_iota(jnp.int32, (SR, SC), 0)
    sc_iota = jax.lax.broadcasted_iota(jnp.int32, (SR, SC), 1)

    cg = cg_s[...]
    sel_new = jnp.zeros((Cp, E), jnp.float32)
    sel_idx = jnp.zeros((SR, SC), jnp.int32)
    total_union = jnp.zeros((E, 1), jnp.float32)
    inv_k = 1.0 / float(select_num)

    for c in range(n_class):                       # static, tiny
        col = scores[:, c:c + 1]                   # [E, 1]
        union_col = jnp.zeros((E, 1), jnp.float32)
        union_row = jnp.zeros((1, E), jnp.float32)
        for j in range(select_num):                # static, tiny
            m = jnp.max(col)
            idx = jnp.min(jnp.where(col == m, col_iota_f, float(E))).astype(jnp.int32)
            hit = col_iota == idx
            union_col = jnp.where(hit, 1.0, union_col)
            union_row = jnp.where(row_iota == idx, 1.0, union_row)
            sel_idx = jnp.where((sr_iota == c) & (sc_iota == j), idx, sel_idx)
            col = jnp.where(hit, -jnp.inf, col)
        total_union = jnp.maximum(total_union, union_col)
        cg = jnp.where(cgc_iota == c, jnp.maximum(cg, union_col), cg)
        sel_new = jnp.where(selr_iota == c, union_row * inv_k, sel_new)

    cg_s[...] = cg
    sel_s[...] = sel_new
    mask_s[...] = jnp.maximum(mask_s[...], total_union)
    selidx_out[0] = sel_idx


# ----------------------------------------------------------------------------
# BootDecoder forward (non-dev branch, eval-mode deterministic selection)
# ----------------------------------------------------------------------------
def boot_decoder(params, opt, seeds, es_enc, neighbors):
    E, Fp = es_enc.shape
    C = opt["num_class"]
    F = opt["num_feature"]
    seed_count = opt["seed_count"]
    select_num = seed_count
    rnn_step = opt["rnn_step"]
    min_match0 = max(1, opt["min_match"])
    Cp = CLASS_PAD

    # per-step min_match schedule (static in Python, dynamic to the kernel via SMEM)
    mm_sched = jnp.asarray(
        [2 if i > 2 else max(2, min_match0 - i) for i in range(rnn_step)],
        dtype=jnp.int32)

    seed_class = jnp.repeat(jnp.arange(C, dtype=jnp.int32), seed_count)
    init_mask = jnp.zeros((E, 1), jnp.float32).at[seeds, 0].set(1.0)
    init_cg = jnp.zeros((E, Cp), jnp.float32).at[seeds, seed_class].set(1.0)
    init_sel = (jnp.zeros((Cp, E), jnp.float32)
                .at[seed_class, seeds].set(1.0 / seed_count))

    kernel = functools.partial(_decoder_stack_kernel,
                               n_class=C, select_num=select_num)
    res_map = lambda s, mm: (0, 0)          # resident inputs (DMA'd once)
    step_map3 = lambda s, mm: (s, 0, 0)     # per-step outputs

    grid_spec = pltpu.PrefetchScalarGridSpec(
        num_scalar_prefetch=1,
        grid=(rnn_step,),
        in_specs=[
            pl.BlockSpec((E, Fp), res_map),           # es (f32, resident)
            pl.BlockSpec((E, E), res_map),            # neighbors (bf16, resident)
            pl.BlockSpec((Cp, E), res_map),           # initial sel_mat
            pl.BlockSpec((E, Cp), res_map),           # initial cate_group
            pl.BlockSpec((E, 1), res_map),            # initial entity_mask
            pl.BlockSpec((Fp, 3 * Fp), res_map),      # gru w_ih (bf16)
            pl.BlockSpec((Fp, 3 * Fp), res_map),      # gru w_hh (bf16)
            pl.BlockSpec((1, 3 * Fp), res_map),       # gru b_ih (f32)
            pl.BlockSpec((1, 3 * Fp), res_map),       # gru b_hh (f32)
        ],
        out_specs=[
            pl.BlockSpec((1, Cp, Fp), step_map3),     # hx per step
            pl.BlockSpec((1, E, Cp), step_map3),      # probs per step
            pl.BlockSpec((1, SEL_R, SEL_C), step_map3),  # selected indices per step
        ],
        scratch_shapes=[
            pltpu.VMEM((Cp, Fp), jnp.float32),        # hx state
            pltpu.VMEM((Cp, E), jnp.float32),         # sel_mat state
            pltpu.VMEM((E, Cp), jnp.float32),         # cate_group state
            pltpu.VMEM((E, 1), jnp.float32),          # entity_mask state
            pltpu.VMEM((E, Fp), jnp.bfloat16),        # es bf16 (computed once)
            pltpu.VMEM((E, Fp), jnp.bfloat16),        # es L2-normalized bf16 (once)
        ],
    )

    hx_all, probs_all, sel_all = pl.pallas_call(
        kernel,
        grid_spec=grid_spec,
        out_shape=[jax.ShapeDtypeStruct((rnn_step, Cp, Fp), jnp.float32),
                   jax.ShapeDtypeStruct((rnn_step, E, Cp), jnp.float32),
                   jax.ShapeDtypeStruct((rnn_step, SEL_R, SEL_C), jnp.int32)],
        compiler_params=pltpu.CompilerParams(dimension_semantics=("arbitrary",)),
    )(mm_sched, es_enc, neighbors.astype(jnp.bfloat16),
      init_sel, init_cg, init_mask,
      params["gru_w_ih"], params["gru_w_hh"], params["gru_b_ih"], params["gru_b_hh"])

    # tiny per-forward glue (fused by XLA inside jit): gather outputs / slice padding
    # TODO(synk): original `continue`s when every entity is already selected;
    # with static shapes that data-dependent skip is omitted.
    outputs, selects, steps, output_hx = [], [], [], []
    for s in range(rnn_step):
        sel_flat = sel_all[s, :C, :select_num].reshape(-1)          # [C*select_num]
        outputs.append(jnp.take(probs_all[s, :, :C], sel_flat, axis=0))
        selects.append(sel_flat)
        steps.append([select_num] * C)
        output_hx.append(hx_all[s, :C, :F])
    return outputs, selects, steps, output_hx


# ----------------------------------------------------------------------------
# BootNet forward = BootGCN encoder + BootDecoder decoder
# ----------------------------------------------------------------------------
def bootnet_forward(params, opt, seeds, es, ps, ep_adj, pe_adj, neighbors):
    if opt["no_boot"]:
        # TODO(synk): BootExpander branch (no_boot=True) not implemented.
        raise NotImplementedError("no_boot=True (BootExpander) not implemented")

    F = opt["num_feature"]
    es = jnp.pad(es.astype(jnp.float32), ((0, 0), (0, F_PAD - F)))
    ps = jnp.pad(ps.astype(jnp.float32), ((0, 0), (0, F_PAD - F)))

    es, ps = bootgcn_encode(params, seeds, es, ps, ep_adj, pe_adj)
    es = jax.lax.stop_gradient(es)                     # es.detach()

    return boot_decoder(params, opt, seeds, es, neighbors)


# ----------------------------------------------------------------------------
# Parameter init (deterministic, uniform(-1/sqrt(F), 1/sqrt(F)) like torch),
# generated at logical F and zero-padded to F_PAD (zero-pad preserves exact
# semantics: padded rows/cols contribute nothing to any gate/activation).
# note: BootDecoder also builds a LayerNorm in __init__, but never uses it in
# forward(), so no params are created for it.
# ----------------------------------------------------------------------------
def init_params(key, F, n_layers, f_pad=F_PAD):
    s = float(1.0 / np.sqrt(F))
    keys = iter(jax.random.split(key, 7 * n_layers + 12))

    def u(shape):
        return jax.random.uniform(next(keys), shape, jnp.float32, -s, s)

    def padf(w):   # [F,F] -> [f_pad, f_pad]
        return jnp.pad(w, ((0, f_pad - w.shape[0]), (0, f_pad - w.shape[1])))

    def padb(b):   # [1,F] -> [1, f_pad]
        return jnp.pad(b, ((0, 0), (0, f_pad - b.shape[1])))

    wp_l, bp_l, wes_l, wg_l, be_l = [], [], [], [], []
    for _ in range(n_layers):
        w_p, w_pp = u((F, F)), u((F, F))
        w_e, w_s, w_g = u((F, F)), u((F, F)), u((F, F))
        b_p, b_e = u((1, F)), u((1, F))
        wp_l.append(jnp.concatenate([padf(w_p), padf(w_pp)], axis=0))    # [2Fp, Fp]
        wes_l.append(jnp.concatenate([padf(w_e), padf(w_s)], axis=0))    # [2Fp, Fp]
        wg_l.append(padf(w_g))                                           # [Fp, Fp]
        bp_l.append(padb(b_p))
        be_l.append(padb(b_e))

    # GRUCell weights: three per-gate [F,F] blocks (pre-transposed), each padded
    # to [Fp,Fp] so the r/z/n gate slices are lane-aligned at 128 boundaries.
    w_ih = jnp.concatenate([padf(u((F, F))) for _ in range(3)], axis=1)  # [Fp, 3Fp]
    w_hh = jnp.concatenate([padf(u((F, F))) for _ in range(3)], axis=1)  # [Fp, 3Fp]
    b_ih = jnp.concatenate([padb(u((1, F))) for _ in range(3)], axis=1)  # [1, 3Fp]
    b_hh = jnp.concatenate([padb(u((1, F))) for _ in range(3)], axis=1)  # [1, 3Fp]

    bf = jnp.bfloat16
    return dict(
        gcn_w_p=jnp.stack(wp_l).astype(bf),     # [L, 2Fp, Fp]
        gcn_b_p=jnp.stack(bp_l),                # [L, 1, Fp]  f32
        gcn_w_es=jnp.stack(wes_l).astype(bf),   # [L, 2Fp, Fp]
        gcn_w_g=jnp.stack(wg_l).astype(bf),     # [L, Fp, Fp]
        gcn_b_e=jnp.stack(be_l),                # [L, 1, Fp]  f32
        gru_w_ih=w_ih.astype(bf), gru_w_hh=w_hh.astype(bf),
        gru_b_ih=b_ih, gru_b_hh=b_hh,
    )


# ----------------------------------------------------------------------------
if __name__ == "__main__":
    opt = dict(rnn_step=2, dropout=0.0, seed_count=4, ave_method="mean",
               min_match=1, num_class=2, num_feature=32, layer=2,
               sparse=False, disable_global=False, no_boot=False,
               with_update=True)

    E, P = 64, 32                      # entities, patterns
    F = opt["num_feature"]
    C = opt["num_class"]

    key = jax.random.PRNGKey(0)
    k_es, k_ps, k_ep, k_nb, k_param = jax.random.split(key, 5)

    es = jax.random.normal(k_es, (E, F), jnp.float32)
    ps = jax.random.normal(k_ps, (P, F), jnp.float32)
    ep_adj = (jax.random.uniform(k_ep, (E, P)) > 0.6).astype(jnp.float32)
    pe_adj = ep_adj.T
    neighbors = (jax.random.uniform(k_nb, (E, E)) > 0.5).astype(jnp.float32)
    neighbors = jnp.maximum(neighbors, neighbors.T)        # symmetric co-occurrence
    seeds = jnp.arange(C * opt["seed_count"], dtype=jnp.int32)   # 4 seeds per class

    params = init_params(k_param, F, opt["layer"])

    @jax.jit
    def run(params, seeds, es, ps, ep_adj, pe_adj, neighbors):
        return bootnet_forward(params, opt, seeds, es, ps, ep_adj, pe_adj, neighbors)

    outputs, selects, steps, output_hx = run(
        params, seeds, es, ps, ep_adj, pe_adj, neighbors)

    jax.block_until_ready((outputs, selects, output_hx))
    print("KERNEL_OK")
</pallas_src>

<mosaic_0001>
module attributes {stable_mosaic.version = 11 : i64} {
  func.func @_gcn_stack_kernel(%arg0: i32, %arg1: memref<64x128xf32, #tpu.memory_space<vmem>>, %arg2: memref<32x128xf32, #tpu.memory_space<vmem>>, %arg3: memref<64x32xbf16, #tpu.memory_space<vmem>>, %arg4: memref<32x64xbf16, #tpu.memory_space<vmem>>, %arg5: memref<1x64xbf16, #tpu.memory_space<vmem>>, %arg6: memref<1x256x128xbf16, #tpu.memory_space<vmem>>, %arg7: memref<1x1x128xf32, #tpu.memory_space<vmem>>, %arg8: memref<1x256x128xbf16, #tpu.memory_space<vmem>>, %arg9: memref<1x128x128xbf16, #tpu.memory_space<vmem>>, %arg10: memref<1x1x128xf32, #tpu.memory_space<vmem>>, %arg11: memref<64x128xf32, #tpu.memory_space<vmem>>, %arg12: memref<32x128xf32, #tpu.memory_space<vmem>>) attributes {dimension_semantics = [#tpu.dimension_semantics<arbitrary>], iteration_bounds = array<i64: 2>, scalar_prefetch = 0 : i64, scratch_operands = 0 : i64, tpu.core_type = #tpu.core_type<tc>, window_params = [{pipeline_mode = #tpu.pipeline_mode<synchronous>, transform_indices = @transform_0, window_bounds = array<i64: 64, 128>}, {pipeline_mode = #tpu.pipeline_mode<synchronous>, transform_indices = @transform_1, window_bounds = array<i64: 32, 128>}, {pipeline_mode = #tpu.pipeline_mode<synchronous>, transform_indices = @transform_2, window_bounds = array<i64: 64, 32>}, {pipeline_mode = #tpu.pipeline_mode<synchronous>, transform_indices = @transform_3, window_bounds = array<i64: 32, 64>}, {pipeline_mode = #tpu.pipeline_mode<synchronous>, transform_indices = @transform_4, window_bounds = array<i64: 1, 64>}, {transform_indices = @transform_5, window_bounds = array<i64: 1, 256, 128>}, {transform_indices = @transform_6, window_bounds = array<i64: 1, 1, 128>}, {transform_indices = @transform_7, window_bounds = array<i64: 1, 256, 128>}, {transform_indices = @transform_8, window_bounds = array<i64: 1, 128, 128>}, {transform_indices = @transform_9, window_bounds = array<i64: 1, 1, 128>}, {pipeline_mode = #tpu.pipeline_mode<synchronous>, transform_indices = @transform_10, window_bounds = array<i64: 64, 128>}, {pipeline_mode = #tpu.pipeline_mode<synchronous>, transform_indices = @transform_11, window_bounds = array<i64: 32, 128>}]} {
    %c0_i32 = arith.constant 0 : i32
    %0 = arith.cmpi eq, %arg0, %c0_i32 : i32
    %1 = arith.extui %0 : i1 to i32
    %c0_i32_0 = arith.constant 0 : i32
    %2 = arith.cmpi ne, %1, %c0_i32_0 : i32
    scf.if %2 {
      %c0_36 = arith.constant 0 : index
      %c0_37 = arith.constant 0 : index
      %44 = vector.load %arg1[%c0_36, %c0_37] : memref<64x128xf32, #tpu.memory_space<vmem>>, vector<64x128xf32>
      %c0_38 = arith.constant 0 : index
      %c0_39 = arith.constant 0 : index
      %45 = vector.load %arg11[%c0_38, %c0_39] : memref<64x128xf32, #tpu.memory_space<vmem>>, vector<64x128xf32>
      tpu.vector_store %arg11[%c0_38, %c0_39], %44 {strides = array<i32>} : memref<64x128xf32, #tpu.memory_space<vmem>>, vector<64x128xf32>,
      %c0_40 = arith.constant 0 : index
      %c0_41 = arith.constant 0 : index
      %46 = vector.load %arg2[%c0_40, %c0_41] : memref<32x128xf32, #tpu.memory_space<vmem>>, vector<32x128xf32>
      %c0_42 = arith.constant 0 : index
      %c0_43 = arith.constant 0 : index
      %47 = vector.load %arg12[%c0_42, %c0_43] : memref<32x128xf32, #tpu.memory_space<vmem>>, vector<32x128xf32>
      tpu.vector_store %arg12[%c0_42, %c0_43], %46 {strides = array<i32>} : memref<32x128xf32, #tpu.memory_space<vmem>>, vector<32x128xf32>,
    } else {
    }
    %c0 = arith.constant 0 : index
    %c0_1 = arith.constant 0 : index
    %3 = vector.load %arg11[%c0, %c0_1] : memref<64x128xf32, #tpu.memory_space<vmem>>, vector<64x128xf32>
    %c0_2 = arith.constant 0 : index
    %c0_3 = arith.constant 0 : index
    %4 = vector.load %arg12[%c0_2, %c0_3] : memref<32x128xf32, #tpu.memory_space<vmem>>, vector<32x128xf32>
    %5 = arith.truncf %3 : vector<64x128xf32> to vector<64x128xbf16>
    %6 = arith.truncf %4 : vector<32x128xf32> to vector<32x128xbf16>
    %c0_4 = arith.constant 0 : index
    %c0_5 = arith.constant 0 : index
    %7 = vector.load %arg4[%c0_4, %c0_5] : memref<32x64xbf16, #tpu.memory_space<vmem>>, vector<32x64xbf16>
    %cst = arith.constant dense<0.000000e+00> : vector<32x128xf32>
    %8 = tpu.matmul %7, %5, %cst {dimension_numbers = #tpu.dot_dimension_numbers<[1], [0], [0], [1], [0, 0, 1, 1], [], []>} : vector<32x64xbf16>, vector<64x128xbf16>, vector<32x128xf32> -> vector<32x128xf32>
    %9 = arith.truncf %8 : vector<32x128xf32> to vector<32x128xbf16>
    %10 = tpu.concatenate %9, %6 in 1 : vector<32x128xbf16>, vector<32x128xbf16> -> vector<32x256xbf16>
    %c0_6 = arith.constant 0 : index
    %c0_7 = arith.constant 0 : index
    %c0_8 = arith.constant 0 : index
    %11 = vector.load %arg6[%c0_6, %c0_7, %c0_8] : memref<1x256x128xbf16, #tpu.memory_space<vmem>>, vector<1x256x128xbf16>
    %12 = vector.shape_cast %11 : vector<1x256x128xbf16> to vector<256x128xbf16>
    %cst_9 = arith.constant dense<0.000000e+00> : vector<32x128xf32>
    %13 = tpu.matmul %10, %12, %cst_9 {dimension_numbers = #tpu.dot_dimension_numbers<[1], [0], [0], [1], [0, 0, 1, 1], [], []>} : vector<32x256xbf16>, vector<256x128xbf16>, vector<32x128xf32> -> vector<32x128xf32>
    %c0_10 = arith.constant 0 : index
    %c0_11 = arith.constant 0 : index
    %c0_12 = arith.constant 0 : index
    %14 = vector.load %arg7[%c0_10, %c0_11, %c0_12] : memref<1x1x128xf32, #tpu.memory_space<vmem>>, vector<1x1x128xf32>
    %15 = vector.shape_cast %14 : vector<1x1x128xf32> to vector<1x128xf32>
    %16 = vector.broadcast %15 : vector<1x128xf32> to vector<32x128xf32>
    %17 = arith.addf %13, %16 : vector<32x128xf32>
    %cst_13 = arith.constant 0.000000e+00 : f32
    %18 = vector.broadcast %cst_13 : f32 to vector<32x128xf32>
    %19 = arith.maximumf %17, %18 : vector<32x128xf32>
    %c0_14 = arith.constant 0 : index
    %c0_15 = arith.constant 0 : index
    %20 = vector.load %arg3[%c0_14, %c0_15] : memref<64x32xbf16, #tpu.memory_space<vmem>>, vector<64x32xbf16>
    %21 = arith.truncf %19 : vector<32x128xf32> to vector<32x128xbf16>
    %cst_16 = arith.constant dense<0.000000e+00> : vector<64x128xf32>
    %22 = tpu.matmul %20, %21, %cst_16 {dimension_numbers = #tpu.dot_dimension_numbers<[1], [0], [0], [1], [0, 0, 1, 1], [], []>} : vector<64x32xbf16>, vector<32x128xbf16>, vector<64x128xf32> -> vector<64x128xf32>
    %c0_17 = arith.constant 0 : index
    %c0_18 = arith.constant 0 : index
    %23 = vector.load %arg5[%c0_17, %c0_18] : memref<1x64xbf16, #tpu.memory_space<vmem>>, vector<1x64xbf16>
    %cst_19 = arith.constant dense<0.000000e+00> : vector<1x128xf32>
    %24 = tpu.matmul %23, %5, %cst_19 {dimension_numbers = #tpu.dot_dimension_numbers<[1], [0], [0], [1], [0, 0, 1, 1], [], []>} : vector<1x64xbf16>, vector<64x128xbf16>, vector<1x128xf32> -> vector<1x128xf32>
    %25 = arith.truncf %24 : vector<1x128xf32> to vector<1x128xbf16>
    %c0_20 = arith.constant 0 : index
    %c0_21 = arith.constant 0 : index
    %c0_22 = arith.constant 0 : index
    %26 = vector.load %arg9[%c0_20, %c0_21, %c0_22] : memref<1x128x128xbf16, #tpu.memory_space<vmem>>, vector<1x128x128xbf16>
    %27 = vector.shape_cast %26 : vector<1x128x128xbf16> to vector<128x128xbf16>
    %cst_23 = arith.constant dense<0.000000e+00> : vector<1x128xf32>
    %28 = tpu.matmul %25, %27, %cst_23 {dimension_numbers = #tpu.dot_dimension_numbers<[1], [0], [0], [1], [0, 0, 1, 1], [], []>} : vector<1x128xbf16>, vector<128x128xbf16>, vector<1x128xf32> -> vector<1x128xf32>
    %29 = arith.truncf %22 : vector<64x128xf32> to vector<64x128xbf16>
    %30 = tpu.concatenate %29, %5 in 1 : vector<64x128xbf16>, vector<64x128xbf16> -> vector<64x256xbf16>
    %c0_24 = arith.constant 0 : index
    %c0_25 = arith.constant 0 : index
    %c0_26 = arith.constant 0 : index
    %31 = vector.load %arg8[%c0_24, %c0_25, %c0_26] : memref<1x256x128xbf16, #tpu.memory_space<vmem>>, vector<1x256x128xbf16>
    %32 = vector.shape_cast %31 : vector<1x256x128xbf16> to vector<256x128xbf16>
    %cst_27 = arith.constant dense<0.000000e+00> : vector<64x128xf32>
    %33 = tpu.matmul %30, %32, %cst_27 {dimension_numbers = #tpu.dot_dimension_numbers<[1], [0], [0], [1], [0, 0, 1, 1], [], []>} : vector<64x256xbf16>, vector<256x128xbf16>, vector<64x128xf32> -> vector<64x128xf32>
    %34 = vector.broadcast %28 : vector<1x128xf32> to vector<64x128xf32>
    %35 = arith.addf %33, %34 : vector<64x128xf32>
    %c0_28 = arith.constant 0 : index
    %c0_29 = arith.constant 0 : index
    %c0_30 = arith.constant 0 : index
    %36 = vector.load %arg10[%c0_28, %c0_29, %c0_30] : memref<1x1x128xf32, #tpu.memory_space<vmem>>, vector<1x1x128xf32>
    %37 = vector.shape_cast %36 : vector<1x1x128xf32> to vector<1x128xf32>
    %38 = vector.broadcast %37 : vector<1x128xf32> to vector<64x128xf32>
    %39 = arith.addf %35, %38 : vector<64x128xf32>
    %cst_31 = arith.constant 0.000000e+00 : f32
    %40 = vector.broadcast %cst_31 : f32 to vector<64x128xf32>
    %41 = arith.maximumf %39, %40 : vector<64x128xf32>
    %c0_32 = arith.constant 0 : index
    %c0_33 = arith.constant 0 : index
    %42 = vector.load %arg11[%c0_32, %c0_33] : memref<64x128xf32, #tpu.memory_space<vmem>>, vector<64x128xf32>
    tpu.vector_store %arg11[%c0_32, %c0_33], %41 {strides = array<i32>} : memref<64x128xf32, #tpu.memory_space<vmem>>, vector<64x128xf32>,
    %c0_34 = arith.constant 0 : index
    %c0_35 = arith.constant 0 : index
    %43 = vector.load %arg12[%c0_34, %c0_35] : memref<32x128xf32, #tpu.memory_space<vmem>>, vector<32x128xf32>
    tpu.vector_store %arg12[%c0_34, %c0_35], %19 {strides = array<i32>} : memref<32x128xf32, #tpu.memory_space<vmem>>, vector<32x128xf32>,
    return
  }
  func.func @transform_0(%arg0: i32) -> (i32, i32) {
    %c0_i32 = arith.constant 0 : i32
    %c0_i32_0 = arith.constant 0 : i32
    %c0_i32_1 = arith.constant 0 : i32
    return %c0_i32, %c0_i32_0 : i32, i32
  }
  func.func @transform_1(%arg0: i32) -> (i32, i32) {
    %c0_i32 = arith.constant 0 : i32
    %c0_i32_0 = arith.constant 0 : i32
    %c0_i32_1 = arith.constant 0 : i32
    return %c0_i32, %c0_i32_0 : i32, i32
  }
  func.func @transform_2(%arg0: i32) -> (i32, i32) {
    %c0_i32 = arith.constant 0 : i32
    %c0_i32_0 = arith.constant 0 : i32
    %c0_i32_1 = arith.constant 0 : i32
    return %c0_i32, %c0_i32_0 : i32, i32
  }
  func.func @transform_3(%arg0: i32) -> (i32, i32) {
    %c0_i32 = arith.constant 0 : i32
    %c0_i32_0 = arith.constant 0 : i32
    %c0_i32_1 = arith.constant 0 : i32
    return %c0_i32, %c0_i32_0 : i32, i32
  }
  func.func @transform_4(%arg0: i32) -> (i32, i32) {
    %c0_i32 = arith.constant 0 : i32
    %c0_i32_0 = arith.constant 0 : i32
    %c0_i32_1 = arith.constant 0 : i32
    return %c0_i32, %c0_i32_0 : i32, i32
  }
  func.func @transform_5(%arg0: i32) -> (i32, i32, i32) {
    %c0_i32 = arith.constant 0 : i32
    %c0_i32_0 = arith.constant 0 : i32
    %c0_i32_1 = arith.constant 0 : i32
    return %arg0, %c0_i32, %c0_i32_0 : i32, i32, i32
  }
  func.func @transform_6(%arg0: i32) -> (i32, i32, i32) {
    %c0_i32 = arith.constant 0 : i32
    %c0_i32_0 = arith.constant 0 : i32
    %c0_i32_1 = arith.constant 0 : i32
    return %arg0, %c0_i32, %c0_i32_0 : i32, i32, i32
  }
  func.func @transform_7(%arg0: i32) -> (i32, i32, i32) {
    %c0_i32 = arith.constant 0 : i32
    %c0_i32_0 = arith.constant 0 : i32
    %c0_i32_1 = arith.constant 0 : i32
    return %arg0, %c0_i32, %c0_i32_0 : i32, i32, i32
  }
  func.func @transform_8(%arg0: i32) -> (i32, i32, i32) {
    %c0_i32 = arith.constant 0 : i32
    %c0_i32_0 = arith.constant 0 : i32
    %c0_i32_1 = arith.constant 0 : i32
    return %arg0, %c0_i32, %c0_i32_0 : i32, i32, i32
  }
  func.func @transform_9(%arg0: i32) -> (i32, i32, i32) {
    %c0_i32 = arith.constant 0 : i32
    %c0_i32_0 = arith.constant 0 : i32
    %c0_i32_1 = arith.constant 0 : i32
    return %arg0, %c0_i32, %c0_i32_0 : i32, i32, i32
  }
  func.func @transform_10(%arg0: i32) -> (i32, i32) {
    %c0_i32 = arith.constant 0 : i32
    %c0_i32_0 = arith.constant 0 : i32
    %c0_i32_1 = arith.constant 0 : i32
    return %c0_i32, %c0_i32_0 : i32, i32
  }
  func.func @transform_11(%arg0: i32) -> (i32, i32) {
    %c0_i32 = arith.constant 0 : i32
    %c0_i32_0 = arith.constant 0 : i32
    %c0_i32_1 = arith.constant 0 : i32
    return %c0_i32, %c0_i32_0 : i32, i32
  }
}

module attributes {stable_mosaic.version = 11 : i64} {
  func.func @_decoder_stack_kernel(%arg0: i32, %arg1: memref<2xi32, #tpu.memory_space<smem>>, %arg2: memref<64x128xf32, #tpu.memory_space<vmem>>, %arg3: memref<64x64xbf16, #tpu.memory_space<vmem>>, %arg4: memref<8x64xf32, #tpu.memory_space<vmem>>, %arg5: memref<64x8xf32, #tpu.memory_space<vmem>>, %arg6: memref<64x1xf32, #tpu.memory_space<vmem>>, %arg7: memref<128x384xbf16, #tpu.memory_space<vmem>>, %arg8: memref<128x384xbf16, #tpu.memory_space<vmem>>, %arg9: memref<1x384xf32, #tpu.memory_space<vmem>>, %arg10: memref<1x384xf32, #tpu.memory_space<vmem>>, %arg11: memref<1x8x128xf32, #tpu.memory_space<vmem>>, %arg12: memref<1x64x8xf32, #tpu.memory_space<vmem>>, %arg13: memref<1x8x128xi32, #tpu.memory_space<vmem>>, %arg14: memref<8x128xf32, #tpu.memory_space<vmem>>, %arg15: memref<8x64xf32, #tpu.memory_space<vmem>>, %arg16: memref<64x8xf32, #tpu.memory_space<vmem>>, %arg17: memref<64x1xf32, #tpu.memory_space<vmem>>, %arg18: memref<64x128xbf16, #tpu.memory_space<vmem>>, %arg19: memref<64x128xbf16, #tpu.memory_space<vmem>>) attributes {dimension_semantics = [#tpu.dimension_semantics<arbitrary>], iteration_bounds = array<i64: 2>, scalar_prefetch = 1 : i64, scratch_operands = 6 : i64, tpu.core_type = #tpu.core_type<tc>, window_params = [{pipeline_mode = #tpu.pipeline_mode<synchronous>, transform_indices = @transform_0, window_bounds = array<i64: 64, 128>}, {pipeline_mode = #tpu.pipeline_mode<synchronous>, transform_indices = @transform_1, window_bounds = array<i64: 64, 64>}, {pipeline_mode = #tpu.pipeline_mode<synchronous>, transform_indices = @transform_2, window_bounds = array<i64: 8, 64>}, {pipeline_mode = #tpu.pipeline_mode<synchronous>, transform_indices = @transform_3, window_bounds = array<i64: 64, 8>}, {pipeline_mode = #tpu.pipeline_mode<synchronous>, transform_indices = @transform_4, window_bounds = array<i64: 64, 1>}, {pipeline_mode = #tpu.pipeline_mode<synchronous>, transform_indices = @transform_5, window_bounds = array<i64: 128, 384>}, {pipeline_mode = #tpu.pipeline_mode<synchronous>, transform_indices = @transform_6, window_bounds = array<i64: 128, 384>}, {pipeline_mode = #tpu.pipeline_mode<synchronous>, transform_indices = @transform_7, window_bounds = array<i64: 1, 384>}, {pipeline_mode = #tpu.pipeline_mode<synchronous>, transform_indices = @transform_8, window_bounds = array<i64: 1, 384>}, {transform_indices = @transform_9, window_bounds = array<i64: 1, 8, 128>}, {transform_indices = @transform_10, window_bounds = array<i64: 1, 64, 8>}, {transform_indices = @transform_11, window_bounds = array<i64: 1, 8, 128>}]} {
    %c0_i32 = arith.constant 0 : i32
    %0 = arith.cmpi eq, %arg0, %c0_i32 : i32
    %1 = arith.extui %0 : i1 to i32
    %c0_i32_0 = arith.constant 0 : i32
    %2 = arith.cmpi ne, %1, %c0_i32_0 : i32
    scf.if %2 {
      %c0_133 = arith.constant 0 : index
      %c0_134 = arith.constant 0 : index
      %382 = vector.load %arg2[%c0_133, %c0_134] : memref<64x128xf32, #tpu.memory_space<vmem>>, vector<64x128xf32>
      %383 = arith.truncf %382 : vector<64x128xf32> to vector<64x128xbf16>
      %c0_135 = arith.constant 0 : index
      %c0_136 = arith.constant 0 : index
      %384 = vector.load %arg18[%c0_135, %c0_136] : memref<64x128xbf16, #tpu.memory_space<vmem>>, vector<64x128xbf16>
      tpu.vector_store %arg18[%c0_135, %c0_136], %383 {strides = array<i32>} : memref<64x128xbf16, #tpu.memory_space<vmem>>, vector<64x128xbf16>,
      %385 = arith.mulf %382, %382 : vector<64x128xf32>
      %cst_137 = arith.constant dense<0.000000e+00> : vector<64xf32>
      %386 = vector.multi_reduction <add>, %385, %cst_137 [1] : vector<64x128xf32> to vector<64xf32>
      %387 = vector.shape_cast %386 : vector<64xf32> to vector<64x1xf32>
      %cst_138 = arith.constant 9.99999996E-13 : f32
      %388 = vector.broadcast %cst_138 : f32 to vector<64x1xf32>
      %389 = arith.addf %387, %388 : vector<64x1xf32>
      %390 = math.rsqrt %389 : vector<64x1xf32>
      %391 = vector.broadcast %390 : vector<64x1xf32> to vector<64x128xf32>
      %392 = arith.mulf %382, %391 : vector<64x128xf32>
      %393 = arith.truncf %392 : vector<64x128xf32> to vector<64x128xbf16>
      %c0_139 = arith.constant 0 : index
      %c0_140 = arith.constant 0 : index
      %394 = vector.load %arg19[%c0_139, %c0_140] : memref<64x128xbf16, #tpu.memory_space<vmem>>, vector<64x128xbf16>
      tpu.vector_store %arg19[%c0_139, %c0_140], %393 {strides = array<i32>} : memref<64x128xbf16, #tpu.memory_space<vmem>>, vector<64x128xbf16>,
      %cst_141 = arith.constant 0.000000e+00 : f32
      %395 = vector.broadcast %cst_141 : f32 to vector<8x128xf32>
      %c0_142 = arith.constant 0 : index
      %c0_143 = arith.constant 0 : index
      %396 = vector.load %arg14[%c0_142, %c0_143] : memref<8x128xf32, #tpu.memory_space<vmem>>, vector<8x128xf32>
      tpu.vector_store %arg14[%c0_142, %c0_143], %395 {strides = array<i32>} : memref<8x128xf32, #tpu.memory_space<vmem>>, vector<8x128xf32>,
      %c0_144 = arith.constant 0 : index
      %c0_145 = arith.constant 0 : index
      %397 = vector.load %arg4[%c0_144, %c0_145] : memref<8x64xf32, #tpu.memory_space<vmem>>, vector<8x64xf32>
      %c0_146 = arith.constant 0 : index
      %c0_147 = arith.constant 0 : index
      %398 = vector.load %arg15[%c0_146, %c0_147] : memref<8x64xf32, #tpu.memory_space<vmem>>, vector<8x64xf32>
      tpu.vector_store %arg15[%c0_146, %c0_147], %397 {strides = array<i32>} : memref<8x64xf32, #tpu.memory_space<vmem>>, vector<8x64xf32>,
      %c0_148 = arith.constant 0 : index
      %c0_149 = arith.constant 0 : index
      %399 = vector.load %arg5[%c0_148, %c0_149] : memref<64x8xf32, #tpu.memory_space<vmem>>, vector<64x8xf32>
      %c0_150 = arith.constant 0 : index
      %c0_151 = arith.constant 0 : index
      %400 = vector.load %arg16[%c0_150, %c0_151] : memref<64x8xf32, #tpu.memory_space<vmem>>, vector<64x8xf32>
      tpu.vector_store %arg16[%c0_150, %c0_151], %399 {strides = array<i32>} : memref<64x8xf32, #tpu.memory_space<vmem>>, vector<64x8xf32>,
      %c0_152 = arith.constant 0 : index
      %c0_153 = arith.constant 0 : index
      %401 = vector.load %arg6[%c0_152, %c0_153] : memref<64x1xf32, #tpu.memory_space<vmem>>, vector<64x1xf32>
      %c0_154 = arith.constant 0 : index
      %c0_155 = arith.constant 0 : index
      %402 = vector.load %arg17[%c0_154, %c0_155] : memref<64x1xf32, #tpu.memory_space<vmem>>, vector<64x1xf32>
      tpu.vector_store %arg17[%c0_154, %c0_155], %401 {strides = array<i32>} : memref<64x1xf32, #tpu.memory_space<vmem>>, vector<64x1xf32>,
    } else {
    }
    %3 = arith.index_cast %arg0 : i32 to index
    %4 = memref.load %arg1[%3] : memref<2xi32, #tpu.memory_space<smem>>
    %5 = arith.sitofp %4 : i32 to f32
    %c0 = arith.constant 0 : index
    %c0_1 = arith.constant 0 : index
    %6 = vector.load %arg18[%c0, %c0_1] : memref<64x128xbf16, #tpu.memory_space<vmem>>, vector<64x128xbf16>
    %c0_2 = arith.constant 0 : index
    %c0_3 = arith.constant 0 : index
    %7 = vector.load %arg15[%c0_2, %c0_3] : memref<8x64xf32, #tpu.memory_space<vmem>>, vector<8x64xf32>
    %8 = arith.truncf %7 : vector<8x64xf32> to vector<8x64xbf16>
    %cst = arith.constant dense<0.000000e+00> : vector<8x128xf32>
    %9 = tpu.matmul %8, %6, %cst {dimension_numbers = #tpu.dot_dimension_numbers<[1], [0], [0], [1], [0, 0, 1, 1], [], []>} : vector<8x64xbf16>, vector<64x128xbf16>, vector<8x128xf32> -> vector<8x128xf32>
    %c0_4 = arith.constant 0 : index
    %c0_5 = arith.constant 0 : index
    %10 = vector.load %arg14[%c0_4, %c0_5] : memref<8x128xf32, #tpu.memory_space<vmem>>, vector<8x128xf32>
    %11 = arith.truncf %9 : vector<8x128xf32> to vector<8x128xbf16>
    %c0_6 = arith.constant 0 : index
    %c0_7 = arith.constant 0 : index
    %12 = vector.load %arg7[%c0_6, %c0_7] : memref<128x384xbf16, #tpu.memory_space<vmem>>, vector<128x384xbf16>
    %cst_8 = arith.constant dense<0.000000e+00> : vector<8x384xf32>
    %13 = tpu.matmul %11, %12, %cst_8 {dimension_numbers = #tpu.dot_dimension_numbers<[1], [0], [0], [1], [0, 0, 1, 1], [], []>} : vector<8x128xbf16>, vector<128x384xbf16>, vector<8x384xf32> -> vector<8x384xf32>
    %c0_9 = arith.constant 0 : index
    %c0_10 = arith.constant 0 : index
    %14 = vector.load %arg9[%c0_9, %c0_10] : memref<1x384xf32, #tpu.memory_space<vmem>>, vector<1x384xf32>
    %15 = vector.broadcast %14 : vector<1x384xf32> to vector<8x384xf32>
    %16 = arith.addf %13, %15 : vector<8x384xf32>
    %17 = arith.truncf %10 : vector<8x128xf32> to vector<8x128xbf16>
    %c0_11 = arith.constant 0 : index
    %c0_12 = arith.constant 0 : index
    %18 = vector.load %arg8[%c0_11, %c0_12] : memref<128x384xbf16, #tpu.memory_space<vmem>>, vector<128x384xbf16>
    %cst_13 = arith.constant dense<0.000000e+00> : vector<8x384xf32>
    %19 = tpu.matmul %17, %18, %cst_13 {dimension_numbers = #tpu.dot_dimension_numbers<[1], [0], [0], [1], [0, 0, 1, 1], [], []>} : vector<8x128xbf16>, vector<128x384xbf16>, vector<8x384xf32> -> vector<8x384xf32>
    %c0_14 = arith.constant 0 : index
    %c0_15 = arith.constant 0 : index
    %20 = vector.load %arg10[%c0_14, %c0_15] : memref<1x384xf32, #tpu.memory_space<vmem>>, vector<1x384xf32>
    %21 = vector.broadcast %20 : vector<1x384xf32> to vector<8x384xf32>
    %22 = arith.addf %19, %21 : vector<8x384xf32>
    %23 = vector.extract_strided_slice %16 {offsets = [0, 0], sizes = [8, 128], strides = [1, 1]} : vector<8x384xf32> to vector<8x128xf32>
    %24 = vector.extract_strided_slice %22 {offsets = [0, 0], sizes = [8, 128], strides = [1, 1]} : vector<8x384xf32> to vector<8x128xf32>
    %25 = arith.addf %23, %24 : vector<8x128xf32>
    %26 = arith.negf %25 : vector<8x128xf32>
    %27 = math.exp %26 : vector<8x128xf32>
    %cst_16 = arith.constant 1.000000e+00 : f32
    %28 = vector.broadcast %cst_16 : f32 to vector<8x128xf32>
    %29 = arith.addf %28, %27 : vector<8x128xf32>
    %30 = arith.divf %28, %29 : vector<8x128xf32>
    %31 = vector.extract_strided_slice %16 {offsets = [0, 128], sizes = [8, 128], strides = [1, 1]} : vector<8x384xf32> to vector<8x128xf32>
    %32 = vector.extract_strided_slice %22 {offsets = [0, 128], sizes = [8, 128], strides = [1, 1]} : vector<8x384xf32> to vector<8x128xf32>
    %33 = arith.addf %31, %32 : vector<8x128xf32>
    %34 = arith.negf %33 : vector<8x128xf32>
    %35 = math.exp %34 : vector<8x128xf32>
    %cst_17 = arith.constant 1.000000e+00 : f32
    %36 = vector.broadcast %cst_17 : f32 to vector<8x128xf32>
    %37 = arith.addf %36, %35 : vector<8x128xf32>
    %38 = arith.divf %36, %37 : vector<8x128xf32>
    %39 = vector.extract_strided_slice %16 {offsets = [0, 256], sizes = [8, 128], strides = [1, 1]} : vector<8x384xf32> to vector<8x128xf32>
    %40 = vector.extract_strided_slice %22 {offsets = [0, 256], sizes = [8, 128], strides = [1, 1]} : vector<8x384xf32> to vector<8x128xf32>
    %41 = arith.mulf %30, %40 : vector<8x128xf32>
    %42 = arith.addf %39, %41 : vector<8x128xf32>
    %43 = math.tanh %42 : vector<8x128xf32>
    %cst_18 = arith.constant 1.000000e+00 : f32
    %44 = vector.broadcast %cst_18 : f32 to vector<8x128xf32>
    %45 = arith.subf %44, %38 : vector<8x128xf32>
    %46 = arith.mulf %45, %43 : vector<8x128xf32>
    %47 = arith.mulf %38, %10 : vector<8x128xf32>
    %48 = arith.addf %46, %47 : vector<8x128xf32>
    %c0_19 = arith.constant 0 : index
    %c0_20 = arith.constant 0 : index
    %49 = vector.load %arg14[%c0_19, %c0_20] : memref<8x128xf32, #tpu.memory_space<vmem>>, vector<8x128xf32>
    tpu.vector_store %arg14[%c0_19, %c0_20], %48 {strides = array<i32>} : memref<8x128xf32, #tpu.memory_space<vmem>>, vector<8x128xf32>,
    %c0_21 = arith.constant 0 : index
    %c0_22 = arith.constant 0 : index
    %c0_23 = arith.constant 0 : index
    %50 = vector.load %arg11[%c0_21, %c0_22, %c0_23] : memref<1x8x128xf32, #tpu.memory_space<vmem>>, vector<1x8x128xf32>
    %51 = vector.shape_cast %50 : vector<1x8x128xf32> to vector<8x128xf32>
    %52 = vector.shape_cast %48 : vector<8x128xf32> to vector<1x8x128xf32>
    tpu.vector_store %arg11[%c0_21, %c0_22, %c0_23], %52 {strides = array<i32>} : memref<1x8x128xf32, #tpu.memory_space<vmem>>, vector<1x8x128xf32>,
    %c0_24 = arith.constant 0 : index
    %c0_25 = arith.constant 0 : index
    %53 = vector.load %arg3[%c0_24, %c0_25] : memref<64x64xbf16, #tpu.memory_space<vmem>>, vector<64x64xbf16>
    %c0_26 = arith.constant 0 : index
    %c0_27 = arith.constant 0 : index
    %54 = vector.load %arg16[%c0_26, %c0_27] : memref<64x8xf32, #tpu.memory_space<vmem>>, vector<64x8xf32>
    %55 = arith.truncf %54 : vector<64x8xf32> to vector<64x8xbf16>
    %cst_28 = arith.constant dense<0.000000e+00> : vector<64x8xf32>
    %56 = tpu.matmul %53, %55, %cst_28 {dimension_numbers = #tpu.dot_dimension_numbers<[1], [0], [0], [1], [0, 0, 1, 1], [], []>} : vector<64x64xbf16>, vector<64x8xbf16>, vector<64x8xf32> -> vector<64x8xf32>
    %c0_29 = arith.constant 0 : index
    %c0_30 = arith.constant 0 : index
    %57 = vector.load %arg17[%c0_29, %c0_30] : memref<64x1xf32, #tpu.memory_space<vmem>>, vector<64x1xf32>
    %cst_31 = arith.constant 5.000000e-01 : f32
    %58 = vector.broadcast %cst_31 : f32 to vector<64x1xf32>
    %59 = arith.cmpf olt, %57, %58 : vector<64x1xf32>
    %60 = vector.broadcast %5 : f32 to vector<64x8xf32>
    %61 = arith.cmpf oge, %56, %60 : vector<64x8xf32>
    %62 = vector.broadcast %59 : vector<64x1xi1> to vector<64x8xi1>
    %63 = arith.andi %61, %62 : vector<64x8xi1>
    %cst_32 = arith.constant 1.000000e+00 : f32
    %cst_33 = arith.constant 0.000000e+00 : f32
    %64 = vector.broadcast %cst_32 : f32 to vector<64x8xf32>
    %65 = vector.broadcast %cst_33 : f32 to vector<64x8xf32>
    %66 = arith.select %63, %64, %65 : vector<64x8xi1>, vector<64x8xf32>
    %cst_34 = arith.constant dense<0xFF800000> : vector<64xf32>
    %67 = vector.multi_reduction <maximumf>, %66, %cst_34 [1] : vector<64x8xf32> to vector<64xf32>
    %cst_35 = arith.constant 0.000000e+00 : f32
    %68 = vector.broadcast %cst_35 : f32 to vector<64xf32>
    %69 = arith.cmpf ogt, %67, %68 : vector<64xf32>
    %70 = vector.shape_cast %69 : vector<64xi1> to vector<64x1xi1>
    %71 = arith.mulf %48, %48 : vector<8x128xf32>
    %cst_36 = arith.constant dense<0.000000e+00> : vector<8xf32>
    %72 = vector.multi_reduction <add>, %71, %cst_36 [1] : vector<8x128xf32> to vector<8xf32>
    %73 = vector.shape_cast %72 : vector<8xf32> to vector<8x1xf32>
    %cst_37 = arith.constant 9.99999996E-13 : f32
    %74 = vector.broadcast %cst_37 : f32 to vector<8x1xf32>
    %75 = arith.addf %73, %74 : vector<8x1xf32>
    %76 = math.rsqrt %75 : vector<8x1xf32>
    %77 = vector.broadcast %76 : vector<8x1xf32> to vector<8x128xf32>
    %78 = arith.mulf %48, %77 : vector<8x128xf32>
    %79 = arith.truncf %78 : vector<8x128xf32> to vector<8x128xbf16>
    %c0_38 = arith.constant 0 : index
    %c0_39 = arith.constant 0 : index
    %80 = vector.load %arg19[%c0_38, %c0_39] : memref<64x128xbf16, #tpu.memory_space<vmem>>, vector<64x128xbf16>
    %cst_40 = arith.constant dense<0.000000e+00> : vector<64x8xf32>
    %81 = tpu.matmul %80, %79, %cst_40 {dimension_numbers = #tpu.dot_dimension_numbers<[1], [1], [0], [0], [0, 0, 1, 0], [], []>} : vector<64x128xbf16>, vector<8x128xbf16>, vector<64x8xf32> -> vector<64x8xf32>
    %cst_41 = arith.constant 5.000000e-01 : f32
    %82 = vector.broadcast %cst_41 : f32 to vector<64x8xf32>
    %83 = arith.mulf %81, %82 : vector<64x8xf32>
    %cst_42 = arith.constant 5.000000e-01 : f32
    %84 = vector.broadcast %cst_42 : f32 to vector<64x8xf32>
    %85 = arith.addf %83, %84 : vector<64x8xf32>
    %cst_43 = arith.constant 0.000000e+00 : f32
    %86 = vector.shape_cast %70 : vector<64x1xi1> to vector<64x1xi1>
    %87 = vector.broadcast %86 : vector<64x1xi1> to vector<64x8xi1>
    %88 = vector.broadcast %cst_43 : f32 to vector<64x8xf32>
    %89 = arith.select %87, %85, %88 : vector<64x8xi1>, vector<64x8xf32>
    %c0_44 = arith.constant 0 : index
    %c0_45 = arith.constant 0 : index
    %c0_46 = arith.constant 0 : index
    %90 = vector.load %arg12[%c0_44, %c0_45, %c0_46] : memref<1x64x8xf32, #tpu.memory_space<vmem>>, vector<1x64x8xf32>
    %91 = vector.shape_cast %90 : vector<1x64x8xf32> to vector<64x8xf32>
    %92 = vector.shape_cast %89 : vector<64x8xf32> to vector<1x64x8xf32>
    tpu.vector_store %arg12[%c0_44, %c0_45, %c0_46], %92 {strides = array<i32>} : memref<1x64x8xf32, #tpu.memory_space<vmem>>, vector<1x64x8xf32>,
    %cst_47 = arith.constant 0xFF800000 : f32
    %93 = vector.broadcast %cst_47 : f32 to vector<64x8xf32>
    %94 = arith.select %63, %89, %93 : vector<64x8xi1>, vector<64x8xf32>
    %95 = tpu.iota {dimensions = array<i32: 0>} : vector<64x1xi32>
    %96 = arith.sitofp %95 : vector<64x1xi32> to vector<64x1xf32>
    %97 = tpu.iota {dimensions = array<i32: 1>} : vector<1x64xi32>
    %98 = tpu.iota {dimensions = array<i32: 0>} : vector<8x64xi32>
    %99 = tpu.iota {dimensions = array<i32: 1>} : vector<64x8xi32>
    %100 = tpu.iota {dimensions = array<i32: 0>} : vector<8x128xi32>
    %101 = tpu.iota {dimensions = array<i32: 1>} : vector<8x128xi32>
    %c0_48 = arith.constant 0 : index
    %c0_49 = arith.constant 0 : index
    %102 = vector.load %arg16[%c0_48, %c0_49] : memref<64x8xf32, #tpu.memory_space<vmem>>, vector<64x8xf32>
    %cst_50 = arith.constant 0.000000e+00 : f32
    %103 = vector.broadcast %cst_50 : f32 to vector<8x64xf32>
    %c0_i32_51 = arith.constant 0 : i32
    %104 = vector.broadcast %c0_i32_51 : i32 to vector<8x128xi32>
    %cst_52 = arith.constant 0.000000e+00 : f32
    %105 = vector.broadcast %cst_52 : f32 to vector<64x1xf32>
    %106 = vector.extract_strided_slice %94 {offsets = [0, 0], sizes = [64, 1], strides = [1, 1]} : vector<64x8xf32> to vector<64x1xf32>
    %cst_53 = arith.constant 0.000000e+00 : f32
    %107 = vector.broadcast %cst_53 : f32 to vector<64x1xf32>
    %cst_54 = arith.constant 0.000000e+00 : f32
    %108 = vector.broadcast %cst_54 : f32 to vector<1x64xf32>
    %109 = vector.shape_cast %106 : vector<64x1xf32> to vector<1x64x1xf32>
    %cst_55 = arith.constant dense<0xFF800000> : vector<1xf32>
    %110 = vector.multi_reduction <maximumf>, %109, %cst_55 [1, 2] : vector<1x64x1xf32> to vector<1xf32>
    %111 = vector.shape_cast %110 : vector<1xf32> to vector<1x1x1xf32>
    %112 = vector.extract %111[0, 0, 0] : f32 from vector<1x1x1xf32>
    %113 = vector.broadcast %112 : f32 to vector<64x1xf32>
    %114 = arith.cmpf oeq, %106, %113 : vector<64x1xf32>
    %cst_56 = arith.constant 6.400000e+01 : f32
    %115 = vector.broadcast %cst_56 : f32 to vector<64x1xf32>
    %116 = arith.select %114, %96, %115 : vector<64x1xi1>, vector<64x1xf32>
    %117 = vector.shape_cast %116 : vector<64x1xf32> to vector<1x64x1xf32>
    %cst_57 = arith.constant dense<0x7F800000> : vector<1xf32>
    %118 = vector.multi_reduction <minimumf>, %117, %cst_57 [1, 2] : vector<1x64x1xf32> to vector<1xf32>
    %119 = vector.shape_cast %118 : vector<1xf32> to vector<1x1x1xf32>
    %120 = vector.extract %119[0, 0, 0] : f32 from vector<1x1x1xf32>
    %121 = arith.fptosi %120 : f32 to i32
    %122 = vector.broadcast %121 : i32 to vector<64x1xi32>
    %123 = arith.cmpi eq, %95, %122 : vector<64x1xi32>
    %cst_58 = arith.constant 1.000000e+00 : f32
    %124 = vector.broadcast %cst_58 : f32 to vector<64x1xf32>
    %125 = arith.select %123, %124, %107 : vector<64x1xi1>, vector<64x1xf32>
    %126 = vector.broadcast %121 : i32 to vector<1x64xi32>
    %127 = arith.cmpi eq, %97, %126 : vector<1x64xi32>
    %cst_59 = arith.constant 1.000000e+00 : f32
    %128 = vector.broadcast %cst_59 : f32 to vector<1x64xf32>
    %129 = arith.select %127, %128, %108 : vector<1x64xi1>, vector<1x64xf32>
    %c0_i32_60 = arith.constant 0 : i32
    %130 = vector.broadcast %c0_i32_60 : i32 to vector<8x128xi32>
    %131 = arith.cmpi eq, %100, %130 : vector<8x128xi32>
    %c0_i32_61 = arith.constant 0 : i32
    %132 = vector.broadcast %c0_i32_61 : i32 to vector<8x128xi32>
    %133 = arith.cmpi eq, %101, %132 : vector<8x128xi32>
    %134 = arith.andi %131, %133 : vector<8x128xi1>
    %135 = vector.broadcast %121 : i32 to vector<8x128xi32>
    %136 = arith.select %134, %135, %104 : vector<8x128xi1>, vector<8x128xi32>
    %cst_62 = arith.constant 0xFF800000 : f32
    %137 = vector.broadcast %cst_62 : f32 to vector<64x1xf32>
    %138 = arith.select %123, %137, %106 : vector<64x1xi1>, vector<64x1xf32>
    %139 = vector.shape_cast %138 : vector<64x1xf32> to vector<1x64x1xf32>
    %cst_63 = arith.constant dense<0xFF800000> : vector<1xf32>
    %140 = vector.multi_reduction <maximumf>, %139, %cst_63 [1, 2] : vector<1x64x1xf32> to vector<1xf32>
    %141 = vector.shape_cast %140 : vector<1xf32> to vector<1x1x1xf32>
    %142 = vector.extract %141[0, 0, 0] : f32 from vector<1x1x1xf32>
    %143 = vector.broadcast %142 : f32 to vector<64x1xf32>
    %144 = arith.cmpf oeq, %138, %143 : vector<64x1xf32>
    %cst_64 = arith.constant 6.400000e+01 : f32
    %145 = vector.broadcast %cst_64 : f32 to vector<64x1xf32>
    %146 = arith.select %144, %96, %145 : vector<64x1xi1>, vector<64x1xf32>
    %147 = vector.shape_cast %146 : vector<64x1xf32> to vector<1x64x1xf32>
    %cst_65 = arith.constant dense<0x7F800000> : vector<1xf32>
    %148 = vector.multi_reduction <minimumf>, %147, %cst_65 [1, 2] : vector<1x64x1xf32> to vector<1xf32>
    %149 = vector.shape_cast %148 : vector<1xf32> to vector<1x1x1xf32>
    %150 = vector.extract %149[0, 0, 0] : f32 from vector<1x1x1xf32>
    %151 = arith.fptosi %150 : f32 to i32
    %152 = vector.broadcast %151 : i32 to vector<64x1xi32>
    %153 = arith.cmpi eq, %95, %152 : vector<64x1xi32>
    %cst_66 = arith.constant 1.000000e+00 : f32
    %154 = vector.broadcast %cst_66 : f32 to vector<64x1xf32>
    %155 = arith.select %153, %154, %125 : vector<64x1xi1>, vector<64x1xf32>
    %156 = vector.broadcast %151 : i32 to vector<1x64xi32>
    %157 = arith.cmpi eq, %97, %156 : vector<1x64xi32>
    %cst_67 = arith.constant 1.000000e+00 : f32
    %158 = vector.broadcast %cst_67 : f32 to vector<1x64xf32>
    %159 = arith.select %157, %158, %129 : vector<1x64xi1>, vector<1x64xf32>
    %c0_i32_68 = arith.constant 0 : i32
    %160 = vector.broadcast %c0_i32_68 : i32 to vector<8x128xi32>
    %161 = arith.cmpi eq, %100, %160 : vector<8x128xi32>
    %c1_i32 = arith.constant 1 : i32
    %162 = vector.broadcast %c1_i32 : i32 to vector<8x128xi32>
    %163 = arith.cmpi eq, %101, %162 : vector<8x128xi32>
    %164 = arith.andi %161, %163 : vector<8x128xi1>
    %165 = vector.broadcast %151 : i32 to vector<8x128xi32>
    %166 = arith.select %164, %165, %136 : vector<8x128xi1>, vector<8x128xi32>
    %cst_69 = arith.constant 0xFF800000 : f32
    %167 = vector.broadcast %cst_69 : f32 to vector<64x1xf32>
    %168 = arith.select %153, %167, %138 : vector<64x1xi1>, vector<64x1xf32>
    %169 = vector.shape_cast %168 : vector<64x1xf32> to vector<1x64x1xf32>
    %cst_70 = arith.constant dense<0xFF800000> : vector<1xf32>
    %170 = vector.multi_reduction <maximumf>, %169, %cst_70 [1, 2] : vector<1x64x1xf32> to vector<1xf32>
    %171 = vector.shape_cast %170 : vector<1xf32> to vector<1x1x1xf32>
    %172 = vector.extract %171[0, 0, 0] : f32 from vector<1x1x1xf32>
    %173 = vector.broadcast %172 : f32 to vector<64x1xf32>
    %174 = arith.cmpf oeq, %168, %173 : vector<64x1xf32>
    %cst_71 = arith.constant 6.400000e+01 : f32
    %175 = vector.broadcast %cst_71 : f32 to vector<64x1xf32>
    %176 = arith.select %174, %96, %175 : vector<64x1xi1>, vector<64x1xf32>
    %177 = vector.shape_cast %176 : vector<64x1xf32> to vector<1x64x1xf32>
    %cst_72 = arith.constant dense<0x7F800000> : vector<1xf32>
    %178 = vector.multi_reduction <minimumf>, %177, %cst_72 [1, 2] : vector<1x64x1xf32> to vector<1xf32>
    %179 = vector.shape_cast %178 : vector<1xf32> to vector<1x1x1xf32>
    %180 = vector.extract %179[0, 0, 0] : f32 from vector<1x1x1xf32>
    %181 = arith.fptosi %180 : f32 to i32
    %182 = vector.broadcast %181 : i32 to vector<64x1xi32>
    %183 = arith.cmpi eq, %95, %182 : vector<64x1xi32>
    %cst_73 = arith.constant 1.000000e+00 : f32
    %184 = vector.broadcast %cst_73 : f32 to vector<64x1xf32>
    %185 = arith.select %183, %184, %155 : vector<64x1xi1>, vector<64x1xf32>
    %186 = vector.broadcast %181 : i32 to vector<1x64xi32>
    %187 = arith.cmpi eq, %97, %186 : vector<1x64xi32>
    %cst_74 = arith.constant 1.000000e+00 : f32
    %188 = vector.broadcast %cst_74 : f32 to vector<1x64xf32>
    %189 = arith.select %187, %188, %159 : vector<1x64xi1>, vector<1x64xf32>
    %c0_i32_75 = arith.constant 0 : i32
    %190 = vector.broadcast %c0_i32_75 : i32 to vector<8x128xi32>
    %191 = arith.cmpi eq, %100, %190 : vector<8x128xi32>
    %c2_i32 = arith.constant 2 : i32
    %192 = vector.broadcast %c2_i32 : i32 to vector<8x128xi32>
    %193 = arith.cmpi eq, %101, %192 : vector<8x128xi32>
    %194 = arith.andi %191, %193 : vector<8x128xi1>
    %195 = vector.broadcast %181 : i32 to vector<8x128xi32>
    %196 = arith.select %194, %195, %166 : vector<8x128xi1>, vector<8x128xi32>
    %cst_76 = arith.constant 0xFF800000 : f32
    %197 = vector.broadcast %cst_76 : f32 to vector<64x1xf32>
    %198 = arith.select %183, %197, %168 : vector<64x1xi1>, vector<64x1xf32>
    %199 = vector.shape_cast %198 : vector<64x1xf32> to vector<1x64x1xf32>
    %cst_77 = arith.constant dense<0xFF800000> : vector<1xf32>
    %200 = vector.multi_reduction <maximumf>, %199, %cst_77 [1, 2] : vector<1x64x1xf32> to vector<1xf32>
    %201 = vector.shape_cast %200 : vector<1xf32> to vector<1x1x1xf32>
    %202 = vector.extract %201[0, 0, 0] : f32 from vector<1x1x1xf32>
    %203 = vector.broadcast %202 : f32 to vector<64x1xf32>
    %204 = arith.cmpf oeq, %198, %203 : vector<64x1xf32>
    %cst_78 = arith.constant 6.400000e+01 : f32
    %205 = vector.broadcast %cst_78 : f32 to vector<64x1xf32>
    %206 = arith.select %204, %96, %205 : vector<64x1xi1>, vector<64x1xf32>
    %207 = vector.shape_cast %206 : vector<64x1xf32> to vector<1x64x1xf32>
    %cst_79 = arith.constant dense<0x7F800000> : vector<1xf32>
    %208 = vector.multi_reduction <minimumf>, %207, %cst_79 [1, 2] : vector<1x64x1xf32> to vector<1xf32>
    %209 = vector.shape_cast %208 : vector<1xf32> to vector<1x1x1xf32>
    %210 = vector.extract %209[0, 0, 0] : f32 from vector<1x1x1xf32>
    %211 = arith.fptosi %210 : f32 to i32
    %212 = vector.broadcast %211 : i32 to vector<64x1xi32>
    %213 = arith.cmpi eq, %95, %212 : vector<64x1xi32>
    %cst_80 = arith.constant 1.000000e+00 : f32
    %214 = vector.broadcast %cst_80 : f32 to vector<64x1xf32>
    %215 = arith.select %213, %214, %185 : vector<64x1xi1>, vector<64x1xf32>
    %216 = vector.broadcast %211 : i32 to vector<1x64xi32>
    %217 = arith.cmpi eq, %97, %216 : vector<1x64xi32>
    %cst_81 = arith.constant 1.000000e+00 : f32
    %218 = vector.broadcast %cst_81 : f32 to vector<1x64xf32>
    %219 = arith.select %217, %218, %189 : vector<1x64xi1>, vector<1x64xf32>
    %c0_i32_82 = arith.constant 0 : i32
    %220 = vector.broadcast %c0_i32_82 : i32 to vector<8x128xi32>
    %221 = arith.cmpi eq, %100, %220 : vector<8x128xi32>
    %c3_i32 = arith.constant 3 : i32
    %222 = vector.broadcast %c3_i32 : i32 to vector<8x128xi32>
    %223 = arith.cmpi eq, %101, %222 : vector<8x128xi32>
    %224 = arith.andi %221, %223 : vector<8x128xi1>
    %225 = vector.broadcast %211 : i32 to vector<8x128xi32>
    %226 = arith.select %224, %225, %196 : vector<8x128xi1>, vector<8x128xi32>
    %227 = arith.maximumf %105, %215 : vector<64x1xf32>
    %c0_i32_83 = arith.constant 0 : i32
    %228 = vector.broadcast %c0_i32_83 : i32 to vector<64x8xi32>
    %229 = arith.cmpi eq, %99, %228 : vector<64x8xi32>
    %230 = vector.broadcast %215 : vector<64x1xf32> to vector<64x8xf32>
    %231 = arith.maximumf %102, %230 : vector<64x8xf32>
    %232 = arith.select %229, %231, %102 : vector<64x8xi1>, vector<64x8xf32>
    %c0_i32_84 = arith.constant 0 : i32
    %233 = vector.broadcast %c0_i32_84 : i32 to vector<8x64xi32>
    %234 = arith.cmpi eq, %98, %233 : vector<8x64xi32>
    %cst_85 = arith.constant 2.500000e-01 : f32
    %235 = vector.broadcast %cst_85 : f32 to vector<1x64xf32>
    %236 = arith.mulf %219, %235 : vector<1x64xf32>
    %237 = vector.shape_cast %236 : vector<1x64xf32> to vector<1x64xf32>
    %238 = vector.broadcast %237 : vector<1x64xf32> to vector<8x64xf32>
    %239 = arith.select %234, %238, %103 : vector<8x64xi1>, vector<8x64xf32>
    %240 = vector.extract_strided_slice %94 {offsets = [0, 1], sizes = [64, 1], strides = [1, 1]} : vector<64x8xf32> to vector<64x1xf32>
    %cst_86 = arith.constant 0.000000e+00 : f32
    %241 = vector.broadcast %cst_86 : f32 to vector<64x1xf32>
    %cst_87 = arith.constant 0.000000e+00 : f32
    %242 = vector.broadcast %cst_87 : f32 to vector<1x64xf32>
    %243 = vector.shape_cast %240 : vector<64x1xf32> to vector<1x64x1xf32>
    %cst_88 = arith.constant dense<0xFF800000> : vector<1xf32>
    %244 = vector.multi_reduction <maximumf>, %243, %cst_88 [1, 2] : vector<1x64x1xf32> to vector<1xf32>
    %245 = vector.shape_cast %244 : vector<1xf32> to vector<1x1x1xf32>
    %246 = vector.extract %245[0, 0, 0] : f32 from vector<1x1x1xf32>
    %247 = vector.broadcast %246 : f32 to vector<64x1xf32>
    %248 = arith.cmpf oeq, %240, %247 : vector<64x1xf32>
    %cst_89 = arith.constant 6.400000e+01 : f32
    %249 = vector.broadcast %cst_89 : f32 to vector<64x1xf32>
    %250 = arith.select %248, %96, %249 : vector<64x1xi1>, vector<64x1xf32>
    %251 = vector.shape_cast %250 : vector<64x1xf32> to vector<1x64x1xf32>
    %cst_90 = arith.constant dense<0x7F800000> : vector<1xf32>
    %252 = vector.multi_reduction <minimumf>, %251, %cst_90 [1, 2] : vector<1x64x1xf32> to vector<1xf32>
    %253 = vector.shape_cast %252 : vector<1xf32> to vector<1x1x1xf32>
    %254 = vector.extract %253[0, 0, 0] : f32 from vector<1x1x1xf32>
    %255 = arith.fptosi %254 : f32 to i32
    %256 = vector.broadcast %255 : i32 to vector<64x1xi32>
    %257 = arith.cmpi eq, %95, %256 : vector<64x1xi32>
    %cst_91 = arith.constant 1.000000e+00 : f32
    %258 = vector.broadcast %cst_91 : f32 to vector<64x1xf32>
    %259 = arith.select %257, %258, %241 : vector<64x1xi1>, vector<64x1xf32>
    %260 = vector.broadcast %255 : i32 to vector<1x64xi32>
    %261 = arith.cmpi eq, %97, %260 : vector<1x64xi32>
    %cst_92 = arith.constant 1.000000e+00 : f32
    %262 = vector.broadcast %cst_92 : f32 to vector<1x64xf32>
    %263 = arith.select %261, %262, %242 : vector<1x64xi1>, vector<1x64xf32>
    %c1_i32_93 = arith.constant 1 : i32
    %264 = vector.broadcast %c1_i32_93 : i32 to vector<8x128xi32>
    %265 = arith.cmpi eq, %100, %264 : vector<8x128xi32>
    %c0_i32_94 = arith.constant 0 : i32
    %266 = vector.broadcast %c0_i32_94 : i32 to vector<8x128xi32>
    %267 = arith.cmpi eq, %101, %266 : vector<8x128xi32>
    %268 = arith.andi %265, %267 : vector<8x128xi1>
    %269 = vector.broadcast %255 : i32 to vector<8x128xi32>
    %270 = arith.select %268, %269, %226 : vector<8x128xi1>, vector<8x128xi32>
    %cst_95 = arith.constant 0xFF800000 : f32
    %271 = vector.broadcast %cst_95 : f32 to vector<64x1xf32>
    %272 = arith.select %257, %271, %240 : vector<64x1xi1>, vector<64x1xf32>
    %273 = vector.shape_cast %272 : vector<64x1xf32> to vector<1x64x1xf32>
    %cst_96 = arith.constant dense<0xFF800000> : vector<1xf32>
    %274 = vector.multi_reduction <maximumf>, %273, %cst_96 [1, 2] : vector<1x64x1xf32> to vector<1xf32>
    %275 = vector.shape_cast %274 : vector<1xf32> to vector<1x1x1xf32>
    %276 = vector.extract %275[0, 0, 0] : f32 from vector<1x1x1xf32>
    %277 = vector.broadcast %276 : f32 to vector<64x1xf32>
    %278 = arith.cmpf oeq, %272, %277 : vector<64x1xf32>
    %cst_97 = arith.constant 6.400000e+01 : f32
    %279 = vector.broadcast %cst_97 : f32 to vector<64x1xf32>
    %280 = arith.select %278, %96, %279 : vector<64x1xi1>, vector<64x1xf32>
    %281 = vector.shape_cast %280 : vector<64x1xf32> to vector<1x64x1xf32>
    %cst_98 = arith.constant dense<0x7F800000> : vector<1xf32>
    %282 = vector.multi_reduction <minimumf>, %281, %cst_98 [1, 2] : vector<1x64x1xf32> to vector<1xf32>
    %283 = vector.shape_cast %282 : vector<1xf32> to vector<1x1x1xf32>
    %284 = vector.extract %283[0, 0, 0] : f32 from vector<1x1x1xf32>
    %285 = arith.fptosi %284 : f32 to i32
    %286 = vector.broadcast %285 : i32 to vector<64x1xi32>
    %287 = arith.cmpi eq, %95, %286 : vector<64x1xi32>
    %cst_99 = arith.constant 1.000000e+00 : f32
    %288 = vector.broadcast %cst_99 : f32 to vector<64x1xf32>
    %289 = arith.select %287, %288, %259 : vector<64x1xi1>, vector<64x1xf32>
    %290 = vector.broadcast %285 : i32 to vector<1x64xi32>
    %291 = arith.cmpi eq, %97, %290 : vector<1x64xi32>
    %cst_100 = arith.constant 1.000000e+00 : f32
    %292 = vector.broadcast %cst_100 : f32 to vector<1x64xf32>
    %293 = arith.select %291, %292, %263 : vector<1x64xi1>, vector<1x64xf32>
    %c1_i32_101 = arith.constant 1 : i32
    %294 = vector.broadcast %c1_i32_101 : i32 to vector<8x128xi32>
    %295 = arith.cmpi eq, %100, %294 : vector<8x128xi32>
    %c1_i32_102 = arith.constant 1 : i32
    %296 = vector.broadcast %c1_i32_102 : i32 to vector<8x128xi32>
    %297 = arith.cmpi eq, %101, %296 : vector<8x128xi32>
    %298 = arith.andi %295, %297 : vector<8x128xi1>
    %299 = vector.broadcast %285 : i32 to vector<8x128xi32>
    %300 = arith.select %298, %299, %270 : vector<8x128xi1>, vector<8x128xi32>
    %cst_103 = arith.constant 0xFF800000 : f32
    %301 = vector.broadcast %cst_103 : f32 to vector<64x1xf32>
    %302 = arith.select %287, %301, %272 : vector<64x1xi1>, vector<64x1xf32>
    %303 = vector.shape_cast %302 : vector<64x1xf32> to vector<1x64x1xf32>
    %cst_104 = arith.constant dense<0xFF800000> : vector<1xf32>
    %304 = vector.multi_reduction <maximumf>, %303, %cst_104 [1, 2] : vector<1x64x1xf32> to vector<1xf32>
    %305 = vector.shape_cast %304 : vector<1xf32> to vector<1x1x1xf32>
    %306 = vector.extract %305[0, 0, 0] : f32 from vector<1x1x1xf32>
    %307 = vector.broadcast %306 : f32 to vector<64x1xf32>
    %308 = arith.cmpf oeq, %302, %307 : vector<64x1xf32>
    %cst_105 = arith.constant 6.400000e+01 : f32
    %309 = vector.broadcast %cst_105 : f32 to vector<64x1xf32>
    %310 = arith.select %308, %96, %309 : vector<64x1xi1>, vector<64x1xf32>
    %311 = vector.shape_cast %310 : vector<64x1xf32> to vector<1x64x1xf32>
    %cst_106 = arith.constant dense<0x7F800000> : vector<1xf32>
    %312 = vector.multi_reduction <minimumf>, %311, %cst_106 [1, 2] : vector<1x64x1xf32> to vector<1xf32>
    %313 = vector.shape_cast %312 : vector<1xf32> to vector<1x1x1xf32>
    %314 = vector.extract %313[0, 0, 0] : f32 from vector<1x1x1xf32>
    %315 = arith.fptosi %314 : f32 to i32
    %316 = vector.broadcast %315 : i32 to vector<64x1xi32>
    %317 = arith.cmpi eq, %95, %316 : vector<64x1xi32>
    %cst_107 = arith.constant 1.000000e+00 : f32
    %318 = vector.broadcast %cst_107 : f32 to vector<64x1xf32>
    %319 = arith.select %317, %318, %289 : vector<64x1xi1>, vector<64x1xf32>
    %320 = vector.broadcast %315 : i32 to vector<1x64xi32>
    %321 = arith.cmpi eq, %97, %320 : vector<1x64xi32>
    %cst_108 = arith.constant 1.000000e+00 : f32
    %322 = vector.broadcast %cst_108 : f32 to vector<1x64xf32>
    %323 = arith.select %321, %322, %293 : vector<1x64xi1>, vector<1x64xf32>
    %c1_i32_109 = arith.constant 1 : i32
    %324 = vector.broadcast %c1_i32_109 : i32 to vector<8x128xi32>
    %325 = arith.cmpi eq, %100, %324 : vector<8x128xi32>
    %c2_i32_110 = arith.constant 2 : i32
    %326 = vector.broadcast %c2_i32_110 : i32 to vector<8x128xi32>
    %327 = arith.cmpi eq, %101, %326 : vector<8x128xi32>
    %328 = arith.andi %325, %327 : vector<8x128xi1>
    %329 = vector.broadcast %315 : i32 to vector<8x128xi32>
    %330 = arith.select %328, %329, %300 : vector<8x128xi1>, vector<8x128xi32>
    %cst_111 = arith.constant 0xFF800000 : f32
    %331 = vector.broadcast %cst_111 : f32 to vector<64x1xf32>
    %332 = arith.select %317, %331, %302 : vector<64x1xi1>, vector<64x1xf32>
    %333 = vector.shape_cast %332 : vector<64x1xf32> to vector<1x64x1xf32>
    %cst_112 = arith.constant dense<0xFF800000> : vector<1xf32>
    %334 = vector.multi_reduction <maximumf>, %333, %cst_112 [1, 2] : vector<1x64x1xf32> to vector<1xf32>
    %335 = vector.shape_cast %334 : vector<1xf32> to vector<1x1x1xf32>
    %336 = vector.extract %335[0, 0, 0] : f32 from vector<1x1x1xf32>
    %337 = vector.broadcast %336 : f32 to vector<64x1xf32>
    %338 = arith.cmpf oeq, %332, %337 : vector<64x1xf32>
    %cst_113 = arith.constant 6.400000e+01 : f32
    %339 = vector.broadcast %cst_113 : f32 to vector<64x1xf32>
    %340 = arith.select %338, %96, %339 : vector<64x1xi1>, vector<64x1xf32>
    %341 = vector.shape_cast %340 : vector<64x1xf32> to vector<1x64x1xf32>
    %cst_114 = arith.constant dense<0x7F800000> : vector<1xf32>
    %342 = vector.multi_reduction <minimumf>, %341, %cst_114 [1, 2] : vector<1x64x1xf32> to vector<1xf32>
    %343 = vector.shape_cast %342 : vector<1xf32> to vector<1x1x1xf32>
    %344 = vector.extract %343[0, 0, 0] : f32 from vector<1x1x1xf32>
    %345 = arith.fptosi %344 : f32 to i32
    %346 = vector.broadcast %345 : i32 to vector<64x1xi32>
    %347 = arith.cmpi eq, %95, %346 : vector<64x1xi32>
    %cst_115 = arith.constant 1.000000e+00 : f32
    %348 = vector.broadcast %cst_115 : f32 to vector<64x1xf32>
    %349 = arith.select %347, %348, %319 : vector<64x1xi1>, vector<64x1xf32>
    %350 = vector.broadcast %345 : i32 to vector<1x64xi32>
    %351 = arith.cmpi eq, %97, %350 : vector<1x64xi32>
    %cst_116 = arith.constant 1.000000e+00 : f32
    %352 = vector.broadcast %cst_116 : f32 to vector<1x64xf32>
    %353 = arith.select %351, %352, %323 : vector<1x64xi1>, vector<1x64xf32>
    %c1_i32_117 = arith.constant 1 : i32
    %354 = vector.broadcast %c1_i32_117 : i32 to vector<8x128xi32>
    %355 = arith.cmpi eq, %100, %354 : vector<8x128xi32>
    %c3_i32_118 = arith.constant 3 : i32
    %356 = vector.broadcast %c3_i32_118 : i32 to vector<8x128xi32>
    %357 = arith.cmpi eq, %101, %356 : vector<8x128xi32>
    %358 = arith.andi %355, %357 : vector<8x128xi1>
    %359 = vector.broadcast %345 : i32 to vector<8x128xi32>
    %360 = arith.select %358, %359, %330 : vector<8x128xi1>, vector<8x128xi32>
    %361 = arith.maximumf %227, %349 : vector<64x1xf32>
    %c1_i32_119 = arith.constant 1 : i32
    %362 = vector.broadcast %c1_i32_119 : i32 to vector<64x8xi32>
    %363 = arith.cmpi eq, %99, %362 : vector<64x8xi32>
    %364 = vector.broadcast %349 : vector<64x1xf32> to vector<64x8xf32>
    %365 = arith.maximumf %232, %364 : vector<64x8xf32>
    %366 = arith.select %363, %365, %232 : vector<64x8xi1>, vector<64x8xf32>
    %c1_i32_120 = arith.constant 1 : i32
    %367 = vector.broadcast %c1_i32_120 : i32 to vector<8x64xi32>
    %368 = arith.cmpi eq, %98, %367 : vector<8x64xi32>
    %cst_121 = arith.constant 2.500000e-01 : f32
    %369 = vector.broadcast %cst_121 : f32 to vector<1x64xf32>
    %370 = arith.mulf %353, %369 : vector<1x64xf32>
    %371 = vector.shape_cast %370 : vector<1x64xf32> to vector<1x64xf32>
    %372 = vector.broadcast %371 : vector<1x64xf32> to vector<8x64xf32>
    %373 = arith.select %368, %372, %239 : vector<8x64xi1>, vector<8x64xf32>
    %c0_122 = arith.constant 0 : index
    %c0_123 = arith.constant 0 : index
    %374 = vector.load %arg16[%c0_122, %c0_123] : memref<64x8xf32, #tpu.memory_space<vmem>>, vector<64x8xf32>
    tpu.vector_store %arg16[%c0_122, %c0_123], %366 {strides = array<i32>} : memref<64x8xf32, #tpu.memory_space<vmem>>, vector<64x8xf32>,
    %c0_124 = arith.constant 0 : index
    %c0_125 = arith.constant 0 : index
    %375 = vector.load %arg15[%c0_124, %c0_125] : memref<8x64xf32, #tpu.memory_space<vmem>>, vector<8x64xf32>
    tpu.vector_store %arg15[%c0_124, %c0_125], %373 {strides = array<i32>} : memref<8x64xf32, #tpu.memory_space<vmem>>, vector<8x64xf32>,
    %c0_126 = arith.constant 0 : index
    %c0_127 = arith.constant 0 : index
    %376 = vector.load %arg17[%c0_126, %c0_127] : memref<64x1xf32, #tpu.memory_space<vmem>>, vector<64x1xf32>
    %377 = arith.maximumf %376, %361 : vector<64x1xf32>
    %c0_128 = arith.constant 0 : index
    %c0_129 = arith.constant 0 : index
    %378 = vector.load %arg17[%c0_128, %c0_129] : memref<64x1xf32, #tpu.memory_space<vmem>>, vector<64x1xf32>
    tpu.vector_store %arg17[%c0_128, %c0_129], %377 {strides = array<i32>} : memref<64x1xf32, #tpu.memory_space<vmem>>, vector<64x1xf32>,
    %c0_130 = arith.constant 0 : index
    %c0_131 = arith.constant 0 : index
    %c0_132 = arith.constant 0 : index
    %379 = vector.load %arg13[%c0_130, %c0_131, %c0_132] : memref<1x8x128xi32, #tpu.memory_space<vmem>>, vector<1x8x128xi32>
    %380 = vector.shape_cast %379 : vector<1x8x128xi32> to vector<8x128xi32>
    %381 = vector.shape_cast %360 : vector<8x128xi32> to vector<1x8x128xi32>
    tpu.vector_store %arg13[%c0_130, %c0_131, %c0_132], %381 {strides = array<i32>} : memref<1x8x128xi32, #tpu.memory_space<vmem>>, vector<1x8x128xi32>,
    return
  }
  func.func @transform_0(%arg0: i32, %arg1: memref<2xi32, #tpu.memory_space<smem>>) -> (i32, i32) {
    %c0_i32 = arith.constant 0 : i32
    %c0_i32_0 = arith.constant 0 : i32
    %c0_i32_1 = arith.constant 0 : i32
    return %c0_i32, %c0_i32_0 : i32, i32
  }
  func.func @transform_1(%arg0: i32, %arg1: memref<2xi32, #tpu.memory_space<smem>>) -> (i32, i32) {
    %c0_i32 = arith.constant 0 : i32
    %c0_i32_0 = arith.constant 0 : i32
    %c0_i32_1 = arith.constant 0 : i32
    return %c0_i32, %c0_i32_0 : i32, i32
  }
  func.func @transform_2(%arg0: i32, %arg1: memref<2xi32, #tpu.memory_space<smem>>) -> (i32, i32) {
    %c0_i32 = arith.constant 0 : i32
    %c0_i32_0 = arith.constant 0 : i32
    %c0_i32_1 = arith.constant 0 : i32
    return %c0_i32, %c0_i32_0 : i32, i32
  }
  func.func @transform_3(%arg0: i32, %arg1: memref<2xi32, #tpu.memory_space<smem>>) -> (i32, i32) {
    %c0_i32 = arith.constant 0 : i32
    %c0_i32_0 = arith.constant 0 : i32
    %c0_i32_1 = arith.constant 0 : i32
    return %c0_i32, %c0_i32_0 : i32, i32
  }
  func.func @transform_4(%arg0: i32, %arg1: memref<2xi32, #tpu.memory_space<smem>>) -> (i32, i32) {
    %c0_i32 = arith.constant 0 : i32
    %c0_i32_0 = arith.constant 0 : i32
    %c0_i32_1 = arith.constant 0 : i32
    return %c0_i32, %c0_i32_0 : i32, i32
  }
  func.func @transform_5(%arg0: i32, %arg1: memref<2xi32, #tpu.memory_space<smem>>) -> (i32, i32) {
    %c0_i32 = arith.constant 0 : i32
    %c0_i32_0 = arith.constant 0 : i32
    %c0_i32_1 = arith.constant 0 : i32
    return %c0_i32, %c0_i32_0 : i32, i32
  }
  func.func @transform_6(%arg0: i32, %arg1: memref<2xi32, #tpu.memory_space<smem>>) -> (i32, i32) {
    %c0_i32 = arith.constant 0 : i32
    %c0_i32_0 = arith.constant 0 : i32
    %c0_i32_1 = arith.constant 0 : i32
    return %c0_i32, %c0_i32_0 : i32, i32
  }
  func.func @transform_7(%arg0: i32, %arg1: memref<2xi32, #tpu.memory_space<smem>>) -> (i32, i32) {
    %c0_i32 = arith.constant 0 : i32
    %c0_i32_0 = arith.constant 0 : i32
    %c0_i32_1 = arith.constant 0 : i32
    return %c0_i32, %c0_i32_0 : i32, i32
  }
  func.func @transform_8(%arg0: i32, %arg1: memref<2xi32, #tpu.memory_space<smem>>) -> (i32, i32) {
    %c0_i32 = arith.constant 0 : i32
    %c0_i32_0 = arith.constant 0 : i32
    %c0_i32_1 = arith.constant 0 : i32
    return %c0_i32, %c0_i32_0 : i32, i32
  }
  func.func @transform_9(%arg0: i32, %arg1: memref<2xi32, #tpu.memory_space<smem>>) -> (i32, i32, i32) {
    %c0_i32 = arith.constant 0 : i32
    %c0_i32_0 = arith.constant 0 : i32
    %c0_i32_1 = arith.constant 0 : i32
    return %arg0, %c0_i32, %c0_i32_0 : i32, i32, i32
  }
  func.func @transform_10(%arg0: i32, %arg1: memref<2xi32, #tpu.memory_space<smem>>) -> (i32, i32, i32) {
    %c0_i32 = arith.constant 0 : i32
    %c0_i32_0 = arith.constant 0 : i32
    %c0_i32_1 = arith.constant 0 : i32
    return %arg0, %c0_i32, %c0_i32_0 : i32, i32, i32
  }
  func.func @transform_11(%arg0: i32, %arg1: memref<2xi32, #tpu.memory_space<smem>>) -> (i32, i32, i32) {
    %c0_i32 = arith.constant 0 : i32
    %c0_i32_0 = arith.constant 0 : i32
    %c0_i32_1 = arith.constant 0 : i32
    return %arg0, %c0_i32, %c0_i32_0 : i32, i32, i32
  }
}

</mosaic_0001>

<llo_original>
// kernel: squeeze.9
$region0: #{squeeze.9}
  %s0 = inlined_call_operand.vmem [shape: s32[1,2,4], index: 0, kind: input, shape index: {}]
  %s1 = inlined_call_operand.vmem [shape: s32[8], index: 1, kind: output, shape index: {}]
  $region1: #{squeeze.9} parent=0
    #allocation0 [shape = 'u8[4096]{0}', space=vmem, size = 0x1000, scoped, tag = 'scoped mem for output reshape']
    #allocation1 [shape = 'u8[4096]{0}', space=vmem, size = 0x1000, scoped, tag = 'scoped mem for input reshape']
    %s3 = sshllo.u32 0, 2
    %v4 = vld [vmem:[%s0] sm:%s3]
    %5 = vst [vmem:[#allocation1] sm:%s3] %v4
    %v6 = vld [vmem:[#allocation1] sm:$0x1]
    %vm7 = vcmask 31744
    %8 = vst.msk [vmem:[#allocation0] sm:$0x1] %vm7, %v6
    %s9 = scalar_lea.vmem [#allocation1], 1
    %v10 = vld [vmem:[%s9] sm:$0x1]
    %11 = vrot.lane.b32.xlu0 %v10, 4
    %v12 = vpop.permute.xlu0 %11
    %vm13 = vcmask 64544
    %14 = vst.msk [vmem:[#allocation0] sm:$0x1] %vm13, %v12
    %s16 = sshllo.u32 0, 1
    %v18 = vld [vmem:[#allocation0] sm:%s16]
    %s19 = sshllo.u32 0, 1
    %20 = vst [vmem:[%s1] sm:%s19] %v18

// kernel: run.2
$region0: #{run.2}
  #allocation0 [shape = 'u32[]', space=smem, size = 0x4, offset = 0x4, fixed_abs, tag = 'smem constant byte address 0x4 - core index']
  #allocation1 [shape = 'u32[144,128]{1,0:T(1,128)}', space=vmem, size = 0x12000, scoped, tag = 'internal scratch']
  %s0 = inlined_call_operand.vmem [shape: f32[64,128], index: 0, kind: input, shape index: {}]
  %s1 = inlined_call_operand.vmem [shape: f32[32,128], index: 1, kind: input, shape index: {}]
  %s2 = inlined_call_operand.vmem [shape: bf16[64,32], index: 2, kind: input, shape index: {}]
  %s3 = inlined_call_operand.vmem [shape: bf16[32,64], index: 3, kind: input, shape index: {}]
  %s4 = inlined_call_operand.vmem [shape: bf16[1,64], index: 4, kind: input, shape index: {}]
  %s5 = inlined_call_operand.vmem [shape: bf16[2,256,128], index: 5, kind: input, shape index: {}]
  %s6 = inlined_call_operand.vmem [shape: f32[2,1,128], index: 6, kind: input, shape index: {}]
  %s7 = inlined_call_operand.vmem [shape: bf16[2,256,128], index: 7, kind: input, shape index: {}]
  %s8 = inlined_call_operand.vmem [shape: bf16[2,128,128], index: 8, kind: input, shape index: {}]
  %s9 = inlined_call_operand.vmem [shape: f32[2,1,128], index: 9, kind: input, shape index: {}]
  %s10 = inlined_call_operand.vmem [shape: f32[64,128], index: 10, kind: output, shape index: {0}]
  %s11 = inlined_call_operand.hbm [shape: f32[32,128], index: 11, kind: output, shape index: {1}]
  %12 = xla_tuple %s10, %s11
  %s13 = sld [smem:[#allocation0]]
  $region85: #{run.2} parent=0
    _
  %s15 = ssub.s32 1, %s13
  %s16 = scalar_select 0, %s15, %s13
  $region1: #{run.2} parent=0
    #allocation2 [shape = 'u8[16384]{0}', space=vmem, size = 0x4000, scoped, tag = 'output window, operand 1, single buffered']
    #allocation3 [shape = 's32[2]{0}', space=sflag, size = 0x8, scoped, tag = 'scoped memory for run.2']
    %17 = vsyncpa [#allocation3], 0
    loop: start=0, step=1, limit=4
    $region2: #{run.2} parent=1 // loop_pre_header
      _
    $region3: #{run.2} parent=1 // loop_header
      %s19 = sphi 0, %s23
      %p20 = scmp.ge.s32.totalorder %s19, 4
      %s27 = sphi 0, %s27
      %s29 = sphi 0, %s27
      %s30 = sphi 0, %s29
      %s44 = sphi 0, %s30
      %s48 = sphi 0, %s48
      %s50 = sphi 0, %s48
      %s51 = sphi 0, %s50
      %s65 = sphi 0, %s51
      %s69 = sphi 0, %s69
      %s71 = sphi 0, %s69
      %s72 = sphi 0, %s71
      %s86 = sphi 0, %s72
      %s90 = sphi 0, %s90
      %s92 = sphi 0, %s90
      %s93 = sphi 0, %s92
      %s107 = sphi 0, %s93
      %s111 = sphi 0, %s111
      %s113 = sphi 0, %s111
      %s114 = sphi 0, %s113
      %s128 = sphi 0, %s114
      %s134 = sphi 0, %s136
      %s137 = sphi 0, %s134
      %s138 = sphi 0, %s137
      %s154 = sphi 0, %s138
      %s160 = sphi 0, %s162
      %s163 = sphi 0, %s160
      %s164 = sphi 0, %s163
      %s180 = sphi 0, %s164
      %s186 = sphi 0, %s188
      %s189 = sphi 0, %s186
      %s190 = sphi 0, %s189
      %s206 = sphi 0, %s190
      %s212 = sphi 0, %s214
      %s215 = sphi 0, %s212
      %s216 = sphi 0, %s215
      %s232 = sphi 0, %s216
      %s238 = sphi 0, %s240
      %s241 = sphi 0, %s238
      %s242 = sphi 0, %s241
      %s258 = sphi 0, %s242
      %s262 = sphi 0, %s262
      %s264 = sphi 0, %s262
      %s265 = sphi 0, %s264
      %s279 = sphi 0, %s265
      %s283 = sphi 0, %s283
      %s285 = sphi 0, %s283
      %s286 = sphi 0, %s285
      %s300 = sphi 0, %s286
    $region4: #{run.2} parent=1 // loop_header_branch
      %22 = sbr.rel (%p20) target = $region8
    $region5: #{run.2} parent=1 // loop_body
      %s24 = ssub.s32 %s19, 1
      %s25 = ssub.s32 %s19, 2
      %s26 = sadd.s32 %s19, 1
      %s28 = sadd.s32 %s27, 1
      %p31 = scmp.eq.s32.totalorder %s19, 1
      %p32 = scmp.ne.s32.totalorder %s27, %s29
      %p33 = scmp.eq.s32.totalorder %s19, 0
      %p34 = por %p32, %p33
      %p35 = scmp.ne.s32.totalorder %s27, %s29
      %p36 = scmp.eq.s32.totalorder %s24, 1
      %p37 = por %p35, %p36
      %p38 = scmp.ne.s32.totalorder %s29, %s30
      %p39 = scmp.eq.s32.totalorder %s24, 0
      %p40 = por %p38, %p39
      %p41 = scmp.ne.s32.totalorder %s29, %s30
      %p42 = scmp.eq.s32.totalorder %s25, 1
      %p43 = por %p41, %p42
      %p45 = scmp.ne.s32.totalorder %s30, %s44
      %p46 = scmp.eq.s32.totalorder %s25, 0
      %p47 = por %p45, %p46
      %s49 = sadd.s32 %s48, 1
      %p52 = scmp.eq.s32.totalorder %s19, 1
      %p53 = scmp.ne.s32.totalorder %s48, %s50
      %p54 = scmp.eq.s32.totalorder %s19, 0
      %p55 = por %p53, %p54
      %p56 = scmp.ne.s32.totalorder %s48, %s50
      %p57 = scmp.eq.s32.totalorder %s24, 1
      %p58 = por %p56, %p57
      %p59 = scmp.ne.s32.totalorder %s50, %s51
      %p60 = scmp.eq.s32.totalorder %s24, 0
      %p61 = por %p59, %p60
      %p62 = scmp.ne.s32.totalorder %s50, %s51
      %p63 = scmp.eq.s32.totalorder %s25, 1
      %p64 = por %p62, %p63
      %p66 = scmp.ne.s32.totalorder %s51, %s65
      %p67 = scmp.eq.s32.totalorder %s25, 0
      %p68 = por %p66, %p67
      %s70 = sadd.s32 %s69, 1
      %p73 = scmp.eq.s32.totalorder %s19, 1
      %p74 = scmp.ne.s32.totalorder %s69, %s71
      %p75 = scmp.eq.s32.totalorder %s19, 0
      %p76 = por %p74, %p75
      %p77 = scmp.ne.s32.totalorder %s69, %s71
      %p78 = scmp.eq.s32.totalorder %s24, 1
      %p79 = por %p77, %p78
      %p80 = scmp.ne.s32.totalorder %s71, %s72
      %p81 = scmp.eq.s32.totalorder %s24, 0
      %p82 = por %p80, %p81
      %p83 = scmp.ne.s32.totalorder %s71, %s72
      %p84 = scmp.eq.s32.totalorder %s25, 1
      %p85 = por %p83, %p84
      %p87 = scmp.ne.s32.totalorder %s72, %s86
      %p88 = scmp.eq.s32.totalorder %s25, 0
      %p89 = por %p87, %p88
      %s91 = sadd.s32 %s90, 1
      %p94 = scmp.eq.s32.totalorder %s19, 1
      %p95 = scmp.ne.s32.totalorder %s90, %s92
      %p96 = scmp.eq.s32.totalorder %s19, 0
      %p97 = por %p95, %p96
      %p98 = scmp.ne.s32.totalorder %s90, %s92
      %p99 = scmp.eq.s32.totalorder %s24, 1
      %p100 = por %p98, %p99
      %p101 = scmp.ne.s32.totalorder %s92, %s93
      %p102 = scmp.eq.s32.totalorder %s24, 0
      %p103 = por %p101, %p102
      %p104 = scmp.ne.s32.totalorder %s92, %s93
      %p105 = scmp.eq.s32.totalorder %s25, 1
      %p106 = por %p104, %p105
      %p108 = scmp.ne.s32.totalorder %s93, %s107
      %p109 = scmp.eq.s32.totalorder %s25, 0
      %p110 = por %p108, %p109
      %s112 = sadd.s32 %s111, 1
      %p115 = scmp.eq.s32.totalorder %s19, 1
      %p116 = scmp.ne.s32.totalorder %s111, %s113
      %p117 = scmp.eq.s32.totalorder %s19, 0
      %p118 = por %p116, %p117
      %p119 = scmp.ne.s32.totalorder %s111, %s113
      %p120 = scmp.eq.s32.totalorder %s24, 1
      %p121 = por %p119, %p120
      %p122 = scmp.ne.s32.totalorder %s113, %s114
      %p123 = scmp.eq.s32.totalorder %s24, 0
      %p124 = por %p122, %p123
      %p125 = scmp.ne.s32.totalorder %s113, %s114
      %p126 = scmp.eq.s32.totalorder %s25, 1
      %p127 = por %p125, %p126
      %p129 = scmp.ne.s32.totalorder %s114, %s128
      %p130 = scmp.eq.s32.totalorder %s25, 0
      %p131 = por %p129, %p130
      %s132 = ssub.s32 %s19, %s26
      %p133 = scmp.eq.s32.totalorder %s132, 0
      %s135 = sadd.s32 %s134, 1
      %s136 = scalar_select %p133, %s134, %s135
      %p139 = pneg %p133
      %p140 = scmp.eq.s32.totalorder %s19, 1
      %p141 = por %p139, %p140
      %p142 = scmp.ne.s32.totalorder %s134, %s137
      %p143 = scmp.eq.s32.totalorder %s19, 0
      %p144 = por %p142, %p143
      %p145 = scmp.ne.s32.totalorder %s134, %s137
      %p146 = scmp.eq.s32.totalorder %s24, 1
      %p147 = por %p145, %p146
      %p148 = scmp.ne.s32.totalorder %s137, %s138
      %p149 = scmp.eq.s32.totalorder %s24, 0
      %p150 = por %p148, %p149
      %p151 = scmp.ne.s32.totalorder %s137, %s138
      %p152 = scmp.eq.s32.totalorder %s25, 1
      %p153 = por %p151, %p152
      %p155 = scmp.ne.s32.totalorder %s138, %s154
      %p156 = scmp.eq.s32.totalorder %s25, 0
      %p157 = por %p155, %p156
      %s158 = ssub.s32 %s19, %s26
      %p159 = scmp.eq.s32.totalorder %s158, 0
      %s161 = sadd.s32 %s160, 1
      %s162 = scalar_select %p159, %s160, %s161
      %p165 = pneg %p159
      %p166 = scmp.eq.s32.totalorder %s19, 1
      %p167 = por %p165, %p166
      %p168 = scmp.ne.s32.totalorder %s160, %s163
      %p169 = scmp.eq.s32.totalorder %s19, 0
      %p170 = por %p168, %p169
      %p171 = scmp.ne.s32.totalorder %s160, %s163
      %p172 = scmp.eq.s32.totalorder %s24, 1
      %p173 = por %p171, %p172
      %p174 = scmp.ne.s32.totalorder %s163, %s164
      %p175 = scmp.eq.s32.totalorder %s24, 0
      %p176 = por %p174, %p175
      %p177 = scmp.ne.s32.totalorder %s163, %s164
      %p178 = scmp.eq.s32.totalorder %s25, 1
      %p179 = por %p177, %p178
      %p181 = scmp.ne.s32.totalorder %s164, %s180
      %p182 = scmp.eq.s32.totalorder %s25, 0
      %p183 = por %p181, %p182
      %s184 = ssub.s32 %s19, %s26
      %p185 = scmp.eq.s32.totalorder %s184, 0
      %s187 = sadd.s32 %s186, 1
      %s188 = scalar_select %p185, %s186, %s187
      %p191 = pneg %p185
      %p192 = scmp.eq.s32.totalorder %s19, 1
      %p193 = por %p191, %p192
      %p194 = scmp.ne.s32.totalorder %s186, %s189
      %p195 = scmp.eq.s32.totalorder %s19, 0
      %p196 = por %p194, %p195
      %p197 = scmp.ne.s32.totalorder %s186, %s189
      %p198 = scmp.eq.s32.totalorder %s24, 1
      %p199 = por %p197, %p198
      %p200 = scmp.ne.s32.totalorder %s189, %s190
      %p201 = scmp.eq.s32.totalorder %s24, 0
      %p202 = por %p200, %p201
      %p203 = scmp.ne.s32.totalorder %s189, %s190
      %p204 = scmp.eq.s32.totalorder %s25, 1
      %p205 = por %p203, %p204
      %p207 = scmp.ne.s32.totalorder %s190, %s206
      %p208 = scmp.eq.s32.totalorder %s25, 0
      %p209 = por %p207, %p208
      %s210 = ssub.s32 %s19, %s26
      %p211 = scmp.eq.s32.totalorder %s210, 0
      %s213 = sadd.s32 %s212, 1
      %s214 = scalar_select %p211, %s212, %s213
      %p217 = pneg %p211
      %p218 = scmp.eq.s32.totalorder %s19, 1
      %p219 = por %p217, %p218
      %p220 = scmp.ne.s32.totalorder %s212, %s215
      %p221 = scmp.eq.s32.totalorder %s19, 0
      %p222 = por %p220, %p221
      %p223 = scmp.ne.s32.totalorder %s212, %s215
      %p224 = scmp.eq.s32.totalorder %s24, 1
      %p225 = por %p223, %p224
      %p226 = scmp.ne.s32.totalorder %s215, %s216
      %p227 = scmp.eq.s32.totalorder %s24, 0
      %p228 = por %p226, %p227
      %p229 = scmp.ne.s32.totalorder %s215, %s216
      %p230 = scmp.eq.s32.totalorder %s25, 1
      %p231 = por %p229, %p230
      %p233 = scmp.ne.s32.totalorder %s216, %s232
      %p234 = scmp.eq.s32.totalorder %s25, 0
      %p235 = por %p233, %p234
      %s236 = ssub.s32 %s19, %s26
      %p237 = scmp.eq.s32.totalorder %s236, 0
      %s239 = sadd.s32 %s238, 1
      %s240 = scalar_select %p237, %s238, %s239
      %p243 = pneg %p237
      %p244 = scmp.eq.s32.totalorder %s19, 1
      %p245 = por %p243, %p244
      %p246 = scmp.ne.s32.totalorder %s238, %s241
      %p247 = scmp.eq.s32.totalorder %s19, 0
      %p248 = por %p246, %p247
      %p249 = scmp.ne.s32.totalorder %s238, %s241
      %p250 = scmp.eq.s32.totalorder %s24, 1
      %p251 = por %p249, %p250
      %p252 = scmp.ne.s32.totalorder %s241, %s242
      %p253 = scmp.eq.s32.totalorder %s24, 0
      %p254 = por %p252, %p253
      %p255 = scmp.ne.s32.totalorder %s241, %s242
      %p256 = scmp.eq.s32.totalorder %s25, 1
      %p257 = por %p255, %p256
      %p259 = scmp.ne.s32.totalorder %s242, %s258
      %p260 = scmp.eq.s32.totalorder %s25, 0
      %p261 = por %p259, %p260
      %s263 = sadd.s32 %s262, 1
      %p266 = scmp.eq.s32.totalorder %s19, 1
      %p267 = scmp.ne.s32.totalorder %s262, %s264
      %p268 = scmp.eq.s32.totalorder %s19, 0
      %p269 = por %p267, %p268
      %p270 = scmp.ne.s32.totalorder %s262, %s264
      %p271 = scmp.eq.s32.totalorder %s24, 1
      %p272 = por %p270, %p271
      %p273 = scmp.ne.s32.totalorder %s264, %s265
      %p274 = scmp.eq.s32.totalorder %s24, 0
      %p275 = por %p273, %p274
      %p276 = scmp.ne.s32.totalorder %s264, %s265
      %p277 = scmp.eq.s32.totalorder %s25, 1
      %p278 = por %p276, %p277
      %p280 = scmp.ne.s32.totalorder %s265, %s279
      %p281 = scmp.eq.s32.totalorder %s25, 0
      %p282 = por %p280, %p281
      %s284 = sadd.s32 %s283, 1
      %p287 = scmp.eq.s32.totalorder %s19, 1
      %p288 = scmp.ne.s32.totalorder %s283, %s285
      %p289 = scmp.eq.s32.totalorder %s19, 0
      %p290 = por %p288, %p289
      %p291 = scmp.ne.s32.totalorder %s283, %s285
      %p292 = scmp.eq.s32.totalorder %s24, 1
      %p293 = por %p291, %p292
      %p294 = scmp.ne.s32.totalorder %s285, %s286
      %p295 = scmp.eq.s32.totalorder %s24, 0
      %p296 = por %p294, %p295
      %p297 = scmp.ne.s32.totalorder %s285, %s286
      %p298 = scmp.eq.s32.totalorder %s25, 1
      %p299 = por %p297, %p298
      %p301 = scmp.ne.s32.totalorder %s286, %s300
      %p302 = scmp.eq.s32.totalorder %s25, 0
      %p303 = por %p301, %p302
      %p304 = scmp.le.s32.totalorder 1, %s19
      %p305 = scmp.lt.s32.totalorder %s19, 3
      %p306 = pnand %p304, %p305
      %p307 = pneg %p306
      // Predicated region
      $region9: #{run.2} parent=5 // pred_check
        _
      $region10: #{run.2} parent=5 // pred_check_branch
        %309 = sbr.rel (%p306) target = $region12
      $region11: #{run.2} parent=5 // pred_region
        %s310 = ssub.s32 %s19, 1
        // Predicated region
        $region13: #{run.2} parent=11 // pred_check
          %p311 = pneg %p40
        $region14: #{run.2} parent=11 // pred_check_branch
          %313 = sbr.rel (%p311) target = $region16
        $region15: #{run.2} parent=11 // pred_region
          _
        $region16: #{run.2} parent=11 // pred_fallthru
          _
        // Predicated region
        $region17: #{run.2} parent=11 // pred_check
          %p314 = pneg %p61
        $region18: #{run.2} parent=11 // pred_check_branch
          %316 = sbr.rel (%p314) target = $region20
        $region19: #{run.2} parent=11 // pred_region
          _
        $region20: #{run.2} parent=11 // pred_fallthru
          _
        // Predicated region
        $region21: #{run.2} parent=11 // pred_check
          %p317 = pneg %p82
        $region22: #{run.2} parent=11 // pred_check_branch
          %319 = sbr.rel (%p317) target = $region24
        $region23: #{run.2} parent=11 // pred_region
          _
        $region24: #{run.2} parent=11 // pred_fallthru
          _
        // Predicated region
        $region25: #{run.2} parent=11 // pred_check
          %p320 = pneg %p103
        $region26: #{run.2} parent=11 // pred_check_branch
          %322 = sbr.rel (%p320) target = $region28
        $region27: #{run.2} parent=11 // pred_region
          _
        $region28: #{run.2} parent=11 // pred_fallthru
          _
        // Predicated region
        $region29: #{run.2} parent=11 // pred_check
          %p323 = pneg %p124
        $region30: #{run.2} parent=11 // pred_check_branch
          %325 = sbr.rel (%p323) target = $region32
        $region31: #{run.2} parent=11 // pred_region
          _
        $region32: #{run.2} parent=11 // pred_fallthru
          _
      $region12: #{run.2} parent=5 // pred_fallthru
        _
      %p326 = scmp.lt.s32.totalorder %s19, 2
      // Predicated region
      $region33: #{run.2} parent=5 // pred_check
        %p327 = pneg %p326
      $region34: #{run.2} parent=5 // pred_check_branch
        %329 = sbr.rel (%p327) target = $region36
      $region35: #{run.2} parent=5 // pred_region
        // Predicated region
        $region37: #{run.2} parent=35 // pred_check
          %p330 = pneg %p144
        $region38: #{run.2} parent=35 // pred_check_branch
          %332 = sbr.rel (%p330) target = $region40
        $region39: #{run.2} parent=35 // pred_region
          %p333 = scmp.lt.s32.totalorder %s19, 1
          %s334 = scalar_select %p333, %s19, 1
          %s335 = smul.addr %s334, 32
          %s336 = smul.addr %s335, 4
          %s337 = scalar_lea.vmem %s5, %s336
        $region40: #{run.2} parent=35 // pred_fallthru
          _
        // Predicated region
        $region41: #{run.2} parent=35 // pred_check
          %p338 = pneg %p170
        $region42: #{run.2} parent=35 // pred_check_branch
          %340 = sbr.rel (%p338) target = $region44
        $region43: #{run.2} parent=35 // pred_region
          %p341 = scmp.lt.s32.totalorder %s19, 1
          %s342 = scalar_select %p341, %s19, 1
          %s343 = scalar_lea.vmem %s6, %s342
        $region44: #{run.2} parent=35 // pred_fallthru
          _
        // Predicated region
        $region45: #{run.2} parent=35 // pred_check
          %p344 = pneg %p196
        $region46: #{run.2} parent=35 // pred_check_branch
          %346 = sbr.rel (%p344) target = $region48
        $region47: #{run.2} parent=35 // pred_region
          %p347 = scmp.lt.s32.totalorder %s19, 1
          %s348 = scalar_select %p347, %s19, 1
          %s349 = smul.addr %s348, 32
          %s350 = smul.addr %s349, 4
          %s351 = scalar_lea.vmem %s7, %s350
        $region48: #{run.2} parent=35 // pred_fallthru
          _
        // Predicated region
        $region49: #{run.2} parent=35 // pred_check
          %p352 = pneg %p222
        $region50: #{run.2} parent=35 // pred_check_branch
          %354 = sbr.rel (%p352) target = $region52
        $region51: #{run.2} parent=35 // pred_region
          %p355 = scmp.lt.s32.totalorder %s19, 1
          %s356 = scalar_select %p355, %s19, 1
          %s357 = smul.addr %s356, 16
          %s358 = smul.addr %s357, 4
          %s359 = scalar_lea.vmem %s8, %s358
        $region52: #{run.2} parent=35 // pred_fallthru
          _
        // Predicated region
        $region53: #{run.2} parent=35 // pred_check
          %p360 = pneg %p248
        $region54: #{run.2} parent=35 // pred_check_branch
          %362 = sbr.rel (%p360) target = $region56
        $region55: #{run.2} parent=35 // pred_region
          %p363 = scmp.lt.s32.totalorder %s19, 1
          %s364 = scalar_select %p363, %s19, 1
          %s365 = scalar_lea.vmem %s9, %s364
        $region56: #{run.2} parent=35 // pred_fallthru
          _
      $region36: #{run.2} parent=5 // pred_fallthru
        _
      %p366 = scmp.le.s32.totalorder 1, %s19
      %p367 = scmp.lt.s32.totalorder %s19, 3
      %p368 = pnand %p366, %p367
      %p369 = pneg %p368
      // Predicated region
      $region57: #{run.2} parent=5 // pred_check
        _
      $region58: #{run.2} parent=5 // pred_check_branch
        %371 = sbr.rel (%p368) target = $region60
      $region59: #{run.2} parent=5 // pred_region
        %s372 = ssub.s32 %s19, 1
        %p373 = pneg %p40
        %p374 = pneg %p37
        %p375 = pneg %p61
        %p376 = pneg %p58
        %p377 = pneg %p82
        %p378 = pneg %p79
        %p379 = pneg %p103
        %p380 = pneg %p100
        %p381 = pneg %p124
        %p382 = pneg %p121
        %p383 = scmp.lt.s32.totalorder %s24, 1
        %s384 = scalar_select %p383, %s24, 1
        %s385 = smul.addr %s384, 32
        %s386 = smul.addr %s385, 4
        %s387 = scalar_lea.vmem %s5, %s386
        %p388 = pneg %p150
        %p389 = pneg %p147
        %p390 = scmp.lt.s32.totalorder %s24, 1
        %s391 = scalar_select %p390, %s24, 1
        %s392 = scalar_lea.vmem %s6, %s391
        %p393 = pneg %p176
        %p394 = pneg %p173
        %p395 = scmp.lt.s32.totalorder %s24, 1
        %s396 = scalar_select %p395, %s24, 1
        %s397 = smul.addr %s396, 32
        %s398 = smul.addr %s397, 4
        %s399 = scalar_lea.vmem %s7, %s398
        %p400 = pneg %p202
        %p401 = pneg %p199
        %p402 = scmp.lt.s32.totalorder %s24, 1
        %s403 = scalar_select %p402, %s24, 1
        %s404 = smul.addr %s403, 16
        %s405 = smul.addr %s404, 4
        %s406 = scalar_lea.vmem %s8, %s405
        %p407 = pneg %p228
        %p408 = pneg %p225
        %p409 = scmp.lt.s32.totalorder %s24, 1
        %s410 = scalar_select %p409, %s24, 1
        %s411 = scalar_lea.vmem %s9, %s410
        %p412 = pneg %p254
        %p413 = pneg %p251
        %p414 = pneg %p275
        %p415 = pneg %p272
        %p416 = pneg %p296
        %p417 = pneg %p293
        %p418 = scmp.lt.s32.totalorder %s24, 1
        %s419 = scalar_select %p418, %s24, 1
        %s420 = smul.addr %s419, 32
        %s421 = smul.addr %s420, 4
        %s422 = scalar_lea.vmem %s5, %s421
        %p423 = scmp.lt.s32.totalorder %s24, 1
        %s424 = scalar_select %p423, %s24, 1
        %s425 = scalar_lea.vmem %s6, %s424
        %p426 = scmp.lt.s32.totalorder %s24, 1
        %s427 = scalar_select %p426, %s24, 1
        %s428 = smul.addr %s427, 32
        %s429 = smul.addr %s428, 4
        %s430 = scalar_lea.vmem %s7, %s429
        %p431 = scmp.lt.s32.totalorder %s24, 1
        %s432 = scalar_select %p431, %s24, 1
        %s433 = smul.addr %s432, 16
        %s434 = smul.addr %s433, 4
        %s435 = scalar_lea.vmem %s8, %s434
        %p436 = scmp.lt.s32.totalorder %s24, 1
        %s437 = scalar_select %p436, %s24, 1
        %s438 = scalar_lea.vmem %s9, %s437
        %p440 = scmp.eq.s32.totalorder %s24, 0
        // Predicated region
        $region61: #{run.2} parent=59 // pred_check
          %p441 = pneg %p440
        $region62: #{run.2} parent=59 // pred_check_branch
          %443 = sbr.rel (%p441) target = $region64
        $region63: #{run.2} parent=59 // pred_region
          %v444 = vld [vmem:[%s0] sm:$0xff]
          %v445 = vld [vmem:[%s0 + $0x8] sm:$0xff]
          %v446 = vld [vmem:[%s0 + $0x10] sm:$0xff]
          %v447 = vld [vmem:[%s0 + $0x18] sm:$0xff]
          %v448 = vld [vmem:[%s0 + $0x20] sm:$0xff]
          %v449 = vld [vmem:[%s0 + $0x28] sm:$0xff]
          %v450 = vld [vmem:[%s0 + $0x30] sm:$0xff]
          %v451 = vld [vmem:[%s0 + $0x38] sm:$0xff]
          %452 = vst [vmem:[%s10] sm:$0xff] %v444
          %453 = vst [vmem:[%s10 + $0x8] sm:$0xff] %v445
          %454 = vst [vmem:[%s10 + $0x10] sm:$0xff] %v446
          %455 = vst [vmem:[%s10 + $0x18] sm:$0xff] %v447
          %456 = vst [vmem:[%s10 + $0x20] sm:$0xff] %v448
          %457 = vst [vmem:[%s10 + $0x28] sm:$0xff] %v449
          %458 = vst [vmem:[%s10 + $0x30] sm:$0xff] %v450
          %459 = vst [vmem:[%s10 + $0x38] sm:$0xff] %v451
          %v460 = vld [vmem:[%s1] sm:$0xff]
          %v461 = vld [vmem:[%s1 + $0x8] sm:$0xff]
          %v462 = vld [vmem:[%s1 + $0x10] sm:$0xff]
          %v463 = vld [vmem:[%s1 + $0x18] sm:$0xff]
          %464 = vst [vmem:[#allocation2] sm:$0xff] %v460
          %465 = vst [vmem:[#allocation2 + $0x8] sm:$0xff] %v461
          %466 = vst [vmem:[#allocation2 + $0x10] sm:$0xff] %v462
          %467 = vst [vmem:[#allocation2 + $0x18] sm:$0xff] %v463
        $region64: #{run.2} parent=59 // pred_fallthru
          _
        %v468 = vld [vmem:[%s10] sm:$0xff]
        %v469 = vld [vmem:[%s10 + $0x8] sm:$0xff]
        %v470 = vld [vmem:[%s10 + $0x10] sm:$0xff]
        %v471 = vld [vmem:[%s10 + $0x18] sm:$0xff]
        %v472 = vld [vmem:[%s10 + $0x20] sm:$0xff]
        %v473 = vld [vmem:[%s10 + $0x28] sm:$0xff]
        %v474 = vld [vmem:[%s10 + $0x30] sm:$0xff]
        %v475 = vld [vmem:[%s10 + $0x38] sm:$0xff]
        %v476 = vld [vmem:[#allocation2] sm:$0xff]
        %v477 = vld [vmem:[#allocation2 + $0x8] sm:$0xff]
        %v478 = vld [vmem:[#allocation2 + $0x10] sm:$0xff]
        %v479 = vld [vmem:[#allocation2 + $0x18] sm:$0xff]
        %v480 = vpack.c.bf16 %v469, %v468
        %v481 = vpack.c.bf16 %v471, %v470
        %v482 = vpack.c.bf16 %v473, %v472
        %v483 = vpack.c.bf16 %v475, %v474
        %v484 = vpack.c.bf16 %v477, %v476
        %v485 = vpack.c.bf16 %v479, %v478
        %v486 = vld [vmem:[%s3] sm:$0xf]
        %v487 = vld [vmem:[%s3 + $0x4] sm:$0xf]
        %v488 = vld [vmem:[%s3 + $0x8] sm:$0xf]
        %v489 = vld [vmem:[%s3 + $0xc] sm:$0xf]
        %v494 = vunpack.c.l.b16 %v486
        %v495 = vunpack.c.l.b16 %v487
        %v496 = vunpack.c.l.b16 %v488
        %v497 = vunpack.c.l.b16 %v489
        %v498 = vpack.c.b16 %v495, %v494
        %v499 = vpack.c.b16 %v497, %v496
        %vm500 = vcmask 523264
        %v502 = vsel %vm500, %v498, 0
        %v505 = vsel %vm500, %v499, 0
        %507 = vmatprep.subr.bf16.mxu0 0
        %508 = vmatpush1.bf16.msra.mxu0 %v480
        %509 = vmatprep.subr.bf16.mxu0 0
        %510 = vmatpush1.bf16.msra.mxu0 %v481
        %511 = vmatprep.subr.bf16.mxu0 0
        %512 = vmatpush1.bf16.msra.mxu0 %v482
        %513 = vmatprep.subr.bf16.mxu0 0
        %514 = vmatpush1.bf16.msra.mxu0 %v483
        %515 = vmatprep.subr.bf16.mxu0 0
        %516 = vmatpush1.bf16.msra.mxu0 0
        %517 = vmatprep.subr.bf16.mxu0 0
        %518 = vmatpush1.bf16.msra.mxu0 0
        %519 = vmatprep.subr.bf16.mxu0 0
        %520 = vmatpush1.bf16.msra.mxu0 0
        %521 = vmatprep.subr.bf16.mxu0 0
        %522 = vmatpush1.bf16.msra.mxu0 0
        %523 = vmatprep.subr.bf16.mxu0 0
        %524 = vmatpush1.bf16.msra.mxu0 0
        %525 = vmatprep.subr.bf16.mxu0 0
        %526 = vmatpush1.bf16.msra.mxu0 0
        %527 = vmatprep.subr.bf16.mxu0 0
        %528 = vmatpush1.bf16.msra.mxu0 0
        %529 = vmatprep.subr.bf16.mxu0 0
        %530 = vmatpush1.bf16.msra.mxu0 0
        %531 = vmatprep.subr.bf16.mxu0 0
        %532 = vmatpush1.bf16.msra.mxu0 0
        %533 = vmatprep.subr.bf16.mxu0 0
        %534 = vmatpush1.bf16.msra.mxu0 0
        %535 = vmatprep.subr.bf16.mxu0 0
        %536 = vmatpush1.bf16.msra.mxu0 0
        %537 = vmatprep.subr.bf16.mxu0 0
        %538 = vmatpush1.bf16.msra.mxu0 0
        %539 = vmatprep.mubr.bf16.mxu0 0
        %540 = vmatmul.mubr.bf16.gmra.mrb[0].mxu0 %v502
        %v541 = vpop.f32.mrb[0].mxu0
        %v542 = vadd.f32 0.0, %v541
        %v543 = vpop.f32.mrb[0].mxu0
        %v544 = vpop.f32.mrb[0].mxu0
        %v545 = vadd.f32 0.0, %v544
        %v546 = vpop.f32.mrb[0].mxu0
        %547 = vmatprep.mubr.bf16.mxu0 0
        %548 = vmatmul.mubr.bf16.gmra.mrb[0].mxu0 %v505
        %v549 = vpop.f32.mrb[0].mxu0
        %v550 = vadd.f32 0.0, %v549
        %v551 = vpop.f32.mrb[0].mxu0
        %v552 = vpop.f32.mrb[0].mxu0
        %v553 = vadd.f32 0.0, %v552
        %v554 = vpop.f32.mrb[0].mxu0
        %555 = vdwg.mxu0
        %v556 = vpack.c.bf16 %v545, %v542
        %v557 = vpack.c.bf16 %v553, %v550
        %v558 = vld [vmem:[%s422] sm:$0xf]
        %v559 = vld [vmem:[%s422 + $0x4] sm:$0xf]
        %v560 = vld [vmem:[%s422 + $0x8] sm:$0xf]
        %v561 = vld [vmem:[%s422 + $0xc] sm:$0xf]
        %v562 = vld [vmem:[%s422 + $0x10] sm:$0xf]
        %v563 = vld [vmem:[%s422 + $0x14] sm:$0xf]
        %v564 = vld [vmem:[%s422 + $0x18] sm:$0xf]
        %v565 = vld [vmem:[%s422 + $0x1c] sm:$0xf]
        %v566 = vld [vmem:[%s422 + $0x20] sm:$0xf]
        %v567 = vld [vmem:[%s422 + $0x24] sm:$0xf]
        %v568 = vld [vmem:[%s422 + $0x28] sm:$0xf]
        %v569 = vld [vmem:[%s422 + $0x2c] sm:$0xf]
        %v570 = vld [vmem:[%s422 + $0x30] sm:$0xf]
        %v571 = vld [vmem:[%s422 + $0x34] sm:$0xf]
        %v572 = vld [vmem:[%s422 + $0x38] sm:$0xf]
        %v573 = vld [vmem:[%s422 + $0x3c] sm:$0xf]
        %v574 = vld [vmem:[%s422 + $0x40] sm:$0xf]
        %v575 = vld [vmem:[%s422 + $0x44] sm:$0xf]
        %v576 = vld [vmem:[%s422 + $0x48] sm:$0xf]
        %v577 = vld [vmem:[%s422 + $0x4c] sm:$0xf]
        %v578 = vld [vmem:[%s422 + $0x50] sm:$0xf]
        %v579 = vld [vmem:[%s422 + $0x54] sm:$0xf]
        %v580 = vld [vmem:[%s422 + $0x58] sm:$0xf]
        %v581 = vld [vmem:[%s422 + $0x5c] sm:$0xf]
        %v582 = vld [vmem:[%s422 + $0x60] sm:$0xf]
        %v583 = vld [vmem:[%s422 + $0x64] sm:$0xf]
        %v584 = vld [vmem:[%s422 + $0x68] sm:$0xf]
        %v585 = vld [vmem:[%s422 + $0x6c] sm:$0xf]
        %v586 = vld [vmem:[%s422 + $0x70] sm:$0xf]
        %v587 = vld [vmem:[%s422 + $0x74] sm:$0xf]
        %v588 = vld [vmem:[%s422 + $0x78] sm:$0xf]
        %v589 = vld [vmem:[%s422 + $0x7c] sm:$0xf]
        %v590 = vld [vmem:[%s425] sm:$0x1]
        %v592 = vlaneseq
        %v593 = vshrl.u32 %v592, 7
        %v594 = vsub.s32 0, %v593
        %v595 = vrot.slane %v590, %v594
        %v629 = vunpack.c.l.b16 %v558
        %v630 = vunpack.c.l.b16 %v559
        %v631 = vunpack.c.l.b16 %v560
        %v632 = vunpack.c.l.b16 %v561
        %v633 = vunpack.c.l.b16 %v562
        %v634 = vunpack.c.l.b16 %v563
        %v635 = vunpack.c.l.b16 %v564
        %v636 = vunpack.c.l.b16 %v565
        %v637 = vunpack.c.l.b16 %v566
        %v638 = vunpack.c.l.b16 %v567
        %v639 = vunpack.c.l.b16 %v568
        %v640 = vunpack.c.l.b16 %v569
        %v641 = vunpack.c.l.b16 %v570
        %v642 = vunpack.c.l.b16 %v571
        %v643 = vunpack.c.l.b16 %v572
        %v644 = vunpack.c.l.b16 %v573
        %v645 = vunpack.c.l.b16 %v574
        %v646 = vunpack.c.l.b16 %v575
        %v647 = vunpack.c.l.b16 %v576
        %v648 = vunpack.c.l.b16 %v577
        %v649 = vunpack.c.l.b16 %v578
        %v650 = vunpack.c.l.b16 %v579
        %v651 = vunpack.c.l.b16 %v580
        %v652 = vunpack.c.l.b16 %v581
        %v653 = vunpack.c.l.b16 %v582
        %v654 = vunpack.c.l.b16 %v583
        %v655 = vunpack.c.l.b16 %v584
        %v656 = vunpack.c.l.b16 %v585
        %v657 = vunpack.c.l.b16 %v586
        %v658 = vunpack.c.l.b16 %v587
        %v659 = vunpack.c.l.b16 %v588
        %v660 = vunpack.c.l.b16 %v589
        %v661 = vpack.c.b16 %v630, %v629
        %v662 = vpack.c.b16 %v632, %v631
        %v663 = vpack.c.b16 %v634, %v633
        %v664 = vpack.c.b16 %v636, %v635
        %v665 = vpack.c.b16 %v638, %v637
        %v666 = vpack.c.b16 %v640, %v639
        %v667 = vpack.c.b16 %v642, %v641
        %v668 = vpack.c.b16 %v644, %v643
        %v669 = vpack.c.b16 %v646, %v645
        %v670 = vpack.c.b16 %v648, %v647
        %v671 = vpack.c.b16 %v650, %v649
        %v672 = vpack.c.b16 %v652, %v651
        %v673 = vpack.c.b16 %v654, %v653
        %v674 = vpack.c.b16 %v656, %v655
        %v675 = vpack.c.b16 %v658, %v657
        %v676 = vpack.c.b16 %v660, %v659
        %693 = vmatprep.subr.bf16.mxu0 0
        %694 = vmatpush1.bf16.msra.mxu0 %v661
        %695 = vmatprep.subr.bf16.mxu0 0
        %696 = vmatpush1.bf16.msra.mxu0 %v662
        %697 = vmatprep.subr.bf16.mxu0 0
        %698 = vmatpush1.bf16.msra.mxu0 %v663
        %699 = vmatprep.subr.bf16.mxu0 0
        %700 = vmatpush1.bf16.msra.mxu0 %v664
        %701 = vmatprep.subr.bf16.mxu0 0
        %702 = vmatpush1.bf16.msra.mxu0 %v665
        %703 = vmatprep.subr.bf16.mxu0 0
        %704 = vmatpush1.bf16.msra.mxu0 %v666
        %705 = vmatprep.subr.bf16.mxu0 0
        %706 = vmatpush1.bf16.msra.mxu0 %v667
        %707 = vmatprep.subr.bf16.mxu0 0
        %708 = vmatpush1.bf16.msra.mxu0 %v668
        %709 = vmatprep.subr.bf16.mxu0 0
        %710 = vmatpush1.bf16.msra.mxu0 %v669
        %711 = vmatprep.subr.bf16.mxu0 0
        %712 = vmatpush1.bf16.msra.mxu0 %v670
        %713 = vmatprep.subr.bf16.mxu0 0
        %714 = vmatpush1.bf16.msra.mxu0 %v671
        %715 = vmatprep.subr.bf16.mxu0 0
        %716 = vmatpush1.bf16.msra.mxu0 %v672
        %717 = vmatprep.subr.bf16.mxu0 0
        %718 = vmatpush1.bf16.msra.mxu0 %v673
        %719 = vmatprep.subr.bf16.mxu0 0
        %720 = vmatpush1.bf16.msra.mxu0 %v674
        %721 = vmatprep.subr.bf16.mxu0 0
        %722 = vmatpush1.bf16.msra.mxu0 %v675
        %723 = vmatprep.subr.bf16.mxu0 0
        %724 = vmatpush1.bf16.msra.mxu0 %v676
        %725 = vmatprep.mubr.bf16.mxu0 %v484
        %726 = vmatmul.mubr.bf16.gmra.mrb[0].mxu0 %v556
        %v727 = vpop.f32.mrb[0].mxu0
        %v728 = vadd.f32 %v595, %v727
        %v729 = vpop.f32.mrb[0].mxu0
        %v730 = vpop.f32.mrb[0].mxu0
        %v731 = vadd.f32 %v595, %v730
        %v732 = vpop.f32.mrb[0].mxu0
        %733 = vmatprep.mubr.bf16.mxu0 %v485
        %734 = vmatmul.mubr.bf16.gmra.mrb[0].mxu0 %v557
        %v735 = vpop.f32.mrb[0].mxu0
        %v736 = vadd.f32 %v595, %v735
        %v737 = vpop.f32.mrb[0].mxu0
        %v738 = vpop.f32.mrb[0].mxu0
        %v739 = vadd.f32 %v595, %v738
        %v740 = vpop.f32.mrb[0].mxu0
        %741 = vdwg.mxu0
        %v742 = vmax.f32 %v728, 0.0
        %v743 = vmax.f32 %v731, 0.0
        %v744 = vmax.f32 %v736, 0.0
        %v745 = vmax.f32 %v739, 0.0
        %v746 = vld [vmem:[%s2] sm:$0xf]
        %v747 = vld [vmem:[%s2 + $0x4] sm:$0xf]
        %v748 = vld [vmem:[%s2 + $0x8] sm:$0xf]
        %v749 = vld [vmem:[%s2 + $0xc] sm:$0xf]
        %v750 = vld [vmem:[%s2 + $0x10] sm:$0xf]
        %v751 = vld [vmem:[%s2 + $0x14] sm:$0xf]
        %v752 = vld [vmem:[%s2 + $0x18] sm:$0xf]
        %v753 = vld [vmem:[%s2 + $0x1c] sm:$0xf]
        %v754 = vpack.c.bf16 %v743, %v742
        %v755 = vpack.c.bf16 %v745, %v744
        %v764 = vunpack.c.l.b16 %v746
        %v765 = vunpack.c.l.b16 %v747
        %v766 = vunpack.c.l.b16 %v748
        %v767 = vunpack.c.l.b16 %v749
        %v768 = vunpack.c.l.b16 %v750
        %v769 = vunpack.c.l.b16 %v751
        %v770 = vunpack.c.l.b16 %v752
        %v771 = vunpack.c.l.b16 %v753
        %v772 = vpack.c.b16 %v765, %v764
        %v773 = vpack.c.b16 %v767, %v766
        %v774 = vpack.c.b16 %v769, %v768
        %v775 = vpack.c.b16 %v771, %v770
        %vm776 = vcmask 261120
        %v778 = vsel %vm776, %v772, 0
        %v781 = vsel %vm776, %v773, 0
        %v784 = vsel %vm776, %v774, 0
        %v787 = vsel %vm776, %v775, 0
        %789 = vmatprep.subr.bf16.mxu0 0
        %790 = vmatpush1.bf16.msra.mxu0 %v754
        %791 = vmatprep.subr.bf16.mxu0 0
        %792 = vmatpush1.bf16.msra.mxu0 %v755
        %793 = vmatprep.subr.bf16.mxu0 0
        %794 = vmatpush1.bf16.msra.mxu0 0
        %795 = vmatprep.subr.bf16.mxu0 0
        %796 = vmatpush1.bf16.msra.mxu0 0
        %797 = vmatprep.subr.bf16.mxu0 0
        %798 = vmatpush1.bf16.msra.mxu0 0
        %799 = vmatprep.subr.bf16.mxu0 0
        %800 = vmatpush1.bf16.msra.mxu0 0
        %801 = vmatprep.subr.bf16.mxu0 0
        %802 = vmatpush1.bf16.msra.mxu0 0
        %803 = vmatprep.subr.bf16.mxu0 0
        %804 = vmatpush1.bf16.msra.mxu0 0
        %805 = vmatprep.subr.bf16.mxu0 0
        %806 = vmatpush1.bf16.msra.mxu0 0
        %807 = vmatprep.subr.bf16.mxu0 0
        %808 = vmatpush1.bf16.msra.mxu0 0
        %809 = vmatprep.subr.bf16.mxu0 0
        %810 = vmatpush1.bf16.msra.mxu0 0
        %811 = vmatprep.subr.bf16.mxu0 0
        %812 = vmatpush1.bf16.msra.mxu0 0
        %813 = vmatprep.subr.bf16.mxu0 0
        %814 = vmatpush1.bf16.msra.mxu0 0
        %815 = vmatprep.subr.bf16.mxu0 0
        %816 = vmatpush1.bf16.msra.mxu0 0
        %817 = vmatprep.subr.bf16.mxu0 0
        %818 = vmatpush1.bf16.msra.mxu0 0
        %819 = vmatprep.subr.bf16.mxu0 0
        %820 = vmatpush1.bf16.msra.mxu0 0
        %821 = vmatprep.mubr.bf16.mxu0 0
        %822 = vmatmul.mubr.bf16.gmra.mrb[0].mxu0 %v778
        %v823 = vpop.f32.mrb[0].mxu0
        %v824 = vadd.f32 0.0, %v823
        %v825 = vpop.f32.mrb[0].mxu0
        %v826 = vpop.f32.mrb[0].mxu0
        %v827 = vadd.f32 0.0, %v826
        %v828 = vpop.f32.mrb[0].mxu0
        %829 = vmatprep.mubr.bf16.mxu0 0
        %830 = vmatmul.mubr.bf16.gmra.mrb[0].mxu0 %v781
        %v831 = vpop.f32.mrb[0].mxu0
        %v832 = vadd.f32 0.0, %v831
        %v833 = vpop.f32.mrb[0].mxu0
        %v834 = vpop.f32.mrb[0].mxu0
        %v835 = vadd.f32 0.0, %v834
        %v836 = vpop.f32.mrb[0].mxu0
        %837 = vmatprep.mubr.bf16.mxu0 0
        %838 = vmatmul.mubr.bf16.gmra.mrb[0].mxu0 %v784
        %v839 = vpop.f32.mrb[0].mxu0
        %v840 = vadd.f32 0.0, %v839
        %v841 = vpop.f32.mrb[0].mxu0
        %v842 = vpop.f32.mrb[0].mxu0
        %v843 = vadd.f32 0.0, %v842
        %v844 = vpop.f32.mrb[0].mxu0
        %845 = vmatprep.mubr.bf16.mxu0 0
        %846 = vmatmul.mubr.bf16.gmra.mrb[0].mxu0 %v787
        %v847 = vpop.f32.mrb[0].mxu0
        %v848 = vadd.f32 0.0, %v847
        %v849 = vpop.f32.mrb[0].mxu0
        %v850 = vpop.f32.mrb[0].mxu0
        %v851 = vadd.f32 0.0, %v850
        %v852 = vpop.f32.mrb[0].mxu0
        %853 = vdwg.mxu0
        %v854 = vld [vmem:[%s4] sm:$0x1]
        %v856 = vsel %vm500, %v854, 0
        %858 = vmatprep.subr.bf16.mxu0 0
        %859 = vmatpush1.bf16.msra.mxu0 %v480
        %860 = vmatprep.subr.bf16.mxu0 0
        %861 = vmatpush1.bf16.msra.mxu0 %v481
        %862 = vmatprep.subr.bf16.mxu0 0
        %863 = vmatpush1.bf16.msra.mxu0 %v482
        %864 = vmatprep.subr.bf16.mxu0 0
        %865 = vmatpush1.bf16.msra.mxu0 %v483
        %866 = vmatprep.subr.bf16.mxu0 0
        %867 = vmatpush1.bf16.msra.mxu0 0
        %868 = vmatprep.subr.bf16.mxu0 0
        %869 = vmatpush1.bf16.msra.mxu0 0
        %870 = vmatprep.subr.bf16.mxu0 0
        %871 = vmatpush1.bf16.msra.mxu0 0
        %872 = vmatprep.subr.bf16.mxu0 0
        %873 = vmatpush1.bf16.msra.mxu0 0
        %874 = vmatprep.subr.bf16.mxu0 0
        %875 = vmatpush1.bf16.msra.mxu0 0
        %876 = vmatprep.subr.bf16.mxu0 0
        %877 = vmatpush1.bf16.msra.mxu0 0
        %878 = vmatprep.subr.bf16.mxu0 0
        %879 = vmatpush1.bf16.msra.mxu0 0
        %880 = vmatprep.subr.bf16.mxu0 0
        %881 = vmatpush1.bf16.msra.mxu0 0
        %882 = vmatprep.subr.bf16.mxu0 0
        %883 = vmatpush1.bf16.msra.mxu0 0
        %884 = vmatprep.subr.bf16.mxu0 0
        %885 = vmatpush1.bf16.msra.mxu0 0
        %886 = vmatprep.subr.bf16.mxu0 0
        %887 = vmatpush1.bf16.msra.mxu0 0
        %888 = vmatprep.subr.bf16.mxu0 0
        %889 = vmatpush1.bf16.msra.mxu0 0
        %890 = vmatprep.mubr.bf16.mxu0 0
        %891 = vmatmul.mubr.bf16.gmra.mrb[0].mxu0 %v856
        %v892 = vpop.f32.mrb[0].mxu0
        %v893 = vadd.f32 0.0, %v892
        %v894 = vpop.f32.mrb[0].mxu0
        %v895 = vpop.f32.mrb[0].mxu0
        %v896 = vpop.f32.mrb[0].mxu0
        %897 = vdwg.mxu0
        %v898 = vpack.c.bf16 %v893, %v893
        %v899 = vld [vmem:[%s435] sm:$0xf]
        %v900 = vld [vmem:[%s435 + $0x4] sm:$0xf]
        %v901 = vld [vmem:[%s435 + $0x8] sm:$0xf]
        %v902 = vld [vmem:[%s435 + $0xc] sm:$0xf]
        %v903 = vld [vmem:[%s435 + $0x10] sm:$0xf]
        %v904 = vld [vmem:[%s435 + $0x14] sm:$0xf]
        %v905 = vld [vmem:[%s435 + $0x18] sm:$0xf]
        %v906 = vld [vmem:[%s435 + $0x1c] sm:$0xf]
        %v907 = vld [vmem:[%s435 + $0x20] sm:$0xf]
        %v908 = vld [vmem:[%s435 + $0x24] sm:$0xf]
        %v909 = vld [vmem:[%s435 + $0x28] sm:$0xf]
        %v910 = vld [vmem:[%s435 + $0x2c] sm:$0xf]
        %v911 = vld [vmem:[%s435 + $0x30] sm:$0xf]
        %v912 = vld [vmem:[%s435 + $0x34] sm:$0xf]
        %v913 = vld [vmem:[%s435 + $0x38] sm:$0xf]
        %v914 = vld [vmem:[%s435 + $0x3c] sm:$0xf]
        %v931 = vunpack.c.l.b16 %v899
        %v932 = vunpack.c.l.b16 %v900
        %v933 = vunpack.c.l.b16 %v901
        %v934 = vunpack.c.l.b16 %v902
        %v935 = vunpack.c.l.b16 %v903
        %v936 = vunpack.c.l.b16 %v904
        %v937 = vunpack.c.l.b16 %v905
        %v938 = vunpack.c.l.b16 %v906
        %v939 = vunpack.c.l.b16 %v907
        %v940 = vunpack.c.l.b16 %v908
        %v941 = vunpack.c.l.b16 %v909
        %v942 = vunpack.c.l.b16 %v910
        %v943 = vunpack.c.l.b16 %v911
        %v944 = vunpack.c.l.b16 %v912
        %v945 = vunpack.c.l.b16 %v913
        %v946 = vunpack.c.l.b16 %v914
        %v947 = vpack.c.b16 %v932, %v931
        %v948 = vpack.c.b16 %v934, %v933
        %v949 = vpack.c.b16 %v936, %v935
        %v950 = vpack.c.b16 %v938, %v937
        %v951 = vpack.c.b16 %v940, %v939
        %v952 = vpack.c.b16 %v942, %v941
        %v953 = vpack.c.b16 %v944, %v943
        %v954 = vpack.c.b16 %v946, %v945
        %963 = vmatprep.subr.bf16.mxu0 0
        %964 = vmatpush1.bf16.msra.mxu0 %v947
        %965 = vmatprep.subr.bf16.mxu0 0
        %966 = vmatpush1.bf16.msra.mxu0 %v948
        %967 = vmatprep.subr.bf16.mxu0 0
        %968 = vmatpush1.bf16.msra.mxu0 %v949
        %969 = vmatprep.subr.bf16.mxu0 0
        %970 = vmatpush1.bf16.msra.mxu0 %v950
        %971 = vmatprep.subr.bf16.mxu0 0
        %972 = vmatpush1.bf16.msra.mxu0 %v951
        %973 = vmatprep.subr.bf16.mxu0 0
        %974 = vmatpush1.bf16.msra.mxu0 %v952
        %975 = vmatprep.subr.bf16.mxu0 0
        %976 = vmatpush1.bf16.msra.mxu0 %v953
        %977 = vmatprep.subr.bf16.mxu0 0
        %978 = vmatpush1.bf16.msra.mxu0 %v954
        %979 = vmatprep.subr.bf16.mxu0 0
        %980 = vmatpush1.bf16.msra.mxu0 0
        %981 = vmatprep.subr.bf16.mxu0 0
        %982 = vmatpush1.bf16.msra.mxu0 0
        %983 = vmatprep.subr.bf16.mxu0 0
        %984 = vmatpush1.bf16.msra.mxu0 0
        %985 = vmatprep.subr.bf16.mxu0 0
        %986 = vmatpush1.bf16.msra.mxu0 0
        %987 = vmatprep.subr.bf16.mxu0 0
        %988 = vmatpush1.bf16.msra.mxu0 0
        %989 = vmatprep.subr.bf16.mxu0 0
        %990 = vmatpush1.bf16.msra.mxu0 0
        %991 = vmatprep.subr.bf16.mxu0 0
        %992 = vmatpush1.bf16.msra.mxu0 0
        %993 = vmatprep.subr.bf16.mxu0 0
        %994 = vmatpush1.bf16.msra.mxu0 0
        %995 = vmatprep.mubr.bf16.mxu0 0
        %996 = vmatmul.mubr.bf16.gmra.mrb[0].mxu0 %v898
        %v997 = vpop.f32.mrb[0].mxu0
        %v998 = vadd.f32 0.0, %v997
        %v999 = vpop.f32.mrb[0].mxu0
        %v1000 = vpop.f32.mrb[0].mxu0
        %v1001 = vpop.f32.mrb[0].mxu0
        %1002 = vdwg.mxu0
        %v1003 = vpack.c.bf16 %v827, %v824
        %v1004 = vpack.c.bf16 %v835, %v832
        %v1005 = vpack.c.bf16 %v843, %v840
        %v1006 = vpack.c.bf16 %v851, %v848
        %v1007 = vld [vmem:[%s430] sm:$0xf]
        %v1008 = vld [vmem:[%s430 + $0x4] sm:$0xf]
        %v1009 = vld [vmem:[%s430 + $0x8] sm:$0xf]
        %v1010 = vld [vmem:[%s430 + $0xc] sm:$0xf]
        %v1011 = vld [vmem:[%s430 + $0x10] sm:$0xf]
        %v1012 = vld [vmem:[%s430 + $0x14] sm:$0xf]
        %v1013 = vld [vmem:[%s430 + $0x18] sm:$0xf]
        %v1014 = vld [vmem:[%s430 + $0x1c] sm:$0xf]
        %v1015 = vld [vmem:[%s430 + $0x20] sm:$0xf]
        %v1016 = vld [vmem:[%s430 + $0x24] sm:$0xf]
        %v1017 = vld [vmem:[%s430 + $0x28] sm:$0xf]
        %v1018 = vld [vmem:[%s430 + $0x2c] sm:$0xf]
        %v1019 = vld [vmem:[%s430 + $0x30] sm:$0xf]
        %v1020 = vld [vmem:[%s430 + $0x34] sm:$0xf]
        %v1021 = vld [vmem:[%s430 + $0x38] sm:$0xf]
        %v1022 = vld [vmem:[%s430 + $0x3c] sm:$0xf]
        %v1023 = vld [vmem:[%s430 + $0x40] sm:$0xf]
        %v1024 = vld [vmem:[%s430 + $0x44] sm:$0xf]
        %v1025 = vld [vmem:[%s430 + $0x48] sm:$0xf]
        %v1026 = vld [vmem:[%s430 + $0x4c] sm:$0xf]
        %v1027 = vld [vmem:[%s430 + $0x50] sm:$0xf]
        %v1028 = vld [vmem:[%s430 + $0x54] sm:$0xf]
        %v1029 = vld [vmem:[%s430 + $0x58] sm:$0xf]
        %v1030 = vld [vmem:[%s430 + $0x5c] sm:$0xf]
        %v1031 = vld [vmem:[%s430 + $0x60] sm:$0xf]
        %v1032 = vld [vmem:[%s430 + $0x64] sm:$0xf]
        %v1033 = vld [vmem:[%s430 + $0x68] sm:$0xf]
        %v1034 = vld [vmem:[%s430 + $0x6c] sm:$0xf]
        %v1035 = vld [vmem:[%s430 + $0x70] sm:$0xf]
        %v1036 = vld [vmem:[%s430 + $0x74] sm:$0xf]
        %v1037 = vld [vmem:[%s430 + $0x78] sm:$0xf]
        %v1038 = vld [vmem:[%s430 + $0x7c] sm:$0xf]
        %v1039 = vlaneseq
        %v1040 = vshrl.u32 %v1039, 7
        %v1041 = vsub.s32 0, %v1040
        %v1042 = vrot.slane %v998, %v1041
        %v1075 = vunpack.c.l.b16 %v1007
        %v1076 = vunpack.c.l.b16 %v1008
        %v1077 = vunpack.c.l.b16 %v1009
        %v1078 = vunpack.c.l.b16 %v1010
        %v1079 = vunpack.c.l.b16 %v1011
        %v1080 = vunpack.c.l.b16 %v1012
        %v1081 = vunpack.c.l.b16 %v1013
        %v1082 = vunpack.c.l.b16 %v1014
        %v1083 = vunpack.c.l.b16 %v1015
        %v1084 = vunpack.c.l.b16 %v1016
        %v1085 = vunpack.c.l.b16 %v1017
        %v1086 = vunpack.c.l.b16 %v1018
        %v1087 = vunpack.c.l.b16 %v1019
        %v1088 = vunpack.c.l.b16 %v1020
        %v1089 = vunpack.c.l.b16 %v1021
        %v1090 = vunpack.c.l.b16 %v1022
        %v1091 = vunpack.c.l.b16 %v1023
        %v1092 = vunpack.c.l.b16 %v1024
        %v1093 = vunpack.c.l.b16 %v1025
        %v1094 = vunpack.c.l.b16 %v1026
        %v1095 = vunpack.c.l.b16 %v1027
        %v1096 = vunpack.c.l.b16 %v1028
        %v1097 = vunpack.c.l.b16 %v1029
        %v1098 = vunpack.c.l.b16 %v1030
        %v1099 = vunpack.c.l.b16 %v1031
        %v1100 = vunpack.c.l.b16 %v1032
        %v1101 = vunpack.c.l.b16 %v1033
        %v1102 = vunpack.c.l.b16 %v1034
        %v1103 = vunpack.c.l.b16 %v1035
        %v1104 = vunpack.c.l.b16 %v1036
        %v1105 = vunpack.c.l.b16 %v1037
        %v1106 = vunpack.c.l.b16 %v1038
        %v1107 = vpack.c.b16 %v1076, %v1075
        %v1108 = vpack.c.b16 %v1078, %v1077
        %v1109 = vpack.c.b16 %v1080, %v1079
        %v1110 = vpack.c.b16 %v1082, %v1081
        %v1111 = vpack.c.b16 %v1084, %v1083
        %v1112 = vpack.c.b16 %v1086, %v1085
        %v1113 = vpack.c.b16 %v1088, %v1087
        %v1114 = vpack.c.b16 %v1090, %v1089
        %v1115 = vpack.c.b16 %v1092, %v1091
        %v1116 = vpack.c.b16 %v1094, %v1093
        %v1117 = vpack.c.b16 %v1096, %v1095
        %v1118 = vpack.c.b16 %v1098, %v1097
        %v1119 = vpack.c.b16 %v1100, %v1099
        %v1120 = vpack.c.b16 %v1102, %v1101
        %v1121 = vpack.c.b16 %v1104, %v1103
        %v1122 = vpack.c.b16 %v1106, %v1105
        %1139 = vmatprep.subr.bf16.mxu0 0
        %1140 = vmatpush1.bf16.msra.mxu0 %v1107
        %1141 = vmatprep.subr.bf16.mxu0 0
        %1142 = vmatpush1.bf16.msra.mxu0 %v1108
        %1143 = vmatprep.subr.bf16.mxu0 0
        %1144 = vmatpush1.bf16.msra.mxu0 %v1109
        %1145 = vmatprep.subr.bf16.mxu0 0
        %1146 = vmatpush1.bf16.msra.mxu0 %v1110
        %1147 = vmatprep.subr.bf16.mxu0 0
        %1148 = vmatpush1.bf16.msra.mxu0 %v1111
        %1149 = vmatprep.subr.bf16.mxu0 0
        %1150 = vmatpush1.bf16.msra.mxu0 %v1112
        %1151 = vmatprep.subr.bf16.mxu0 0
        %1152 = vmatpush1.bf16.msra.mxu0 %v1113
        %1153 = vmatprep.subr.bf16.mxu0 0
        %1154 = vmatpush1.bf16.msra.mxu0 %v1114
        %1155 = vmatprep.subr.bf16.mxu0 0
        %1156 = vmatpush1.bf16.msra.mxu0 %v1115
        %1157 = vmatprep.subr.bf16.mxu0 0
        %1158 = vmatpush1.bf16.msra.mxu0 %v1116
        %1159 = vmatprep.subr.bf16.mxu0 0
        %1160 = vmatpush1.bf16.msra.mxu0 %v1117
        %1161 = vmatprep.subr.bf16.mxu0 0
        %1162 = vmatpush1.bf16.msra.mxu0 %v1118
        %1163 = vmatprep.subr.bf16.mxu0 0
        %1164 = vmatpush1.bf16.msra.mxu0 %v1119
        %1165 = vmatprep.subr.bf16.mxu0 0
        %1166 = vmatpush1.bf16.msra.mxu0 %v1120
        %1167 = vmatprep.subr.bf16.mxu0 0
        %1168 = vmatpush1.bf16.msra.mxu0 %v1121
        %1169 = vmatprep.subr.bf16.mxu0 0
        %1170 = vmatpush1.bf16.msra.mxu0 %v1122
        %1171 = vmatprep.mubr.bf16.mxu0 %v480
        %1172 = vmatmul.mubr.bf16.gmra.mrb[0].mxu0 %v1003
        %v1173 = vpop.f32.mrb[0].mxu0
        %v1174 = vadd.f32 %v1042, %v1173
        %v1175 = vpop.f32.mrb[0].mxu0
        %v1176 = vpop.f32.mrb[0].mxu0
        %v1177 = vadd.f32 %v1042, %v1176
        %v1178 = vpop.f32.mrb[0].mxu0
        %1179 = vmatprep.mubr.bf16.mxu0 %v481
        %1180 = vmatmul.mubr.bf16.gmra.mrb[0].mxu0 %v1004
        %v1181 = vpop.f32.mrb[0].mxu0
        %v1182 = vadd.f32 %v1042, %v1181
        %v1183 = vpop.f32.mrb[0].mxu0
        %v1184 = vpop.f32.mrb[0].mxu0
        %v1185 = vadd.f32 %v1042, %v1184
        %v1186 = vpop.f32.mrb[0].mxu0
        %1187 = vmatprep.mubr.bf16.mxu0 %v482
        %1188 = vmatmul.mubr.bf16.gmra.mrb[0].mxu0 %v1005
        %v1189 = vpop.f32.mrb[0].mxu0
        %v1190 = vadd.f32 %v1042, %v1189
        %v1191 = vpop.f32.mrb[0].mxu0
        %v1192 = vpop.f32.mrb[0].mxu0
        %v1193 = vadd.f32 %v1042, %v1192
        %v1194 = vpop.f32.mrb[0].mxu0
        %1195 = vmatprep.mubr.bf16.mxu0 %v483
        %1196 = vmatmul.mubr.bf16.gmra.mrb[0].mxu0 %v1006
        %v1197 = vpop.f32.mrb[0].mxu0
        %v1198 = vadd.f32 %v1042, %v1197
        %v1199 = vpop.f32.mrb[0].mxu0
        %v1200 = vpop.f32.mrb[0].mxu0
        %v1201 = vadd.f32 %v1042, %v1200
        %v1202 = vpop.f32.mrb[0].mxu0
        %1203 = vdwg.mxu0
        %v1204 = vld [vmem:[%s438] sm:$0x1]
        %v1206 = vlaneseq
        %v1207 = vshrl.u32 %v1206, 7
        %v1208 = vsub.s32 0, %v1207
        %v1209 = vrot.slane %v1204, %v1208
        %v1211 = vadd.f32 %v1174, %v1209
        %v1212 = vadd.f32 %v1177, %v1209
        %v1213 = vadd.f32 %v1182, %v1209
        %v1214 = vadd.f32 %v1185, %v1209
        %v1215 = vadd.f32 %v1190, %v1209
        %v1216 = vadd.f32 %v1193, %v1209
        %v1217 = vadd.f32 %v1198, %v1209
        %v1218 = vadd.f32 %v1201, %v1209
        %v1219 = vmax.f32 %v1211, 0.0
        %v1220 = vmax.f32 %v1212, 0.0
        %v1221 = vmax.f32 %v1213, 0.0
        %v1222 = vmax.f32 %v1214, 0.0
        %v1223 = vmax.f32 %v1215, 0.0
        %v1224 = vmax.f32 %v1216, 0.0
        %v1225 = vmax.f32 %v1217, 0.0
        %v1226 = vmax.f32 %v1218, 0.0
        %1227 = vst [vmem:[%s10] sm:$0xff] %v1219
        %1228 = vst [vmem:[%s10 + $0x8] sm:$0xff] %v1220
        %1229 = vst [vmem:[%s10 + $0x10] sm:$0xff] %v1221
        %1230 = vst [vmem:[%s10 + $0x18] sm:$0xff] %v1222
        %1231 = vst [vmem:[%s10 + $0x20] sm:$0xff] %v1223
        %1232 = vst [vmem:[%s10 + $0x28] sm:$0xff] %v1224
        %1233 = vst [vmem:[%s10 + $0x30] sm:$0xff] %v1225
        %1234 = vst [vmem:[%s10 + $0x38] sm:$0xff] %v1226
        %1235 = vst [vmem:[#allocation2] sm:$0xff] %v742
        %1236 = vst [vmem:[#allocation2 + $0x8] sm:$0xff] %v743
        %1237 = vst [vmem:[#allocation2 + $0x10] sm:$0xff] %v744
        %1238 = vst [vmem:[#allocation2 + $0x18] sm:$0xff] %v745
        // Predicated region
        $region65: #{run.2} parent=59 // pred_check
          %p1239 = pneg %p272
        $region66: #{run.2} parent=59 // pred_check_branch
          %1241 = sbr.rel (%p1239) target = $region68
        $region67: #{run.2} parent=59 // pred_region
          _
        $region68: #{run.2} parent=59 // pred_fallthru
          _
        // Predicated region
        $region69: #{run.2} parent=59 // pred_check
          %p1242 = pneg %p293
        $region70: #{run.2} parent=59 // pred_check_branch
          %1244 = sbr.rel (%p1242) target = $region72
        $region71: #{run.2} parent=59 // pred_region
          %s1246 = ssub.s32 512, 512
          %1247 = vsyncadd [#allocation3], %s1246
          %s1248 = sshll.u32 [#allocation2], 4
          %s1249 = int_to_ptr.vmem [resolvable:$true] %s1248
          %1254 = dma.vmem_to_hbm [thread:$0]  %s1249, 512, %s11, [#allocation3], 128, 128, 8
        $region72: #{run.2} parent=59 // pred_fallthru
          _
        // Predicated region
        $region73: #{run.2} parent=59 // pred_check
          %p1255 = pneg %p272
        $region74: #{run.2} parent=59 // pred_check_branch
          %1257 = sbr.rel (%p1255) target = $region76
        $region75: #{run.2} parent=59 // pred_region
          _
        $region76: #{run.2} parent=59 // pred_fallthru
          _
        // Predicated region
        $region77: #{run.2} parent=59 // pred_check
          %p1258 = pneg %p293
        $region78: #{run.2} parent=59 // pred_check_branch
          %1260 = sbr.rel (%p1258) target = $region80
        $region79: #{run.2} parent=59 // pred_region
          %1261 = dma.done [#allocation3], 512
        $region80: #{run.2} parent=59 // pred_fallthru
          _
      $region60: #{run.2} parent=5 // pred_fallthru
        _
      %p1262 = scmp.le.s32.totalorder 2, %s19
      // Predicated region
      $region81: #{run.2} parent=5 // pred_check
        %p1263 = pneg %p1262
      $region82: #{run.2} parent=5 // pred_check_branch
        %1265 = sbr.rel (%p1263) target = $region84
      $region83: #{run.2} parent=5 // pred_region
        %s1266 = ssub.s32 %s19, 2
      $region84: #{run.2} parent=5 // pred_fallthru
        _
    $region6: #{run.2} parent=1 // loop_footer
      %s23 = sadd.s32 1, %s19
    $region7: #{run.2} parent=1 // loop_footer_branch
      %18 = sbr.rel target = $region3
    $region8: #{run.2} parent=1 // loop_exit
      _
    %1267 = vsyncpa [#allocation3], 1
    %s1268 = scalar_lea.sflag [#allocation3], 1
    %1269 = vsyncpa %s1268, 1

// kernel: run.3
$region0: #{run.3}
  #allocation0 [shape = 'u32[]', space=smem, size = 0x4, offset = 0x4, fixed_abs, tag = 'smem constant byte address 0x4 - core index']
  #allocation1 [shape = 'u32[144,128]{1,0:T(1,128)}', space=vmem, size = 0x12000, scoped, tag = 'internal scratch']
  #allocation2 [shape = 'f32[8,128]{1,0:T(8,128)}', space=vmem, size = 0x1000, scoped, tag = 'scratch operand']
  #allocation3 [shape = 'f32[8,64]{1,0:T(8,128)}', space=vmem, size = 0x1000, scoped, tag = 'scratch operand']
  #allocation4 [shape = 'f32[64,8]{1,0:T(8,128)}', space=vmem, size = 0x8000, scoped, tag = 'scratch operand']
  #allocation5 [shape = 'f32[64,1]{1,0:T(8,128)}', space=vmem, size = 0x8000, scoped, tag = 'scratch operand']
  #allocation6 [shape = 'bf16[64,128]{1,0:T(16,128)(2,1)}', space=vmem, size = 0x4000, scoped, tag = 'scratch operand']
  #allocation7 [shape = 'bf16[64,128]{1,0:T(16,128)(2,1)}', space=vmem, size = 0x4000, scoped, tag = 'scratch operand']
  #allocation8 [shape = 's32[1]{0}', space=sflag, size = 0x4, scoped, tag = 'scoped memory for run.3']
  #allocation9 [shape = 'u8[512]{0}', space=smem, size = 0x200, scoped, tag = 'prefetched SMEM operand 0']
  %s0 = inlined_call_operand.vmem [shape: s32[2], index: 0, kind: input, shape index: {}]
  %s1 = inlined_call_operand.vmem [shape: f32[64,128], index: 1, kind: input, shape index: {}]
  %s2 = inlined_call_operand.vmem [shape: bf16[64,64], index: 2, kind: input, shape index: {}]
  %s3 = inlined_call_operand.vmem [shape: f32[8,64], index: 3, kind: input, shape index: {}]
  %s4 = inlined_call_operand.vmem [shape: f32[64,8], index: 4, kind: input, shape index: {}]
  %s5 = inlined_call_operand.vmem [shape: f32[64,1], index: 5, kind: input, shape index: {}]
  %s6 = inlined_call_operand.vmem [shape: bf16[128,384], index: 6, kind: input, shape index: {}]
  %s7 = inlined_call_operand.vmem [shape: bf16[128,384], index: 7, kind: input, shape index: {}]
  %s8 = inlined_call_operand.vmem [shape: f32[1,384], index: 8, kind: input, shape index: {}]
  %s9 = inlined_call_operand.vmem [shape: f32[1,384], index: 9, kind: input, shape index: {}]
  %s10 = inlined_call_operand.vmem [shape: f32[2,8,128], index: 10, kind: output, shape index: {0}]
  %s11 = inlined_call_operand.vmem [shape: f32[2,64,8], index: 11, kind: output, shape index: {1}]
  %s12 = inlined_call_operand.vmem [shape: s32[2,8,128], index: 12, kind: output, shape index: {2}]
  %13 = xla_tuple %s10, %s11, %s12
  %s14 = sld [smem:[#allocation0]]
  $region89: #{run.3} parent=0
    _
  %s16 = ssub.s32 1, %s14
  %s17 = scalar_select 0, %s16, %s14
  %s18 = sshll.u32 %s0, 4
  %s19 = int_to_ptr.vmem [resolvable:$true] %s18
  %21 = dma.vmem_to_smem %s19, 16, [#allocation9], [#allocation8]
  %22 = dma.done [#allocation8], 16
  %23 = sfence
  loop: start=0, step=1, limit=4
  $region2: #{run.3} parent=0 // loop_pre_header
    _
  $region3: #{run.3} parent=0 // loop_header
    %s25 = sphi 0, %s29
    %p26 = scmp.ge.s32.totalorder %s25, 4
    %s33 = sphi 0, %s33
    %s35 = sphi 0, %s33
    %s36 = sphi 0, %s35
    %s50 = sphi 0, %s36
    %s54 = sphi 0, %s54
    %s56 = sphi 0, %s54
    %s57 = sphi 0, %s56
    %s71 = sphi 0, %s57
    %s75 = sphi 0, %s75
    %s77 = sphi 0, %s75
    %s78 = sphi 0, %s77
    %s92 = sphi 0, %s78
    %s96 = sphi 0, %s96
    %s98 = sphi 0, %s96
    %s99 = sphi 0, %s98
    %s113 = sphi 0, %s99
    %s117 = sphi 0, %s117
    %s119 = sphi 0, %s117
    %s120 = sphi 0, %s119
    %s134 = sphi 0, %s120
    %s138 = sphi 0, %s138
    %s140 = sphi 0, %s138
    %s141 = sphi 0, %s140
    %s155 = sphi 0, %s141
    %s159 = sphi 0, %s159
    %s161 = sphi 0, %s159
    %s162 = sphi 0, %s161
    %s176 = sphi 0, %s162
    %s180 = sphi 0, %s180
    %s182 = sphi 0, %s180
    %s183 = sphi 0, %s182
    %s197 = sphi 0, %s183
    %s201 = sphi 0, %s201
    %s203 = sphi 0, %s201
    %s204 = sphi 0, %s203
    %s218 = sphi 0, %s204
    %s224 = sphi 0, %s226
    %s227 = sphi 0, %s224
    %s228 = sphi 0, %s227
    %s244 = sphi 0, %s228
    %s250 = sphi 0, %s252
    %s253 = sphi 0, %s250
    %s254 = sphi 0, %s253
    %s270 = sphi 0, %s254
    %s276 = sphi 0, %s278
    %s279 = sphi 0, %s276
    %s280 = sphi 0, %s279
    %s296 = sphi 0, %s280
  $region4: #{run.3} parent=0 // loop_header_branch
    %28 = sbr.rel (%p26) target = $region8
  $region5: #{run.3} parent=0 // loop_body
    %s30 = ssub.s32 %s25, 1
    %s31 = ssub.s32 %s25, 2
    %s32 = sadd.s32 %s25, 1
    %s34 = sadd.s32 %s33, 1
    %p37 = scmp.eq.s32.totalorder %s25, 1
    %p38 = scmp.ne.s32.totalorder %s33, %s35
    %p39 = scmp.eq.s32.totalorder %s25, 0
    %p40 = por %p38, %p39
    %p41 = scmp.ne.s32.totalorder %s33, %s35
    %p42 = scmp.eq.s32.totalorder %s30, 1
    %p43 = por %p41, %p42
    %p44 = scmp.ne.s32.totalorder %s35, %s36
    %p45 = scmp.eq.s32.totalorder %s30, 0
    %p46 = por %p44, %p45
    %p47 = scmp.ne.s32.totalorder %s35, %s36
    %p48 = scmp.eq.s32.totalorder %s31, 1
    %p49 = por %p47, %p48
    %p51 = scmp.ne.s32.totalorder %s36, %s50
    %p52 = scmp.eq.s32.totalorder %s31, 0
    %p53 = por %p51, %p52
    %s55 = sadd.s32 %s54, 1
    %p58 = scmp.eq.s32.totalorder %s25, 1
    %p59 = scmp.ne.s32.totalorder %s54, %s56
    %p60 = scmp.eq.s32.totalorder %s25, 0
    %p61 = por %p59, %p60
    %p62 = scmp.ne.s32.totalorder %s54, %s56
    %p63 = scmp.eq.s32.totalorder %s30, 1
    %p64 = por %p62, %p63
    %p65 = scmp.ne.s32.totalorder %s56, %s57
    %p66 = scmp.eq.s32.totalorder %s30, 0
    %p67 = por %p65, %p66
    %p68 = scmp.ne.s32.totalorder %s56, %s57
    %p69 = scmp.eq.s32.totalorder %s31, 1
    %p70 = por %p68, %p69
    %p72 = scmp.ne.s32.totalorder %s57, %s71
    %p73 = scmp.eq.s32.totalorder %s31, 0
    %p74 = por %p72, %p73
    %s76 = sadd.s32 %s75, 1
    %p79 = scmp.eq.s32.totalorder %s25, 1
    %p80 = scmp.ne.s32.totalorder %s75, %s77
    %p81 = scmp.eq.s32.totalorder %s25, 0
    %p82 = por %p80, %p81
    %p83 = scmp.ne.s32.totalorder %s75, %s77
    %p84 = scmp.eq.s32.totalorder %s30, 1
    %p85 = por %p83, %p84
    %p86 = scmp.ne.s32.totalorder %s77, %s78
    %p87 = scmp.eq.s32.totalorder %s30, 0
    %p88 = por %p86, %p87
    %p89 = scmp.ne.s32.totalorder %s77, %s78
    %p90 = scmp.eq.s32.totalorder %s31, 1
    %p91 = por %p89, %p90
    %p93 = scmp.ne.s32.totalorder %s78, %s92
    %p94 = scmp.eq.s32.totalorder %s31, 0
    %p95 = por %p93, %p94
    %s97 = sadd.s32 %s96, 1
    %p100 = scmp.eq.s32.totalorder %s25, 1
    %p101 = scmp.ne.s32.totalorder %s96, %s98
    %p102 = scmp.eq.s32.totalorder %s25, 0
    %p103 = por %p101, %p102
    %p104 = scmp.ne.s32.totalorder %s96, %s98
    %p105 = scmp.eq.s32.totalorder %s30, 1
    %p106 = por %p104, %p105
    %p107 = scmp.ne.s32.totalorder %s98, %s99
    %p108 = scmp.eq.s32.totalorder %s30, 0
    %p109 = por %p107, %p108
    %p110 = scmp.ne.s32.totalorder %s98, %s99
    %p111 = scmp.eq.s32.totalorder %s31, 1
    %p112 = por %p110, %p111
    %p114 = scmp.ne.s32.totalorder %s99, %s113
    %p115 = scmp.eq.s32.totalorder %s31, 0
    %p116 = por %p114, %p115
    %s118 = sadd.s32 %s117, 1
    %p121 = scmp.eq.s32.totalorder %s25, 1
    %p122 = scmp.ne.s32.totalorder %s117, %s119
    %p123 = scmp.eq.s32.totalorder %s25, 0
    %p124 = por %p122, %p123
    %p125 = scmp.ne.s32.totalorder %s117, %s119
    %p126 = scmp.eq.s32.totalorder %s30, 1
    %p127 = por %p125, %p126
    %p128 = scmp.ne.s32.totalorder %s119, %s120
    %p129 = scmp.eq.s32.totalorder %s30, 0
    %p130 = por %p128, %p129
    %p131 = scmp.ne.s32.totalorder %s119, %s120
    %p132 = scmp.eq.s32.totalorder %s31, 1
    %p133 = por %p131, %p132
    %p135 = scmp.ne.s32.totalorder %s120, %s134
    %p136 = scmp.eq.s32.totalorder %s31, 0
    %p137 = por %p135, %p136
    %s139 = sadd.s32 %s138, 1
    %p142 = scmp.eq.s32.totalorder %s25, 1
    %p143 = scmp.ne.s32.totalorder %s138, %s140
    %p144 = scmp.eq.s32.totalorder %s25, 0
    %p145 = por %p143, %p144
    %p146 = scmp.ne.s32.totalorder %s138, %s140
    %p147 = scmp.eq.s32.totalorder %s30, 1
    %p148 = por %p146, %p147
    %p149 = scmp.ne.s32.totalorder %s140, %s141
    %p150 = scmp.eq.s32.totalorder %s30, 0
    %p151 = por %p149, %p150
    %p152 = scmp.ne.s32.totalorder %s140, %s141
    %p153 = scmp.eq.s32.totalorder %s31, 1
    %p154 = por %p152, %p153
    %p156 = scmp.ne.s32.totalorder %s141, %s155
    %p157 = scmp.eq.s32.totalorder %s31, 0
    %p158 = por %p156, %p157
    %s160 = sadd.s32 %s159, 1
    %p163 = scmp.eq.s32.totalorder %s25, 1
    %p164 = scmp.ne.s32.totalorder %s159, %s161
    %p165 = scmp.eq.s32.totalorder %s25, 0
    %p166 = por %p164, %p165
    %p167 = scmp.ne.s32.totalorder %s159, %s161
    %p168 = scmp.eq.s32.totalorder %s30, 1
    %p169 = por %p167, %p168
    %p170 = scmp.ne.s32.totalorder %s161, %s162
    %p171 = scmp.eq.s32.totalorder %s30, 0
    %p172 = por %p170, %p171
    %p173 = scmp.ne.s32.totalorder %s161, %s162
    %p174 = scmp.eq.s32.totalorder %s31, 1
    %p175 = por %p173, %p174
    %p177 = scmp.ne.s32.totalorder %s162, %s176
    %p178 = scmp.eq.s32.totalorder %s31, 0
    %p179 = por %p177, %p178
    %s181 = sadd.s32 %s180, 1
    %p184 = scmp.eq.s32.totalorder %s25, 1
    %p185 = scmp.ne.s32.totalorder %s180, %s182
    %p186 = scmp.eq.s32.totalorder %s25, 0
    %p187 = por %p185, %p186
    %p188 = scmp.ne.s32.totalorder %s180, %s182
    %p189 = scmp.eq.s32.totalorder %s30, 1
    %p190 = por %p188, %p189
    %p191 = scmp.ne.s32.totalorder %s182, %s183
    %p192 = scmp.eq.s32.totalorder %s30, 0
    %p193 = por %p191, %p192
    %p194 = scmp.ne.s32.totalorder %s182, %s183
    %p195 = scmp.eq.s32.totalorder %s31, 1
    %p196 = por %p194, %p195
    %p198 = scmp.ne.s32.totalorder %s183, %s197
    %p199 = scmp.eq.s32.totalorder %s31, 0
    %p200 = por %p198, %p199
    %s202 = sadd.s32 %s201, 1
    %p205 = scmp.eq.s32.totalorder %s25, 1
    %p206 = scmp.ne.s32.totalorder %s201, %s203
    %p207 = scmp.eq.s32.totalorder %s25, 0
    %p208 = por %p206, %p207
    %p209 = scmp.ne.s32.totalorder %s201, %s203
    %p210 = scmp.eq.s32.totalorder %s30, 1
    %p211 = por %p209, %p210
    %p212 = scmp.ne.s32.totalorder %s203, %s204
    %p213 = scmp.eq.s32.totalorder %s30, 0
    %p214 = por %p212, %p213
    %p215 = scmp.ne.s32.totalorder %s203, %s204
    %p216 = scmp.eq.s32.totalorder %s31, 1
    %p217 = por %p215, %p216
    %p219 = scmp.ne.s32.totalorder %s204, %s218
    %p220 = scmp.eq.s32.totalorder %s31, 0
    %p221 = por %p219, %p220
    %s222 = ssub.s32 %s25, %s32
    %p223 = scmp.eq.s32.totalorder %s222, 0
    %s225 = sadd.s32 %s224, 1
    %s226 = scalar_select %p223, %s224, %s225
    %p229 = pneg %p223
    %p230 = scmp.eq.s32.totalorder %s25, 1
    %p231 = por %p229, %p230
    %p232 = scmp.ne.s32.totalorder %s224, %s227
    %p233 = scmp.eq.s32.totalorder %s25, 0
    %p234 = por %p232, %p233
    %p235 = scmp.ne.s32.totalorder %s224, %s227
    %p236 = scmp.eq.s32.totalorder %s30, 1
    %p237 = por %p235, %p236
    %p238 = scmp.ne.s32.totalorder %s227, %s228
    %p239 = scmp.eq.s32.totalorder %s30, 0
    %p240 = por %p238, %p239
    %p241 = scmp.ne.s32.totalorder %s227, %s228
    %p242 = scmp.eq.s32.totalorder %s31, 1
    %p243 = por %p241, %p242
    %p245 = scmp.ne.s32.totalorder %s228, %s244
    %p246 = scmp.eq.s32.totalorder %s31, 0
    %p247 = por %p245, %p246
    %s248 = ssub.s32 %s25, %s32
    %p249 = scmp.eq.s32.totalorder %s248, 0
    %s251 = sadd.s32 %s250, 1
    %s252 = scalar_select %p249, %s250, %s251
    %p255 = pneg %p249
    %p256 = scmp.eq.s32.totalorder %s25, 1
    %p257 = por %p255, %p256
    %p258 = scmp.ne.s32.totalorder %s250, %s253
    %p259 = scmp.eq.s32.totalorder %s25, 0
    %p260 = por %p258, %p259
    %p261 = scmp.ne.s32.totalorder %s250, %s253
    %p262 = scmp.eq.s32.totalorder %s30, 1
    %p263 = por %p261, %p262
    %p264 = scmp.ne.s32.totalorder %s253, %s254
    %p265 = scmp.eq.s32.totalorder %s30, 0
    %p266 = por %p264, %p265
    %p267 = scmp.ne.s32.totalorder %s253, %s254
    %p268 = scmp.eq.s32.totalorder %s31, 1
    %p269 = por %p267, %p268
    %p271 = scmp.ne.s32.totalorder %s254, %s270
    %p272 = scmp.eq.s32.totalorder %s31, 0
    %p273 = por %p271, %p272
    %s274 = ssub.s32 %s25, %s32
    %p275 = scmp.eq.s32.totalorder %s274, 0
    %s277 = sadd.s32 %s276, 1
    %s278 = scalar_select %p275, %s276, %s277
    %p281 = pneg %p275
    %p282 = scmp.eq.s32.totalorder %s25, 1
    %p283 = por %p281, %p282
    %p284 = scmp.ne.s32.totalorder %s276, %s279
    %p285 = scmp.eq.s32.totalorder %s25, 0
    %p286 = por %p284, %p285
    %p287 = scmp.ne.s32.totalorder %s276, %s279
    %p288 = scmp.eq.s32.totalorder %s30, 1
    %p289 = por %p287, %p288
    %p290 = scmp.ne.s32.totalorder %s279, %s280
    %p291 = scmp.eq.s32.totalorder %s30, 0
    %p292 = por %p290, %p291
    %p293 = scmp.ne.s32.totalorder %s279, %s280
    %p294 = scmp.eq.s32.totalorder %s31, 1
    %p295 = por %p293, %p294
    %p297 = scmp.ne.s32.totalorder %s280, %s296
    %p298 = scmp.eq.s32.totalorder %s31, 0
    %p299 = por %p297, %p298
    %p300 = scmp.le.s32.totalorder 1, %s25
    %p301 = scmp.lt.s32.totalorder %s25, 3
    %p302 = pnand %p300, %p301
    %p303 = pneg %p302
    // Predicated region
    $region9: #{run.3} parent=5 // pred_check
      _
    $region10: #{run.3} parent=5 // pred_check_branch
      %305 = sbr.rel (%p302) target = $region12
    $region11: #{run.3} parent=5 // pred_region
      %s306 = ssub.s32 %s25, 1
      // Predicated region
      $region13: #{run.3} parent=11 // pred_check
        %p307 = pneg %p46
      $region14: #{run.3} parent=11 // pred_check_branch
        %309 = sbr.rel (%p307) target = $region16
      $region15: #{run.3} parent=11 // pred_region
        _
      $region16: #{run.3} parent=11 // pred_fallthru
        _
      // Predicated region
      $region17: #{run.3} parent=11 // pred_check
        %p310 = pneg %p67
      $region18: #{run.3} parent=11 // pred_check_branch
        %312 = sbr.rel (%p310) target = $region20
      $region19: #{run.3} parent=11 // pred_region
        _
      $region20: #{run.3} parent=11 // pred_fallthru
        _
      // Predicated region
      $region21: #{run.3} parent=11 // pred_check
        %p313 = pneg %p88
      $region22: #{run.3} parent=11 // pred_check_branch
        %315 = sbr.rel (%p313) target = $region24
      $region23: #{run.3} parent=11 // pred_region
        _
      $region24: #{run.3} parent=11 // pred_fallthru
        _
      // Predicated region
      $region25: #{run.3} parent=11 // pred_check
        %p316 = pneg %p109
      $region26: #{run.3} parent=11 // pred_check_branch
        %318 = sbr.rel (%p316) target = $region28
      $region27: #{run.3} parent=11 // pred_region
        _
      $region28: #{run.3} parent=11 // pred_fallthru
        _
      // Predicated region
      $region29: #{run.3} parent=11 // pred_check
        %p319 = pneg %p130
      $region30: #{run.3} parent=11 // pred_check_branch
        %321 = sbr.rel (%p319) target = $region32
      $region31: #{run.3} parent=11 // pred_region
        _
      $region32: #{run.3} parent=11 // pred_fallthru
        _
      // Predicated region
      $region33: #{run.3} parent=11 // pred_check
        %p322 = pneg %p151
      $region34: #{run.3} parent=11 // pred_check_branch
        %324 = sbr.rel (%p322) target = $region36
      $region35: #{run.3} parent=11 // pred_region
        _
      $region36: #{run.3} parent=11 // pred_fallthru
        _
      // Predicated region
      $region37: #{run.3} parent=11 // pred_check
        %p325 = pneg %p172
      $region38: #{run.3} parent=11 // pred_check_branch
        %327 = sbr.rel (%p325) target = $region40
      $region39: #{run.3} parent=11 // pred_region
        _
      $region40: #{run.3} parent=11 // pred_fallthru
        _
      // Predicated region
      $region41: #{run.3} parent=11 // pred_check
        %p328 = pneg %p193
      $region42: #{run.3} parent=11 // pred_check_branch
        %330 = sbr.rel (%p328) target = $region44
      $region43: #{run.3} parent=11 // pred_region
        _
      $region44: #{run.3} parent=11 // pred_fallthru
        _
      // Predicated region
      $region45: #{run.3} parent=11 // pred_check
        %p331 = pneg %p214
      $region46: #{run.3} parent=11 // pred_check_branch
        %333 = sbr.rel (%p331) target = $region48
      $region47: #{run.3} parent=11 // pred_region
        _
      $region48: #{run.3} parent=11 // pred_fallthru
        _
    $region12: #{run.3} parent=5 // pred_fallthru
      _
    %p334 = scmp.lt.s32.totalorder %s25, 2
    // Predicated region
    $region49: #{run.3} parent=5 // pred_check
      %p335 = pneg %p334
    $region50: #{run.3} parent=5 // pred_check_branch
      %337 = sbr.rel (%p335) target = $region52
    $region51: #{run.3} parent=5 // pred_region
      _
    $region52: #{run.3} parent=5 // pred_fallthru
      _
    %p338 = scmp.le.s32.totalorder 1, %s25
    %p339 = scmp.lt.s32.totalorder %s25, 3
    %p340 = pnand %p338, %p339
    %p341 = pneg %p340
    // Predicated region
    $region53: #{run.3} parent=5 // pred_check
      _
    $region54: #{run.3} parent=5 // pred_check_branch
      %343 = sbr.rel (%p340) target = $region56
    $region55: #{run.3} parent=5 // pred_region
      %s344 = ssub.s32 %s25, 1
      %p345 = pneg %p46
      %p346 = pneg %p43
      %p347 = pneg %p67
      %p348 = pneg %p64
      %p349 = pneg %p88
      %p350 = pneg %p85
      %p351 = pneg %p109
      %p352 = pneg %p106
      %p353 = pneg %p130
      %p354 = pneg %p127
      %p355 = pneg %p151
      %p356 = pneg %p148
      %p357 = pneg %p172
      %p358 = pneg %p169
      %p359 = pneg %p193
      %p360 = pneg %p190
      %p361 = pneg %p214
      %p362 = pneg %p211
      %p363 = pneg %p240
      %p364 = pneg %p237
      %p365 = scmp.lt.s32.totalorder %s30, 1
      %s366 = scalar_select %p365, %s30, 1
      %s367 = smul.addr %s366, 8
      %s368 = scalar_lea.vmem %s10, %s367
      %p369 = pneg %p266
      %p370 = pneg %p263
      %p371 = scmp.lt.s32.totalorder %s30, 1
      %s372 = scalar_select %p371, %s30, 1
      %s373 = smul.addr %s372, 8
      %s374 = smul.addr %s373, 8
      %s375 = scalar_lea.vmem %s11, %s374
      %p376 = pneg %p292
      %p377 = pneg %p289
      %p378 = scmp.lt.s32.totalorder %s30, 1
      %s379 = scalar_select %p378, %s30, 1
      %s380 = smul.addr %s379, 8
      %s381 = scalar_lea.vmem %s12, %s380
      %p382 = scmp.lt.s32.totalorder %s30, 1
      %s383 = scalar_select %p382, %s30, 1
      %s384 = smul.addr %s383, 8
      %s385 = scalar_lea.vmem %s10, %s384
      %p386 = scmp.lt.s32.totalorder %s30, 1
      %s387 = scalar_select %p386, %s30, 1
      %s388 = smul.addr %s387, 8
      %s389 = smul.addr %s388, 8
      %s390 = scalar_lea.vmem %s11, %s389
      %p391 = scmp.lt.s32.totalorder %s30, 1
      %s392 = scalar_select %p391, %s30, 1
      %s393 = smul.addr %s392, 8
      %s394 = scalar_lea.vmem %s12, %s393
      %p396 = scmp.eq.s32.totalorder %s30, 0
      // Predicated region
      $region57: #{run.3} parent=55 // pred_check
        %p397 = pneg %p396
      $region58: #{run.3} parent=55 // pred_check_branch
        %399 = sbr.rel (%p397) target = $region60
      $region59: #{run.3} parent=55 // pred_region
        %v400 = vld [vmem:[%s1] sm:$0xff]
        %v401 = vld [vmem:[%s1 + $0x8] sm:$0xff]
        %v402 = vld [vmem:[%s1 + $0x10] sm:$0xff]
        %v403 = vld [vmem:[%s1 + $0x18] sm:$0xff]
        %v404 = vld [vmem:[%s1 + $0x20] sm:$0xff]
        %v405 = vld [vmem:[%s1 + $0x28] sm:$0xff]
        %v406 = vld [vmem:[%s1 + $0x30] sm:$0xff]
        %v407 = vld [vmem:[%s1 + $0x38] sm:$0xff]
        %v408 = vpack.c.bf16 %v401, %v400
        %v409 = vpack.c.bf16 %v403, %v402
        %v410 = vpack.c.bf16 %v405, %v404
        %v411 = vpack.c.bf16 %v407, %v406
        %412 = vst [vmem:[#allocation6] sm:$0xff] %v408
        %413 = vst [vmem:[#allocation6 + $0x8] sm:$0xff] %v409
        %414 = vst [vmem:[#allocation6 + $0x10] sm:$0xff] %v410
        %415 = vst [vmem:[#allocation6 + $0x18] sm:$0xff] %v411
        %v416 = vmul.f32 %v400, %v400
        %v417 = vmul.f32 %v401, %v401
        %v418 = vmul.f32 %v402, %v402
        %v419 = vmul.f32 %v403, %v403
        %v420 = vmul.f32 %v404, %v404
        %v421 = vmul.f32 %v405, %v405
        %v422 = vmul.f32 %v406, %v406
        %v423 = vmul.f32 %v407, %v407
        %424 = vadd.xlane.f32.xlu0 %v416
        %v425 = vpop.xlane.xlu0 %424
        %426 = vadd.xlane.f32.xlu0 %v417
        %v427 = vpop.xlane.xlu0 %426
        %428 = vadd.xlane.f32.xlu0 %v418
        %v429 = vpop.xlane.xlu0 %428
        %430 = vadd.xlane.f32.xlu0 %v419
        %v431 = vpop.xlane.xlu0 %430
        %432 = vadd.xlane.f32.xlu0 %v420
        %v433 = vpop.xlane.xlu0 %432
        %434 = vadd.xlane.f32.xlu0 %v421
        %v435 = vpop.xlane.xlu0 %434
        %436 = vadd.xlane.f32.xlu0 %v422
        %v437 = vpop.xlane.xlu0 %436
        %438 = vadd.xlane.f32.xlu0 %v423
        %v439 = vpop.xlane.xlu0 %438
        %v440 = vadd.f32 %v425, 1e-12
        %v441 = vadd.f32 %v427, 1e-12
        %v442 = vadd.f32 %v429, 1e-12
        %v443 = vadd.f32 %v431, 1e-12
        %v444 = vadd.f32 %v433, 1e-12
        %v445 = vadd.f32 %v435, 1e-12
        %v446 = vadd.f32 %v437, 1e-12
        %v447 = vadd.f32 %v439, 1e-12
        %v448 = vrsqrt.pop %v440
        %v449 = vrsqrt.pop %v441
        %v450 = vrsqrt.pop %v442
        %v451 = vrsqrt.pop %v443
        %v452 = vrsqrt.pop %v444
        %v453 = vrsqrt.pop %v445
        %v454 = vrsqrt.pop %v446
        %v455 = vrsqrt.pop %v447
        %v456 = vmul.f32 %v400, %v448
        %v457 = vmul.f32 %v401, %v449
        %v458 = vmul.f32 %v402, %v450
        %v459 = vmul.f32 %v403, %v451
        %v460 = vmul.f32 %v404, %v452
        %v461 = vmul.f32 %v405, %v453
        %v462 = vmul.f32 %v406, %v454
        %v463 = vmul.f32 %v407, %v455
        %v464 = vpack.c.bf16 %v457, %v456
        %v465 = vpack.c.bf16 %v459, %v458
        %v466 = vpack.c.bf16 %v461, %v460
        %v467 = vpack.c.bf16 %v463, %v462
        %468 = vst [vmem:[#allocation7] sm:$0xff] %v464
        %469 = vst [vmem:[#allocation7 + $0x8] sm:$0xff] %v465
        %470 = vst [vmem:[#allocation7 + $0x10] sm:$0xff] %v466
        %471 = vst [vmem:[#allocation7 + $0x18] sm:$0xff] %v467
        %472 = vst [vmem:[#allocation2] sm:$0xff] 0.0
        %v473 = vld [vmem:[%s3] sm:$0xff]
        %vm474 = vcmask 523264
        %475 = vst.msk [vmem:[#allocation3] sm:$0xff] %vm474, %v473
        %v476 = vld [vmem:[%s4] sm:$0xff]
        %v477 = vld [vmem:[%s4 + $0x8] sm:$0xff]
        %v478 = vld [vmem:[%s4 + $0x10] sm:$0xff]
        %v479 = vld [vmem:[%s4 + $0x18] sm:$0xff]
        %v480 = vld [vmem:[%s4 + $0x20] sm:$0xff]
        %v481 = vld [vmem:[%s4 + $0x28] sm:$0xff]
        %v482 = vld [vmem:[%s4 + $0x30] sm:$0xff]
        %v483 = vld [vmem:[%s4 + $0x38] sm:$0xff]
        %vm484 = vcmask 64512
        %485 = vst.msk [vmem:[#allocation4] sm:$0xff] %vm484, %v476
        %486 = vst.msk [vmem:[#allocation4 + $0x8] sm:$0xff] %vm484, %v477
        %487 = vst.msk [vmem:[#allocation4 + $0x10] sm:$0xff] %vm484, %v478
        %488 = vst.msk [vmem:[#allocation4 + $0x18] sm:$0xff] %vm484, %v479
        %489 = vst.msk [vmem:[#allocation4 + $0x20] sm:$0xff] %vm484, %v480
        %490 = vst.msk [vmem:[#allocation4 + $0x28] sm:$0xff] %vm484, %v481
        %491 = vst.msk [vmem:[#allocation4 + $0x30] sm:$0xff] %vm484, %v482
        %492 = vst.msk [vmem:[#allocation4 + $0x38] sm:$0xff] %vm484, %v483
        %v493 = vld [vmem:[%s5] sm:$0xff]
        %v494 = vld [vmem:[%s5 + $0x8] sm:$0xff]
        %v495 = vld [vmem:[%s5 + $0x10] sm:$0xff]
        %v496 = vld [vmem:[%s5 + $0x18] sm:$0xff]
        %v497 = vld [vmem:[%s5 + $0x20] sm:$0xff]
        %v498 = vld [vmem:[%s5 + $0x28] sm:$0xff]
        %v499 = vld [vmem:[%s5 + $0x30] sm:$0xff]
        %v500 = vld [vmem:[%s5 + $0x38] sm:$0xff]
        %vm501 = vcmask 7168
        %502 = vst.msk [vmem:[#allocation5] sm:$0xff] %vm501, %v493
        %503 = vst.msk [vmem:[#allocation5 + $0x8] sm:$0xff] %vm501, %v494
        %504 = vst.msk [vmem:[#allocation5 + $0x10] sm:$0xff] %vm501, %v495
        %505 = vst.msk [vmem:[#allocation5 + $0x18] sm:$0xff] %vm501, %v496
        %506 = vst.msk [vmem:[#allocation5 + $0x20] sm:$0xff] %vm501, %v497
        %507 = vst.msk [vmem:[#allocation5 + $0x28] sm:$0xff] %vm501, %v498
        %508 = vst.msk [vmem:[#allocation5 + $0x30] sm:$0xff] %vm501, %v499
        %509 = vst.msk [vmem:[#allocation5 + $0x38] sm:$0xff] %vm501, %v500
      $region60: #{run.3} parent=55 // pred_fallthru
        _
      %s510 = sld [smem:[#allocation9 + %s30]]
      %s511 = scvt.s32.f32 %s510
      %v512 = vld [vmem:[#allocation6] sm:$0xff]
      %v513 = vld [vmem:[#allocation6 + $0x8] sm:$0xff]
      %v514 = vld [vmem:[#allocation6 + $0x10] sm:$0xff]
      %v515 = vld [vmem:[#allocation6 + $0x18] sm:$0xff]
      %v516 = vld [vmem:[#allocation3] sm:$0xff]
      %v517 = vpack.c.bf16 %v516, %v516
      %vm518 = vcmask 523264
      %v520 = vsel %vm518, %v517, 0
      %522 = vmatprep.subr.bf16.mxu0 0
      %523 = vmatpush1.bf16.msra.mxu0 %v512
      %524 = vmatprep.subr.bf16.mxu0 0
      %525 = vmatpush1.bf16.msra.mxu0 %v513
      %526 = vmatprep.subr.bf16.mxu0 0
      %527 = vmatpush1.bf16.msra.mxu0 %v514
      %528 = vmatprep.subr.bf16.mxu0 0
      %529 = vmatpush1.bf16.msra.mxu0 %v515
      %530 = vmatprep.subr.bf16.mxu0 0
      %531 = vmatpush1.bf16.msra.mxu0 0
      %532 = vmatprep.subr.bf16.mxu0 0
      %533 = vmatpush1.bf16.msra.mxu0 0
      %534 = vmatprep.subr.bf16.mxu0 0
      %535 = vmatpush1.bf16.msra.mxu0 0
      %536 = vmatprep.subr.bf16.mxu0 0
      %537 = vmatpush1.bf16.msra.mxu0 0
      %538 = vmatprep.subr.bf16.mxu0 0
      %539 = vmatpush1.bf16.msra.mxu0 0
      %540 = vmatprep.subr.bf16.mxu0 0
      %541 = vmatpush1.bf16.msra.mxu0 0
      %542 = vmatprep.subr.bf16.mxu0 0
      %543 = vmatpush1.bf16.msra.mxu0 0
      %544 = vmatprep.subr.bf16.mxu0 0
      %545 = vmatpush1.bf16.msra.mxu0 0
      %546 = vmatprep.subr.bf16.mxu0 0
      %547 = vmatpush1.bf16.msra.mxu0 0
      %548 = vmatprep.subr.bf16.mxu0 0
      %549 = vmatpush1.bf16.msra.mxu0 0
      %550 = vmatprep.subr.bf16.mxu0 0
      %551 = vmatpush1.bf16.msra.mxu0 0
      %552 = vmatprep.subr.bf16.mxu0 0
      %553 = vmatpush1.bf16.msra.mxu0 0
      %554 = vmatprep.mubr.bf16.mxu0 0
      %555 = vmatmul.mubr.bf16.gmra.mrb[0].mxu0 %v520
      %v556 = vpop.f32.mrb[0].mxu0
      %v557 = vadd.f32 0.0, %v556
      %v558 = vpop.f32.mrb[0].mxu0
      %v559 = vpop.f32.mrb[0].mxu0
      %v560 = vpop.f32.mrb[0].mxu0
      %561 = vdwg.mxu0
      %v562 = vld [vmem:[#allocation2] sm:$0xff]
      %v563 = vpack.c.bf16 %v557, %v557
      %v564 = vld [vmem:[%s6] sm:$0xff]
      %v565 = vld [vmem:[%s6 + $0x8] sm:$0xf]
      %v566 = vld [vmem:[%s6 + $0xc] sm:$0xff]
      %v567 = vld [vmem:[%s6 + $0x14] sm:$0xf]
      %v568 = vld [vmem:[%s6 + $0x18] sm:$0xff]
      %v569 = vld [vmem:[%s6 + $0x20] sm:$0xf]
      %v570 = vld [vmem:[%s6 + $0x24] sm:$0xff]
      %v571 = vld [vmem:[%s6 + $0x2c] sm:$0xf]
      %v572 = vld [vmem:[%s6 + $0x30] sm:$0xff]
      %v573 = vld [vmem:[%s6 + $0x38] sm:$0xf]
      %v574 = vld [vmem:[%s6 + $0x3c] sm:$0xff]
      %v575 = vld [vmem:[%s6 + $0x44] sm:$0xf]
      %v576 = vld [vmem:[%s6 + $0x48] sm:$0xff]
      %v577 = vld [vmem:[%s6 + $0x50] sm:$0xf]
      %v578 = vld [vmem:[%s6 + $0x54] sm:$0xff]
      %v579 = vld [vmem:[%s6 + $0x5c] sm:$0xf]
      %v580 = vld [vmem:[%s6 + $0x60] sm:$0xff]
      %v581 = vld [vmem:[%s6 + $0x68] sm:$0xf]
      %v582 = vld [vmem:[%s6 + $0x6c] sm:$0xff]
      %v583 = vld [vmem:[%s6 + $0x74] sm:$0xf]
      %v584 = vld [vmem:[%s6 + $0x78] sm:$0xff]
      %v585 = vld [vmem:[%s6 + $0x80] sm:$0xf]
      %v586 = vld [vmem:[%s6 + $0x84] sm:$0xff]
      %v587 = vld [vmem:[%s6 + $0x8c] sm:$0xf]
      %v588 = vld [vmem:[%s6 + $0x90] sm:$0xff]
      %v589 = vld [vmem:[%s6 + $0x98] sm:$0xf]
      %v590 = vld [vmem:[%s6 + $0x9c] sm:$0xff]
      %v591 = vld [vmem:[%s6 + $0xa4] sm:$0xf]
      %v592 = vld [vmem:[%s6 + $0xa8] sm:$0xff]
      %v593 = vld [vmem:[%s6 + $0xb0] sm:$0xf]
      %v594 = vld [vmem:[%s6 + $0xb4] sm:$0xff]
      %v595 = vld [vmem:[%s6 + $0xbc] sm:$0xf]
      %v596 = vld [vmem:[%s8] sm:$0x7]
      %v598 = vlaneseq
      %v599 = vshrl.u32 %v598, 7
      %v600 = vsub.s32 0, %v599
      %v601 = vrot.slane %v596, %v600
      %v602 = vlaneseq
      %v603 = vshrl.u32 %v602, 7
      %v604 = vsub.s32 1, %v603
      %v605 = vrot.slane %v596, %v604
      %v606 = vlaneseq
      %v607 = vshrl.u32 %v606, 7
      %v608 = vsub.s32 2, %v607
      %v609 = vrot.slane %v596, %v608
      %v645 = vunpack.c.l.b16 %v564
      %v646 = vunpack.c.h.b16 %v564
      %v647 = vunpack.c.l.b16 %v565
      %v648 = vunpack.c.l.b16 %v566
      %v649 = vunpack.c.h.b16 %v566
      %v650 = vunpack.c.l.b16 %v567
      %v651 = vunpack.c.l.b16 %v568
      %v652 = vunpack.c.h.b16 %v568
      %v653 = vunpack.c.l.b16 %v569
      %v654 = vunpack.c.l.b16 %v570
      %v655 = vunpack.c.h.b16 %v570
      %v656 = vunpack.c.l.b16 %v571
      %v657 = vunpack.c.l.b16 %v572
      %v658 = vunpack.c.h.b16 %v572
      %v659 = vunpack.c.l.b16 %v573
      %v660 = vunpack.c.l.b16 %v574
      %v661 = vunpack.c.h.b16 %v574
      %v662 = vunpack.c.l.b16 %v575
      %v663 = vunpack.c.l.b16 %v576
      %v664 = vunpack.c.h.b16 %v576
      %v665 = vunpack.c.l.b16 %v577
      %v666 = vunpack.c.l.b16 %v578
      %v667 = vunpack.c.h.b16 %v578
      %v668 = vunpack.c.l.b16 %v579
      %v669 = vunpack.c.l.b16 %v580
      %v670 = vunpack.c.h.b16 %v580
      %v671 = vunpack.c.l.b16 %v581
      %v672 = vunpack.c.l.b16 %v582
      %v673 = vunpack.c.h.b16 %v582
      %v674 = vunpack.c.l.b16 %v583
      %v675 = vunpack.c.l.b16 %v584
      %v676 = vunpack.c.h.b16 %v584
      %v677 = vunpack.c.l.b16 %v585
      %v678 = vunpack.c.l.b16 %v586
      %v679 = vunpack.c.h.b16 %v586
      %v680 = vunpack.c.l.b16 %v587
      %v681 = vunpack.c.l.b16 %v588
      %v682 = vunpack.c.h.b16 %v588
      %v683 = vunpack.c.l.b16 %v589
      %v684 = vunpack.c.l.b16 %v590
      %v685 = vunpack.c.h.b16 %v590
      %v686 = vunpack.c.l.b16 %v591
      %v687 = vunpack.c.l.b16 %v592
      %v688 = vunpack.c.h.b16 %v592
      %v689 = vunpack.c.l.b16 %v593
      %v690 = vunpack.c.l.b16 %v594
      %v691 = vunpack.c.h.b16 %v594
      %v692 = vunpack.c.l.b16 %v595
      %v693 = vpack.c.b16 %v648, %v645
      %v694 = vpack.c.b16 %v649, %v646
      %v695 = vpack.c.b16 %v650, %v647
      %v696 = vpack.c.b16 %v654, %v651
      %v697 = vpack.c.b16 %v655, %v652
      %v698 = vpack.c.b16 %v656, %v653
      %v699 = vpack.c.b16 %v660, %v657
      %v700 = vpack.c.b16 %v661, %v658
      %v701 = vpack.c.b16 %v662, %v659
      %v702 = vpack.c.b16 %v666, %v663
      %v703 = vpack.c.b16 %v667, %v664
      %v704 = vpack.c.b16 %v668, %v665
      %v705 = vpack.c.b16 %v672, %v669
      %v706 = vpack.c.b16 %v673, %v670
      %v707 = vpack.c.b16 %v674, %v671
      %v708 = vpack.c.b16 %v678, %v675
      %v709 = vpack.c.b16 %v679, %v676
      %v710 = vpack.c.b16 %v680, %v677
      %v711 = vpack.c.b16 %v684, %v681
      %v712 = vpack.c.b16 %v685, %v682
      %v713 = vpack.c.b16 %v686, %v683
      %v714 = vpack.c.b16 %v690, %v687
      %v715 = vpack.c.b16 %v691, %v688
      %v716 = vpack.c.b16 %v692, %v689
      %741 = vmatprep.subr.bf16.mxu0 %v694
      %742 = vmatpush1.bf16.msra.mxu0 %v693
      %743 = vmatprep.subr.bf16.mxu0 %v697
      %744 = vmatpush1.bf16.msra.mxu0 %v696
      %745 = vmatprep.subr.bf16.mxu0 %v700
      %746 = vmatpush1.bf16.msra.mxu0 %v699
      %747 = vmatprep.subr.bf16.mxu0 %v703
      %748 = vmatpush1.bf16.msra.mxu0 %v702
      %749 = vmatprep.subr.bf16.mxu0 %v706
      %750 = vmatpush1.bf16.msra.mxu0 %v705
      %751 = vmatprep.subr.bf16.mxu0 %v709
      %752 = vmatpush1.bf16.msra.mxu0 %v708
      %753 = vmatprep.subr.bf16.mxu0 %v712
      %754 = vmatpush1.bf16.msra.mxu0 %v711
      %755 = vmatprep.subr.bf16.mxu0 %v715
      %756 = vmatpush1.bf16.msra.mxu0 %v714
      %757 = vmatprep.subr.bf16.mxu0 0
      %758 = vmatpush1.bf16.msra.mxu0 0
      %759 = vmatprep.subr.bf16.mxu0 0
      %760 = vmatpush1.bf16.msra.mxu0 0
      %761 = vmatprep.subr.bf16.mxu0 0
      %762 = vmatpush1.bf16.msra.mxu0 0
      %763 = vmatprep.subr.bf16.mxu0 0
      %764 = vmatpush1.bf16.msra.mxu0 0
      %765 = vmatprep.subr.bf16.mxu0 0
      %766 = vmatpush1.bf16.msra.mxu0 0
      %767 = vmatprep.subr.bf16.mxu0 0
      %768 = vmatpush1.bf16.msra.mxu0 0
      %769 = vmatprep.subr.bf16.mxu0 0
      %770 = vmatpush1.bf16.msra.mxu0 0
      %771 = vmatprep.subr.bf16.mxu0 0
      %772 = vmatpush1.bf16.msra.mxu0 0
      %773 = vmatprep.mubr.bf16.mxu0 0
      %774 = vmatmul.mubr.bf16.gmra.mrb[0].mxu0 %v563
      %v775 = vpop.f32.mrb[0].mxu0
      %v776 = vadd.f32 %v601, %v775
      %v777 = vpop.f32.mrb[0].mxu0
      %v778 = vadd.f32 %v605, %v777
      %v779 = vpop.f32.mrb[0].mxu0
      %v780 = vpop.f32.mrb[0].mxu0
      %781 = vdwg.mxu0
      %782 = vmatprep.subr.bf16.mxu0 0
      %783 = vmatpush1.bf16.msra.mxu0 %v695
      %784 = vmatprep.subr.bf16.mxu0 0
      %785 = vmatpush1.bf16.msra.mxu0 %v698
      %786 = vmatprep.subr.bf16.mxu0 0
      %787 = vmatpush1.bf16.msra.mxu0 %v701
      %788 = vmatprep.subr.bf16.mxu0 0
      %789 = vmatpush1.bf16.msra.mxu0 %v704
      %790 = vmatprep.subr.bf16.mxu0 0
      %791 = vmatpush1.bf16.msra.mxu0 %v707
      %792 = vmatprep.subr.bf16.mxu0 0
      %793 = vmatpush1.bf16.msra.mxu0 %v710
      %794 = vmatprep.subr.bf16.mxu0 0
      %795 = vmatpush1.bf16.msra.mxu0 %v713
      %796 = vmatprep.subr.bf16.mxu0 0
      %797 = vmatpush1.bf16.msra.mxu0 %v716
      %798 = vmatprep.subr.bf16.mxu0 0
      %799 = vmatpush1.bf16.msra.mxu0 0
      %800 = vmatprep.subr.bf16.mxu0 0
      %801 = vmatpush1.bf16.msra.mxu0 0
      %802 = vmatprep.subr.bf16.mxu0 0
      %803 = vmatpush1.bf16.msra.mxu0 0
      %804 = vmatprep.subr.bf16.mxu0 0
      %805 = vmatpush1.bf16.msra.mxu0 0
      %806 = vmatprep.subr.bf16.mxu0 0
      %807 = vmatpush1.bf16.msra.mxu0 0
      %808 = vmatprep.subr.bf16.mxu0 0
      %809 = vmatpush1.bf16.msra.mxu0 0
      %810 = vmatprep.subr.bf16.mxu0 0
      %811 = vmatpush1.bf16.msra.mxu0 0
      %812 = vmatprep.subr.bf16.mxu0 0
      %813 = vmatpush1.bf16.msra.mxu0 0
      %814 = vmatprep.mubr.bf16.mxu0 0
      %815 = vmatmul.mubr.bf16.gmra.mrb[0].mxu0 %v563
      %v816 = vpop.f32.mrb[0].mxu0
      %v817 = vadd.f32 %v609, %v816
      %v818 = vpop.f32.mrb[0].mxu0
      %v819 = vpop.f32.mrb[0].mxu0
      %v820 = vpop.f32.mrb[0].mxu0
      %821 = vdwg.mxu0
      %v822 = vpack.c.bf16 %v562, %v562
      %v823 = vld [vmem:[%s7] sm:$0xff]
      %v824 = vld [vmem:[%s7 + $0x8] sm:$0xf]
      %v825 = vld [vmem:[%s7 + $0xc] sm:$0xff]
      %v826 = vld [vmem:[%s7 + $0x14] sm:$0xf]
      %v827 = vld [vmem:[%s7 + $0x18] sm:$0xff]
      %v828 = vld [vmem:[%s7 + $0x20] sm:$0xf]
      %v829 = vld [vmem:[%s7 + $0x24] sm:$0xff]
      %v830 = vld [vmem:[%s7 + $0x2c] sm:$0xf]
      %v831 = vld [vmem:[%s7 + $0x30] sm:$0xff]
      %v832 = vld [vmem:[%s7 + $0x38] sm:$0xf]
      %v833 = vld [vmem:[%s7 + $0x3c] sm:$0xff]
      %v834 = vld [vmem:[%s7 + $0x44] sm:$0xf]
      %v835 = vld [vmem:[%s7 + $0x48] sm:$0xff]
      %v836 = vld [vmem:[%s7 + $0x50] sm:$0xf]
      %v837 = vld [vmem:[%s7 + $0x54] sm:$0xff]
      %v838 = vld [vmem:[%s7 + $0x5c] sm:$0xf]
      %v839 = vld [vmem:[%s7 + $0x60] sm:$0xff]
      %v840 = vld [vmem:[%s7 + $0x68] sm:$0xf]
      %v841 = vld [vmem:[%s7 + $0x6c] sm:$0xff]
      %v842 = vld [vmem:[%s7 + $0x74] sm:$0xf]
      %v843 = vld [vmem:[%s7 + $0x78] sm:$0xff]
      %v844 = vld [vmem:[%s7 + $0x80] sm:$0xf]
      %v845 = vld [vmem:[%s7 + $0x84] sm:$0xff]
      %v846 = vld [vmem:[%s7 + $0x8c] sm:$0xf]
      %v847 = vld [vmem:[%s7 + $0x90] sm:$0xff]
      %v848 = vld [vmem:[%s7 + $0x98] sm:$0xf]
      %v849 = vld [vmem:[%s7 + $0x9c] sm:$0xff]
      %v850 = vld [vmem:[%s7 + $0xa4] sm:$0xf]
      %v851 = vld [vmem:[%s7 + $0xa8] sm:$0xff]
      %v852 = vld [vmem:[%s7 + $0xb0] sm:$0xf]
      %v853 = vld [vmem:[%s7 + $0xb4] sm:$0xff]
      %v854 = vld [vmem:[%s7 + $0xbc] sm:$0xf]
      %v855 = vld [vmem:[%s9] sm:$0x7]
      %v857 = vlaneseq
      %v858 = vshrl.u32 %v857, 7
      %v859 = vsub.s32 0, %v858
      %v860 = vrot.slane %v855, %v859
      %v861 = vlaneseq
      %v862 = vshrl.u32 %v861, 7
      %v863 = vsub.s32 1, %v862
      %v864 = vrot.slane %v855, %v863
      %v865 = vlaneseq
      %v866 = vshrl.u32 %v865, 7
      %v867 = vsub.s32 2, %v866
      %v868 = vrot.slane %v855, %v867
      %v904 = vunpack.c.l.b16 %v823
      %v905 = vunpack.c.h.b16 %v823
      %v906 = vunpack.c.l.b16 %v824
      %v907 = vunpack.c.l.b16 %v825
      %v908 = vunpack.c.h.b16 %v825
      %v909 = vunpack.c.l.b16 %v826
      %v910 = vunpack.c.l.b16 %v827
      %v911 = vunpack.c.h.b16 %v827
      %v912 = vunpack.c.l.b16 %v828
      %v913 = vunpack.c.l.b16 %v829
      %v914 = vunpack.c.h.b16 %v829
      %v915 = vunpack.c.l.b16 %v830
      %v916 = vunpack.c.l.b16 %v831
      %v917 = vunpack.c.h.b16 %v831
      %v918 = vunpack.c.l.b16 %v832
      %v919 = vunpack.c.l.b16 %v833
      %v920 = vunpack.c.h.b16 %v833
      %v921 = vunpack.c.l.b16 %v834
      %v922 = vunpack.c.l.b16 %v835
      %v923 = vunpack.c.h.b16 %v835
      %v924 = vunpack.c.l.b16 %v836
      %v925 = vunpack.c.l.b16 %v837
      %v926 = vunpack.c.h.b16 %v837
      %v927 = vunpack.c.l.b16 %v838
      %v928 = vunpack.c.l.b16 %v839
      %v929 = vunpack.c.h.b16 %v839
      %v930 = vunpack.c.l.b16 %v840
      %v931 = vunpack.c.l.b16 %v841
      %v932 = vunpack.c.h.b16 %v841
      %v933 = vunpack.c.l.b16 %v842
      %v934 = vunpack.c.l.b16 %v843
      %v935 = vunpack.c.h.b16 %v843
      %v936 = vunpack.c.l.b16 %v844
      %v937 = vunpack.c.l.b16 %v845
      %v938 = vunpack.c.h.b16 %v845
      %v939 = vunpack.c.l.b16 %v846
      %v940 = vunpack.c.l.b16 %v847
      %v941 = vunpack.c.h.b16 %v847
      %v942 = vunpack.c.l.b16 %v848
      %v943 = vunpack.c.l.b16 %v849
      %v944 = vunpack.c.h.b16 %v849
      %v945 = vunpack.c.l.b16 %v850
      %v946 = vunpack.c.l.b16 %v851
      %v947 = vunpack.c.h.b16 %v851
      %v948 = vunpack.c.l.b16 %v852
      %v949 = vunpack.c.l.b16 %v853
      %v950 = vunpack.c.h.b16 %v853
      %v951 = vunpack.c.l.b16 %v854
      %v952 = vpack.c.b16 %v907, %v904
      %v953 = vpack.c.b16 %v908, %v905
      %v954 = vpack.c.b16 %v909, %v906
      %v955 = vpack.c.b16 %v913, %v910
      %v956 = vpack.c.b16 %v914, %v911
      %v957 = vpack.c.b16 %v915, %v912
      %v958 = vpack.c.b16 %v919, %v916
      %v959 = vpack.c.b16 %v920, %v917
      %v960 = vpack.c.b16 %v921, %v918
      %v961 = vpack.c.b16 %v925, %v922
      %v962 = vpack.c.b16 %v926, %v923
      %v963 = vpack.c.b16 %v927, %v924
      %v964 = vpack.c.b16 %v931, %v928
      %v965 = vpack.c.b16 %v932, %v929
      %v966 = vpack.c.b16 %v933, %v930
      %v967 = vpack.c.b16 %v937, %v934
      %v968 = vpack.c.b16 %v938, %v935
      %v969 = vpack.c.b16 %v939, %v936
      %v970 = vpack.c.b16 %v943, %v940
      %v971 = vpack.c.b16 %v944, %v941
      %v972 = vpack.c.b16 %v945, %v942
      %v973 = vpack.c.b16 %v949, %v946
      %v974 = vpack.c.b16 %v950, %v947
      %v975 = vpack.c.b16 %v951, %v948
      %1000 = vmatprep.subr.bf16.mxu0 %v953
      %1001 = vmatpush1.bf16.msra.mxu0 %v952
      %1002 = vmatprep.subr.bf16.mxu0 %v956
      %1003 = vmatpush1.bf16.msra.mxu0 %v955
      %1004 = vmatprep.subr.bf16.mxu0 %v959
      %1005 = vmatpush1.bf16.msra.mxu0 %v958
      %1006 = vmatprep.subr.bf16.mxu0 %v962
      %1007 = vmatpush1.bf16.msra.mxu0 %v961
      %1008 = vmatprep.subr.bf16.mxu0 %v965
      %1009 = vmatpush1.bf16.msra.mxu0 %v964
      %1010 = vmatprep.subr.bf16.mxu0 %v968
      %1011 = vmatpush1.bf16.msra.mxu0 %v967
      %1012 = vmatprep.subr.bf16.mxu0 %v971
      %1013 = vmatpush1.bf16.msra.mxu0 %v970
      %1014 = vmatprep.subr.bf16.mxu0 %v974
      %1015 = vmatpush1.bf16.msra.mxu0 %v973
      %1016 = vmatprep.subr.bf16.mxu0 0
      %1017 = vmatpush1.bf16.msra.mxu0 0
      %1018 = vmatprep.subr.bf16.mxu0 0
      %1019 = vmatpush1.bf16.msra.mxu0 0
      %1020 = vmatprep.subr.bf16.mxu0 0
      %1021 = vmatpush1.bf16.msra.mxu0 0
      %1022 = vmatprep.subr.bf16.mxu0 0
      %1023 = vmatpush1.bf16.msra.mxu0 0
      %1024 = vmatprep.subr.bf16.mxu0 0
      %1025 = vmatpush1.bf16.msra.mxu0 0
      %1026 = vmatprep.subr.bf16.mxu0 0
      %1027 = vmatpush1.bf16.msra.mxu0 0
      %1028 = vmatprep.subr.bf16.mxu0 0
      %1029 = vmatpush1.bf16.msra.mxu0 0
      %1030 = vmatprep.subr.bf16.mxu0 0
      %1031 = vmatpush1.bf16.msra.mxu0 0
      %1032 = vmatprep.mubr.bf16.mxu0 0
      %1033 = vmatmul.mubr.bf16.gmra.mrb[0].mxu0 %v822
      %v1034 = vpop.f32.mrb[0].mxu0
      %v1035 = vadd.f32 %v860, %v1034
      %v1036 = vpop.f32.mrb[0].mxu0
      %v1037 = vadd.f32 %v864, %v1036
      %v1038 = vpop.f32.mrb[0].mxu0
      %v1039 = vpop.f32.mrb[0].mxu0
      %1040 = vdwg.mxu0
      %1041 = vmatprep.subr.bf16.mxu0 0
      %1042 = vmatpush1.bf16.msra.mxu0 %v954
      %1043 = vmatprep.subr.bf16.mxu0 0
      %1044 = vmatpush1.bf16.msra.mxu0 %v957
      %1045 = vmatprep.subr.bf16.mxu0 0
      %1046 = vmatpush1.bf16.msra.mxu0 %v960
      %1047 = vmatprep.subr.bf16.mxu0 0
      %1048 = vmatpush1.bf16.msra.mxu0 %v963
      %1049 = vmatprep.subr.bf16.mxu0 0
      %1050 = vmatpush1.bf16.msra.mxu0 %v966
      %1051 = vmatprep.subr.bf16.mxu0 0
      %1052 = vmatpush1.bf16.msra.mxu0 %v969
      %1053 = vmatprep.subr.bf16.mxu0 0
      %1054 = vmatpush1.bf16.msra.mxu0 %v972
      %1055 = vmatprep.subr.bf16.mxu0 0
      %1056 = vmatpush1.bf16.msra.mxu0 %v975
      %1057 = vmatprep.subr.bf16.mxu0 0
      %1058 = vmatpush1.bf16.msra.mxu0 0
      %1059 = vmatprep.subr.bf16.mxu0 0
      %1060 = vmatpush1.bf16.msra.mxu0 0
      %1061 = vmatprep.subr.bf16.mxu0 0
      %1062 = vmatpush1.bf16.msra.mxu0 0
      %1063 = vmatprep.subr.bf16.mxu0 0
      %1064 = vmatpush1.bf16.msra.mxu0 0
      %1065 = vmatprep.subr.bf16.mxu0 0
      %1066 = vmatpush1.bf16.msra.mxu0 0
      %1067 = vmatprep.subr.bf16.mxu0 0
      %1068 = vmatpush1.bf16.msra.mxu0 0
      %1069 = vmatprep.subr.bf16.mxu0 0
      %1070 = vmatpush1.bf16.msra.mxu0 0
      %1071 = vmatprep.subr.bf16.mxu0 0
      %1072 = vmatpush1.bf16.msra.mxu0 0
      %1073 = vmatprep.mubr.bf16.mxu0 0
      %1074 = vmatmul.mubr.bf16.gmra.mrb[0].mxu0 %v822
      %v1075 = vpop.f32.mrb[0].mxu0
      %v1076 = vadd.f32 %v868, %v1075
      %v1077 = vpop.f32.mrb[0].mxu0
      %v1078 = vpop.f32.mrb[0].mxu0
      %v1079 = vpop.f32.mrb[0].mxu0
      %1080 = vdwg.mxu0
      %v1081 = vadd.f32 %v776, %v1035
      %v1082 = vxor.u32 %v1081, 2147483648
      %v1083 = vmul.f32 %v1082, 1.442695
      %v1084 = vpow.pop %v1083
      %v1085 = vadd.f32 %v1084, 1.0
      %v1086 = vrcp.pop %v1085
      %v1087 = vmul.f32 1.0, %v1086
      %v1088 = vadd.f32 %v778, %v1037
      %v1089 = vxor.u32 %v1088, 2147483648
      %v1090 = vmul.f32 %v1089, 1.442695
      %v1091 = vpow.pop %v1090
      %v1092 = vadd.f32 %v1091, 1.0
      %v1093 = vrcp.pop %v1092
      %v1094 = vmul.f32 1.0, %v1093
      %v1095 = vmul.f32 %v1087, %v1076
      %v1096 = vadd.f32 %v817, %v1095
      %v1097 = vtanh.pop %v1096
      %v1098 = vsub.f32 1.0, %v1094
      %v1099 = vmul.f32 %v1098, %v1097
      %v1100 = vmul.f32 %v1094, %v562
      %v1101 = vadd.f32 %v1099, %v1100
      %1102 = vst [vmem:[#allocation2] sm:$0xff] %v1101
      %1103 = vst [vmem:[%s385] sm:$0xff] %v1101
      %v1104 = vld [vmem:[%s2] sm:$0xf]
      %v1105 = vld [vmem:[%s2 + $0x4] sm:$0xf]
      %v1106 = vld [vmem:[%s2 + $0x8] sm:$0xf]
      %v1107 = vld [vmem:[%s2 + $0xc] sm:$0xf]
      %v1108 = vld [vmem:[%s2 + $0x10] sm:$0xf]
      %v1109 = vld [vmem:[%s2 + $0x14] sm:$0xf]
      %v1110 = vld [vmem:[%s2 + $0x18] sm:$0xf]
      %v1111 = vld [vmem:[%s2 + $0x1c] sm:$0xf]
      %v1112 = vld [vmem:[#allocation4] sm:$0xff]
      %v1113 = vld [vmem:[#allocation4 + $0x8] sm:$0xff]
      %v1114 = vld [vmem:[#allocation4 + $0x10] sm:$0xff]
      %v1115 = vld [vmem:[#allocation4 + $0x18] sm:$0xff]
      %v1116 = vld [vmem:[#allocation4 + $0x20] sm:$0xff]
      %v1117 = vld [vmem:[#allocation4 + $0x28] sm:$0xff]
      %v1118 = vld [vmem:[#allocation4 + $0x30] sm:$0xff]
      %v1119 = vld [vmem:[#allocation4 + $0x38] sm:$0xff]
      %v1120 = vpack.c.bf16 %v1113, %v1112
      %v1121 = vpack.c.bf16 %v1115, %v1114
      %v1122 = vpack.c.bf16 %v1117, %v1116
      %v1123 = vpack.c.bf16 %v1119, %v1118
      %v1132 = vunpack.c.l.b16 %v1104
      %v1133 = vunpack.c.l.b16 %v1105
      %v1134 = vunpack.c.l.b16 %v1106
      %v1135 = vunpack.c.l.b16 %v1107
      %v1136 = vunpack.c.l.b16 %v1108
      %v1137 = vunpack.c.l.b16 %v1109
      %v1138 = vunpack.c.l.b16 %v1110
      %v1139 = vunpack.c.l.b16 %v1111
      %v1140 = vpack.c.b16 %v1133, %v1132
      %v1141 = vpack.c.b16 %v1135, %v1134
      %v1142 = vpack.c.b16 %v1137, %v1136
      %v1143 = vpack.c.b16 %v1139, %v1138
      %v1145 = vsel %vm518, %v1140, 0
      %v1148 = vsel %vm518, %v1141, 0
      %v1151 = vsel %vm518, %v1142, 0
      %v1154 = vsel %vm518, %v1143, 0
      %1156 = vmatprep.subr.bf16.mxu0 0
      %1157 = vmatpush1.bf16.msra.mxu0 %v1120
      %1158 = vmatprep.subr.bf16.mxu0 0
      %1159 = vmatpush1.bf16.msra.mxu0 %v1121
      %1160 = vmatprep.subr.bf16.mxu0 0
      %1161 = vmatpush1.bf16.msra.mxu0 %v1122
      %1162 = vmatprep.subr.bf16.mxu0 0
      %1163 = vmatpush1.bf16.msra.mxu0 %v1123
      %1164 = vmatprep.subr.bf16.mxu0 0
      %1165 = vmatpush1.bf16.msra.mxu0 0
      %1166 = vmatprep.subr.bf16.mxu0 0
      %1167 = vmatpush1.bf16.msra.mxu0 0
      %1168 = vmatprep.subr.bf16.mxu0 0
      %1169 = vmatpush1.bf16.msra.mxu0 0
      %1170 = vmatprep.subr.bf16.mxu0 0
      %1171 = vmatpush1.bf16.msra.mxu0 0
      %1172 = vmatprep.subr.bf16.mxu0 0
      %1173 = vmatpush1.bf16.msra.mxu0 0
      %1174 = vmatprep.subr.bf16.mxu0 0
      %1175 = vmatpush1.bf16.msra.mxu0 0
      %1176 = vmatprep.subr.bf16.mxu0 0
      %1177 = vmatpush1.bf16.msra.mxu0 0
      %1178 = vmatprep.subr.bf16.mxu0 0
      %1179 = vmatpush1.bf16.msra.mxu0 0
      %1180 = vmatprep.subr.bf16.mxu0 0
      %1181 = vmatpush1.bf16.msra.mxu0 0
      %1182 = vmatprep.subr.bf16.mxu0 0
      %1183 = vmatpush1.bf16.msra.mxu0 0
      %1184 = vmatprep.subr.bf16.mxu0 0
      %1185 = vmatpush1.bf16.msra.mxu0 0
      %1186 = vmatprep.subr.bf16.mxu0 0
      %1187 = vmatpush1.bf16.msra.mxu0 0
      %1188 = vmatprep.mubr.bf16.mxu0 0
      %1189 = vmatmul.mubr.bf16.gmra.mrb[0].mxu0 %v1145
      %v1190 = vpop.f32.mrb[0].mxu0
      %v1191 = vadd.f32 0.0, %v1190
      %v1192 = vpop.f32.mrb[0].mxu0
      %v1193 = vpop.f32.mrb[0].mxu0
      %v1194 = vadd.f32 0.0, %v1193
      %v1195 = vpop.f32.mrb[0].mxu0
      %1196 = vmatprep.mubr.bf16.mxu0 0
      %1197 = vmatmul.mubr.bf16.gmra.mrb[0].mxu0 %v1148
      %v1198 = vpop.f32.mrb[0].mxu0
      %v1199 = vadd.f32 0.0, %v1198
      %v1200 = vpop.f32.mrb[0].mxu0
      %v1201 = vpop.f32.mrb[0].mxu0
      %v1202 = vadd.f32 0.0, %v1201
      %v1203 = vpop.f32.mrb[0].mxu0
      %1204 = vmatprep.mubr.bf16.mxu0 0
      %1205 = vmatmul.mubr.bf16.gmra.mrb[0].mxu0 %v1151
      %v1206 = vpop.f32.mrb[0].mxu0
      %v1207 = vadd.f32 0.0, %v1206
      %v1208 = vpop.f32.mrb[0].mxu0
      %v1209 = vpop.f32.mrb[0].mxu0
      %v1210 = vadd.f32 0.0, %v1209
      %v1211 = vpop.f32.mrb[0].mxu0
      %1212 = vmatprep.mubr.bf16.mxu0 0
      %1213 = vmatmul.mubr.bf16.gmra.mrb[0].mxu0 %v1154
      %v1214 = vpop.f32.mrb[0].mxu0
      %v1215 = vadd.f32 0.0, %v1214
      %v1216 = vpop.f32.mrb[0].mxu0
      %v1217 = vpop.f32.mrb[0].mxu0
      %v1218 = vadd.f32 0.0, %v1217
      %v1219 = vpop.f32.mrb[0].mxu0
      %1220 = vdwg.mxu0
      %v1221 = vld [vmem:[#allocation5] sm:$0xff]
      %v1222 = vld [vmem:[#allocation5 + $0x8] sm:$0xff]
      %v1223 = vld [vmem:[#allocation5 + $0x10] sm:$0xff]
      %v1224 = vld [vmem:[#allocation5 + $0x18] sm:$0xff]
      %v1225 = vld [vmem:[#allocation5 + $0x20] sm:$0xff]
      %v1226 = vld [vmem:[#allocation5 + $0x28] sm:$0xff]
      %v1227 = vld [vmem:[#allocation5 + $0x30] sm:$0xff]
      %v1228 = vld [vmem:[#allocation5 + $0x38] sm:$0xff]
      %vm1229 = vcmp.lt.f32.partialorder %v1221, 0.5
      %vm1230 = vcmp.lt.f32.partialorder %v1222, 0.5
      %vm1231 = vcmp.lt.f32.partialorder %v1223, 0.5
      %vm1232 = vcmp.lt.f32.partialorder %v1224, 0.5
      %vm1233 = vcmp.lt.f32.partialorder %v1225, 0.5
      %vm1234 = vcmp.lt.f32.partialorder %v1226, 0.5
      %vm1235 = vcmp.lt.f32.partialorder %v1227, 0.5
      %vm1236 = vcmp.lt.f32.partialorder %v1228, 0.5
      %v1237 = vstv %s511
      %vm1238 = vcmp.ge.f32.partialorder %v1191, %v1237
      %vm1239 = vcmp.ge.f32.partialorder %v1194, %v1237
      %vm1240 = vcmp.ge.f32.partialorder %v1199, %v1237
      %vm1241 = vcmp.ge.f32.partialorder %v1202, %v1237
      %vm1242 = vcmp.ge.f32.partialorder %v1207, %v1237
      %vm1243 = vcmp.ge.f32.partialorder %v1210, %v1237
      %vm1244 = vcmp.ge.f32.partialorder %v1215, %v1237
      %vm1245 = vcmp.ge.f32.partialorder %v1218, %v1237
      %v1246 = vsel %vm1229, 1, 0
      %v1247 = vsel %vm1230, 1, 0
      %v1248 = vsel %vm1231, 1, 0
      %v1249 = vsel %vm1232, 1, 0
      %v1250 = vsel %vm1233, 1, 0
      %v1251 = vsel %vm1234, 1, 0
      %v1252 = vsel %vm1235, 1, 0
      %v1253 = vsel %vm1236, 1, 0
      %1254 = vset.pattern.permute.xlu0 0
      %1255 = vperm.xlu0 %1254, %v1246
      %v1256 = vpop.permute.xlu0 %1255
      %1257 = vset.pattern.permute.xlu0 0
      %1258 = vperm.xlu0 %1257, %v1247
      %v1259 = vpop.permute.xlu0 %1258
      %1260 = vset.pattern.permute.xlu0 0
      %1261 = vperm.xlu0 %1260, %v1248
      %v1262 = vpop.permute.xlu0 %1261
      %1263 = vset.pattern.permute.xlu0 0
      %1264 = vperm.xlu0 %1263, %v1249
      %v1265 = vpop.permute.xlu0 %1264
      %1266 = vset.pattern.permute.xlu0 0
      %1267 = vperm.xlu0 %1266, %v1250
      %v1268 = vpop.permute.xlu0 %1267
      %1269 = vset.pattern.permute.xlu0 0
      %1270 = vperm.xlu0 %1269, %v1251
      %v1271 = vpop.permute.xlu0 %1270
      %1272 = vset.pattern.permute.xlu0 0
      %1273 = vperm.xlu0 %1272, %v1252
      %v1274 = vpop.permute.xlu0 %1273
      %1275 = vset.pattern.permute.xlu0 0
      %1276 = vperm.xlu0 %1275, %v1253
      %v1277 = vpop.permute.xlu0 %1276
      %vm1278 = vcmp.eq.s32.totalorder %v1256, 1
      %vm1279 = vcmp.eq.s32.totalorder %v1259, 1
      %vm1280 = vcmp.eq.s32.totalorder %v1262, 1
      %vm1281 = vcmp.eq.s32.totalorder %v1265, 1
      %vm1282 = vcmp.eq.s32.totalorder %v1268, 1
      %vm1283 = vcmp.eq.s32.totalorder %v1271, 1
      %vm1284 = vcmp.eq.s32.totalorder %v1274, 1
      %vm1285 = vcmp.eq.s32.totalorder %v1277, 1
      %vm1286 = vmand %vm1238, %vm1278
      %vm1287 = vmand %vm1239, %vm1279
      %vm1288 = vmand %vm1240, %vm1280
      %vm1289 = vmand %vm1241, %vm1281
      %vm1290 = vmand %vm1242, %vm1282
      %vm1291 = vmand %vm1243, %vm1283
      %vm1292 = vmand %vm1244, %vm1284
      %vm1293 = vmand %vm1245, %vm1285
      %v1294 = vsel %vm1286, 1.0, 0.0
      %v1295 = vsel %vm1287, 1.0, 0.0
      %v1296 = vsel %vm1288, 1.0, 0.0
      %v1297 = vsel %vm1289, 1.0, 0.0
      %v1298 = vsel %vm1290, 1.0, 0.0
      %v1299 = vsel %vm1291, 1.0, 0.0
      %v1300 = vsel %vm1292, 1.0, 0.0
      %v1301 = vsel %vm1293, 1.0, 0.0
      %vm1302 = vcmask 64512
      %v1303 = vsel %vm1302, %v1294, -inf
      %1304 = vmax.xlane.f32.xlu0 %v1303
      %v1305 = vpop.xlane.xlu0 %1304
      %v1306 = vsel %vm1302, %v1295, -inf
      %1307 = vmax.xlane.f32.xlu0 %v1306
      %v1308 = vpop.xlane.xlu0 %1307
      %v1309 = vsel %vm1302, %v1296, -inf
      %1310 = vmax.xlane.f32.xlu0 %v1309
      %v1311 = vpop.xlane.xlu0 %1310
      %v1312 = vsel %vm1302, %v1297, -inf
      %1313 = vmax.xlane.f32.xlu0 %v1312
      %v1314 = vpop.xlane.xlu0 %1313
      %v1315 = vsel %vm1302, %v1298, -inf
      %1316 = vmax.xlane.f32.xlu0 %v1315
      %v1317 = vpop.xlane.xlu0 %1316
      %v1318 = vsel %vm1302, %v1299, -inf
      %1319 = vmax.xlane.f32.xlu0 %v1318
      %v1320 = vpop.xlane.xlu0 %1319
      %v1321 = vsel %vm1302, %v1300, -inf
      %1322 = vmax.xlane.f32.xlu0 %v1321
      %v1323 = vpop.xlane.xlu0 %1322
      %v1324 = vsel %vm1302, %v1301, -inf
      %1325 = vmax.xlane.f32.xlu0 %v1324
      %v1326 = vpop.xlane.xlu0 %1325
      %vm1327 = vcmp.gt.f32.partialorder %v1305, 0.0
      %vm1328 = vcmp.gt.f32.partialorder %v1308, 0.0
      %vm1329 = vcmp.gt.f32.partialorder %v1311, 0.0
      %vm1330 = vcmp.gt.f32.partialorder %v1314, 0.0
      %vm1331 = vcmp.gt.f32.partialorder %v1317, 0.0
      %vm1332 = vcmp.gt.f32.partialorder %v1320, 0.0
      %vm1333 = vcmp.gt.f32.partialorder %v1323, 0.0
      %vm1334 = vcmp.gt.f32.partialorder %v1326, 0.0
      %v1335 = vmul.f32 %v1101, %v1101
      %1336 = vadd.xlane.f32.xlu0 %v1335
      %v1337 = vpop.xlane.xlu0 %1336
      %v1338 = vadd.f32 %v1337, 1e-12
      %v1339 = vrsqrt.pop %v1338
      %v1340 = vmul.f32 %v1101, %v1339
      %v1341 = vpack.c.bf16 %v1340, %v1340
      %v1342 = vld [vmem:[#allocation7] sm:$0xff]
      %v1343 = vld [vmem:[#allocation7 + $0x8] sm:$0xff]
      %v1344 = vld [vmem:[#allocation7 + $0x10] sm:$0xff]
      %v1345 = vld [vmem:[#allocation7 + $0x18] sm:$0xff]
      %1346 = vmatprep.subr.bf16.mxu0 0
      %1347 = vmatpush1.bf16.xpose.msra.mxu0 %v1341
      %1348 = vmatprep.subr.bf16.mxu0 0
      %1349 = vmatpush1.bf16.xpose.msra.mxu0 0
      %1350 = vmatprep.subr.bf16.mxu0 0
      %1351 = vmatpush1.bf16.xpose.msra.mxu0 0
      %1352 = vmatprep.subr.bf16.mxu0 0
      %1353 = vmatpush1.bf16.xpose.msra.mxu0 0
      %1354 = vmatprep.subr.bf16.mxu0 0
      %1355 = vmatpush1.bf16.xpose.msra.mxu0 0
      %1356 = vmatprep.subr.bf16.mxu0 0
      %1357 = vmatpush1.bf16.xpose.msra.mxu0 0
      %1358 = vmatprep.subr.bf16.mxu0 0
      %1359 = vmatpush1.bf16.xpose.msra.mxu0 0
      %1360 = vmatprep.subr.bf16.mxu0 0
      %1361 = vmatpush1.bf16.xpose.msra.mxu0 0
      %1362 = vmatprep.subr.bf16.mxu0 0
      %1363 = vmatpush1.bf16.xpose.msra.mxu0 0
      %1364 = vmatprep.subr.bf16.mxu0 0
      %1365 = vmatpush1.bf16.xpose.msra.mxu0 0
      %1366 = vmatprep.subr.bf16.mxu0 0
      %1367 = vmatpush1.bf16.xpose.msra.mxu0 0
      %1368 = vmatprep.subr.bf16.mxu0 0
      %1369 = vmatpush1.bf16.xpose.msra.mxu0 0
      %1370 = vmatprep.subr.bf16.mxu0 0
      %1371 = vmatpush1.bf16.xpose.msra.mxu0 0
      %1372 = vmatprep.subr.bf16.mxu0 0
      %1373 = vmatpush1.bf16.xpose.msra.mxu0 0
      %1374 = vmatprep.subr.bf16.mxu0 0
      %1375 = vmatpush1.bf16.xpose.msra.mxu0 0
      %1376 = vmatprep.subr.bf16.mxu0 0
      %1377 = vmatpush1.bf16.xpose.msra.mxu0 0
      %1378 = vmatprep.mubr.bf16.mxu0 0
      %1379 = vmatmul.mubr.bf16.gmra.mrb[0].mxu0 %v1342
      %v1380 = vpop.f32.mrb[0].mxu0
      %v1381 = vadd.f32 0.0, %v1380
      %v1382 = vpop.f32.mrb[0].mxu0
      %v1383 = vpop.f32.mrb[0].mxu0
      %v1384 = vadd.f32 0.0, %v1383
      %v1385 = vpop.f32.mrb[0].mxu0
      %1386 = vmatprep.mubr.bf16.mxu0 0
      %1387 = vmatmul.mubr.bf16.gmra.mrb[0].mxu0 %v1343
      %v1388 = vpop.f32.mrb[0].mxu0
      %v1389 = vadd.f32 0.0, %v1388
      %v1390 = vpop.f32.mrb[0].mxu0
      %v1391 = vpop.f32.mrb[0].mxu0
      %v1392 = vadd.f32 0.0, %v1391
      %v1393 = vpop.f32.mrb[0].mxu0
      %1394 = vmatprep.mubr.bf16.mxu0 0
      %1395 = vmatmul.mubr.bf16.gmra.mrb[0].mxu0 %v1344
      %v1396 = vpop.f32.mrb[0].mxu0
      %v1397 = vadd.f32 0.0, %v1396
      %v1398 = vpop.f32.mrb[0].mxu0
      %v1399 = vpop.f32.mrb[0].mxu0
      %v1400 = vadd.f32 0.0, %v1399
      %v1401 = vpop.f32.mrb[0].mxu0
      %1402 = vmatprep.mubr.bf16.mxu0 0
      %1403 = vmatmul.mubr.bf16.gmra.mrb[0].mxu0 %v1345
      %v1404 = vpop.f32.mrb[0].mxu0
      %v1405 = vadd.f32 0.0, %v1404
      %v1406 = vpop.f32.mrb[0].mxu0
      %v1407 = vpop.f32.mrb[0].mxu0
      %v1408 = vadd.f32 0.0, %v1407
      %v1409 = vpop.f32.mrb[0].mxu0
      %1410 = vdwg.mxu0
      %v1411 = vmul.f32 %v1381, 0.5
      %v1412 = vmul.f32 %v1384, 0.5
      %v1413 = vmul.f32 %v1389, 0.5
      %v1414 = vmul.f32 %v1392, 0.5
      %v1415 = vmul.f32 %v1397, 0.5
      %v1416 = vmul.f32 %v1400, 0.5
      %v1417 = vmul.f32 %v1405, 0.5
      %v1418 = vmul.f32 %v1408, 0.5
      %v1419 = vadd.f32 %v1411, 0.5
      %v1420 = vadd.f32 %v1412, 0.5
      %v1421 = vadd.f32 %v1413, 0.5
      %v1422 = vadd.f32 %v1414, 0.5
      %v1423 = vadd.f32 %v1415, 0.5
      %v1424 = vadd.f32 %v1416, 0.5
      %v1425 = vadd.f32 %v1417, 0.5
      %v1426 = vadd.f32 %v1418, 0.5
      %v1427 = vsel %vm1327, 1, 0
      %v1428 = vsel %vm1328, 1, 0
      %v1429 = vsel %vm1329, 1, 0
      %v1430 = vsel %vm1330, 1, 0
      %v1431 = vsel %vm1331, 1, 0
      %v1432 = vsel %vm1332, 1, 0
      %v1433 = vsel %vm1333, 1, 0
      %v1434 = vsel %vm1334, 1, 0
      %vm1435 = vcmp.eq.s32.totalorder %v1427, 1
      %vm1436 = vcmp.eq.s32.totalorder %v1428, 1
      %vm1437 = vcmp.eq.s32.totalorder %v1429, 1
      %vm1438 = vcmp.eq.s32.totalorder %v1430, 1
      %vm1439 = vcmp.eq.s32.totalorder %v1431, 1
      %vm1440 = vcmp.eq.s32.totalorder %v1432, 1
      %vm1441 = vcmp.eq.s32.totalorder %v1433, 1
      %vm1442 = vcmp.eq.s32.totalorder %v1434, 1
      %v1443 = vsel %vm1435, %v1419, 0.0
      %v1444 = vsel %vm1436, %v1420, 0.0
      %v1445 = vsel %vm1437, %v1421, 0.0
      %v1446 = vsel %vm1438, %v1422, 0.0
      %v1447 = vsel %vm1439, %v1423, 0.0
      %v1448 = vsel %vm1440, %v1424, 0.0
      %v1449 = vsel %vm1441, %v1425, 0.0
      %v1450 = vsel %vm1442, %v1426, 0.0
      %1451 = vst.msk [vmem:[%s390] sm:$0xff] %vm1302, %v1443
      %1452 = vst.msk [vmem:[%s390 + $0x8] sm:$0xff] %vm1302, %v1444
      %1453 = vst.msk [vmem:[%s390 + $0x10] sm:$0xff] %vm1302, %v1445
      %1454 = vst.msk [vmem:[%s390 + $0x18] sm:$0xff] %vm1302, %v1446
      %1455 = vst.msk [vmem:[%s390 + $0x20] sm:$0xff] %vm1302, %v1447
      %1456 = vst.msk [vmem:[%s390 + $0x28] sm:$0xff] %vm1302, %v1448
      %1457 = vst.msk [vmem:[%s390 + $0x30] sm:$0xff] %vm1302, %v1449
      %1458 = vst.msk [vmem:[%s390 + $0x38] sm:$0xff] %vm1302, %v1450
      %v1459 = vsel %vm1286, %v1443, -inf
      %v1460 = vsel %vm1287, %v1444, -inf
      %v1461 = vsel %vm1288, %v1445, -inf
      %v1462 = vsel %vm1289, %v1446, -inf
      %v1463 = vsel %vm1290, %v1447, -inf
      %v1464 = vsel %vm1291, %v1448, -inf
      %v1465 = vsel %vm1292, %v1449, -inf
      %v1466 = vsel %vm1293, %v1450, -inf
      %v1467 = vlaneseq
      %v1468 = vshrl.u32 %v1467, 7
      %v1469 = vadd.s32 %v1468, 8
      %v1470 = vadd.s32 %v1468, 16
      %v1471 = vadd.s32 %v1468, 24
      %v1472 = vadd.s32 %v1468, 32
      %v1473 = vadd.s32 %v1468, 40
      %v1474 = vadd.s32 %v1468, 48
      %v1475 = vadd.s32 %v1468, 56
      %v1476 = vcvt.s32.f32 %v1468
      %v1477 = vcvt.s32.f32 %v1469
      %v1478 = vcvt.s32.f32 %v1470
      %v1479 = vcvt.s32.f32 %v1471
      %v1480 = vcvt.s32.f32 %v1472
      %v1481 = vcvt.s32.f32 %v1473
      %v1482 = vcvt.s32.f32 %v1474
      %v1483 = vcvt.s32.f32 %v1475
      %v1484 = vlaneseq
      %v1485 = vand.u32 %v1484, 127
      %v1486 = vld [vmem:[#allocation4] sm:$0xff]
      %v1487 = vld [vmem:[#allocation4 + $0x8] sm:$0xff]
      %v1488 = vld [vmem:[#allocation4 + $0x10] sm:$0xff]
      %v1489 = vld [vmem:[#allocation4 + $0x18] sm:$0xff]
      %v1490 = vld [vmem:[#allocation4 + $0x20] sm:$0xff]
      %v1491 = vld [vmem:[#allocation4 + $0x28] sm:$0xff]
      %v1492 = vld [vmem:[#allocation4 + $0x30] sm:$0xff]
      %v1493 = vld [vmem:[#allocation4 + $0x38] sm:$0xff]
      %vm1494 = vcmask 7168
      %v1495 = vsel %vm1494, %v1459, -inf
      %v1496 = vsel %vm1494, %v1460, -inf
      %v1497 = vsel %vm1494, %v1461, -inf
      %v1498 = vsel %vm1494, %v1462, -inf
      %v1499 = vsel %vm1494, %v1463, -inf
      %v1500 = vmax.f32 %v1495, %v1499
      %v1501 = vsel %vm1494, %v1464, -inf
      %v1502 = vmax.f32 %v1496, %v1501
      %v1503 = vsel %vm1494, %v1465, -inf
      %v1504 = vmax.f32 %v1497, %v1503
      %v1505 = vsel %vm1494, %v1466, -inf
      %v1506 = vmax.f32 %v1498, %v1505
      %v1507 = vmax.f32 %v1500, %v1502
      %v1508 = vmax.f32 %v1504, %v1506
      %v1509 = vmax.f32 %v1507, %v1508
      %1510 = vmax.xlane.f32.xlu0 %v1509
      %v1511 = vpop.xlane.xlu0 %1510
      %v1512 = vrot.slane %v1511, 4
      %v1513 = vmax.f32 %v1511, %v1512
      %v1514 = vrot.slane %v1513, 2
      %v1515 = vmax.f32 %v1513, %v1514
      %v1516 = vrot.slane %v1515, 1
      %v1517 = vmax.f32 %v1515, %v1516
      %s1518 = vtos %v1517
      %v1519 = vstv %s1518
      %vm1520 = vcmp.eq.f32.partialorder %v1459, %v1519
      %vm1521 = vcmp.eq.f32.partialorder %v1460, %v1519
      %vm1522 = vcmp.eq.f32.partialorder %v1461, %v1519
      %vm1523 = vcmp.eq.f32.partialorder %v1462, %v1519
      %vm1524 = vcmp.eq.f32.partialorder %v1463, %v1519
      %vm1525 = vcmp.eq.f32.partialorder %v1464, %v1519
      %vm1526 = vcmp.eq.f32.partialorder %v1465, %v1519
      %vm1527 = vcmp.eq.f32.partialorder %v1466, %v1519
      %v1528 = vsel %vm1520, %v1476, 64.0
      %v1529 = vsel %vm1521, %v1477, 64.0
      %v1530 = vsel %vm1522, %v1478, 64.0
      %v1531 = vsel %vm1523, %v1479, 64.0
      %v1532 = vsel %vm1524, %v1480, 64.0
      %v1533 = vsel %vm1525, %v1481, 64.0
      %v1534 = vsel %vm1526, %v1482, 64.0
      %v1535 = vsel %vm1527, %v1483, 64.0
      %v1536 = vsel %vm1494, %v1528, inf
      %v1537 = vsel %vm1494, %v1529, inf
      %v1538 = vsel %vm1494, %v1530, inf
      %v1539 = vsel %vm1494, %v1531, inf
      %v1540 = vsel %vm1494, %v1532, inf
      %v1541 = vmin.f32 %v1536, %v1540
      %v1542 = vsel %vm1494, %v1533, inf
      %v1543 = vmin.f32 %v1537, %v1542
      %v1544 = vsel %vm1494, %v1534, inf
      %v1545 = vmin.f32 %v1538, %v1544
      %v1546 = vsel %vm1494, %v1535, inf
      %v1547 = vmin.f32 %v1539, %v1546
      %v1548 = vmin.f32 %v1541, %v1543
      %v1549 = vmin.f32 %v1545, %v1547
      %v1550 = vmin.f32 %v1548, %v1549
      %1551 = vmin.xlane.f32.xlu0 %v1550
      %v1552 = vpop.xlane.xlu0 %1551
      %v1553 = vrot.slane %v1552, 4
      %v1554 = vmin.f32 %v1552, %v1553
      %v1555 = vrot.slane %v1554, 2
      %v1556 = vmin.f32 %v1554, %v1555
      %v1557 = vrot.slane %v1556, 1
      %v1558 = vmin.f32 %v1556, %v1557
      %s1559 = vtos %v1558
      %s1560 = scvt.f32.s32.to.zero.pseudo %s1559
      %v1561 = vstv %s1560
      %vm1562 = vcmp.eq.s32.totalorder %v1468, %v1561
      %vm1563 = vcmp.eq.s32.totalorder %v1469, %v1561
      %vm1564 = vcmp.eq.s32.totalorder %v1470, %v1561
      %vm1565 = vcmp.eq.s32.totalorder %v1471, %v1561
      %vm1566 = vcmp.eq.s32.totalorder %v1472, %v1561
      %vm1567 = vcmp.eq.s32.totalorder %v1473, %v1561
      %vm1568 = vcmp.eq.s32.totalorder %v1474, %v1561
      %vm1569 = vcmp.eq.s32.totalorder %v1475, %v1561
      %v1570 = vsel %vm1562, 1.0, 0.0
      %v1571 = vsel %vm1563, 1.0, 0.0
      %v1572 = vsel %vm1564, 1.0, 0.0
      %v1573 = vsel %vm1565, 1.0, 0.0
      %v1574 = vsel %vm1566, 1.0, 0.0
      %v1575 = vsel %vm1567, 1.0, 0.0
      %v1576 = vsel %vm1568, 1.0, 0.0
      %v1577 = vsel %vm1569, 1.0, 0.0
      %vm1578 = vcmp.eq.s32.totalorder %v1485, %v1561
      %v1579 = vsel %vm1578, 1.0, 0.0
      %vm1580 = vcmp.eq.s32.totalorder %v1468, 0
      %vm1581 = vcmp.eq.s32.totalorder %v1485, 0
      %vm1582 = vmand %vm1580, %vm1581
      %v1583 = vsel %vm1582, %v1561, 0
      %v1584 = vsel %vm1562, -inf, %v1459
      %v1585 = vsel %vm1563, -inf, %v1460
      %v1586 = vsel %vm1564, -inf, %v1461
      %v1587 = vsel %vm1565, -inf, %v1462
      %v1588 = vsel %vm1566, -inf, %v1463
      %v1589 = vsel %vm1567, -inf, %v1464
      %v1590 = vsel %vm1568, -inf, %v1465
      %v1591 = vsel %vm1569, -inf, %v1466
      %v1592 = vsel %vm1494, %v1584, -inf
      %v1593 = vsel %vm1494, %v1585, -inf
      %v1594 = vsel %vm1494, %v1586, -inf
      %v1595 = vsel %vm1494, %v1587, -inf
      %v1596 = vsel %vm1494, %v1588, -inf
      %v1597 = vmax.f32 %v1592, %v1596
      %v1598 = vsel %vm1494, %v1589, -inf
      %v1599 = vmax.f32 %v1593, %v1598
      %v1600 = vsel %vm1494, %v1590, -inf
      %v1601 = vmax.f32 %v1594, %v1600
      %v1602 = vsel %vm1494, %v1591, -inf
      %v1603 = vmax.f32 %v1595, %v1602
      %v1604 = vmax.f32 %v1597, %v1599
      %v1605 = vmax.f32 %v1601, %v1603
      %v1606 = vmax.f32 %v1604, %v1605
      %1607 = vmax.xlane.f32.xlu0 %v1606
      %v1608 = vpop.xlane.xlu0 %1607
      %v1609 = vrot.slane %v1608, 4
      %v1610 = vmax.f32 %v1608, %v1609
      %v1611 = vrot.slane %v1610, 2
      %v1612 = vmax.f32 %v1610, %v1611
      %v1613 = vrot.slane %v1612, 1
      %v1614 = vmax.f32 %v1612, %v1613
      %s1615 = vtos %v1614
      %v1616 = vstv %s1615
      %vm1617 = vcmp.eq.f32.partialorder %v1584, %v1616
      %vm1618 = vcmp.eq.f32.partialorder %v1585, %v1616
      %vm1619 = vcmp.eq.f32.partialorder %v1586, %v1616
      %vm1620 = vcmp.eq.f32.partialorder %v1587, %v1616
      %vm1621 = vcmp.eq.f32.partialorder %v1588, %v1616
      %vm1622 = vcmp.eq.f32.partialorder %v1589, %v1616
      %vm1623 = vcmp.eq.f32.partialorder %v1590, %v1616
      %vm1624 = vcmp.eq.f32.partialorder %v1591, %v1616
      %v1625 = vsel %vm1617, %v1476, 64.0
      %v1626 = vsel %vm1618, %v1477, 64.0
      %v1627 = vsel %vm1619, %v1478, 64.0
      %v1628 = vsel %vm1620, %v1479, 64.0
      %v1629 = vsel %vm1621, %v1480, 64.0
      %v1630 = vsel %vm1622, %v1481, 64.0
      %v1631 = vsel %vm1623, %v1482, 64.0
      %v1632 = vsel %vm1624, %v1483, 64.0
      %v1633 = vsel %vm1494, %v1625, inf
      %v1634 = vsel %vm1494, %v1626, inf
      %v1635 = vsel %vm1494, %v1627, inf
      %v1636 = vsel %vm1494, %v1628, inf
      %v1637 = vsel %vm1494, %v1629, inf
      %v1638 = vmin.f32 %v1633, %v1637
      %v1639 = vsel %vm1494, %v1630, inf
      %v1640 = vmin.f32 %v1634, %v1639
      %v1641 = vsel %vm1494, %v1631, inf
      %v1642 = vmin.f32 %v1635, %v1641
      %v1643 = vsel %vm1494, %v1632, inf
      %v1644 = vmin.f32 %v1636, %v1643
      %v1645 = vmin.f32 %v1638, %v1640
      %v1646 = vmin.f32 %v1642, %v1644
      %v1647 = vmin.f32 %v1645, %v1646
      %1648 = vmin.xlane.f32.xlu0 %v1647
      %v1649 = vpop.xlane.xlu0 %1648
      %v1650 = vrot.slane %v1649, 4
      %v1651 = vmin.f32 %v1649, %v1650
      %v1652 = vrot.slane %v1651, 2
      %v1653 = vmin.f32 %v1651, %v1652
      %v1654 = vrot.slane %v1653, 1
      %v1655 = vmin.f32 %v1653, %v1654
      %s1656 = vtos %v1655
      %s1657 = scvt.f32.s32.to.zero.pseudo %s1656
      %v1658 = vstv %s1657
      %vm1659 = vcmp.eq.s32.totalorder %v1468, %v1658
      %vm1660 = vcmp.eq.s32.totalorder %v1469, %v1658
      %vm1661 = vcmp.eq.s32.totalorder %v1470, %v1658
      %vm1662 = vcmp.eq.s32.totalorder %v1471, %v1658
      %vm1663 = vcmp.eq.s32.totalorder %v1472, %v1658
      %vm1664 = vcmp.eq.s32.totalorder %v1473, %v1658
      %vm1665 = vcmp.eq.s32.totalorder %v1474, %v1658
      %vm1666 = vcmp.eq.s32.totalorder %v1475, %v1658
      %v1667 = vsel %vm1659, 1.0, %v1570
      %v1668 = vsel %vm1660, 1.0, %v1571
      %v1669 = vsel %vm1661, 1.0, %v1572
      %v1670 = vsel %vm1662, 1.0, %v1573
      %v1671 = vsel %vm1663, 1.0, %v1574
      %v1672 = vsel %vm1664, 1.0, %v1575
      %v1673 = vsel %vm1665, 1.0, %v1576
      %v1674 = vsel %vm1666, 1.0, %v1577
      %vm1675 = vcmp.eq.s32.totalorder %v1485, %v1658
      %v1676 = vsel %vm1675, 1.0, %v1579
      %vm1677 = vcmp.eq.s32.totalorder %v1485, 1
      %vm1678 = vmand %vm1580, %vm1677
      %v1679 = vsel %vm1678, %v1658, %v1583
      %v1680 = vsel %vm1659, -inf, %v1584
      %v1681 = vsel %vm1660, -inf, %v1585
      %v1682 = vsel %vm1661, -inf, %v1586
      %v1683 = vsel %vm1662, -inf, %v1587
      %v1684 = vsel %vm1663, -inf, %v1588
      %v1685 = vsel %vm1664, -inf, %v1589
      %v1686 = vsel %vm1665, -inf, %v1590
      %v1687 = vsel %vm1666, -inf, %v1591
      %v1688 = vsel %vm1494, %v1680, -inf
      %v1689 = vsel %vm1494, %v1681, -inf
      %v1690 = vsel %vm1494, %v1682, -inf
      %v1691 = vsel %vm1494, %v1683, -inf
      %v1692 = vsel %vm1494, %v1684, -inf
      %v1693 = vmax.f32 %v1688, %v1692
      %v1694 = vsel %vm1494, %v1685, -inf
      %v1695 = vmax.f32 %v1689, %v1694
      %v1696 = vsel %vm1494, %v1686, -inf
      %v1697 = vmax.f32 %v1690, %v1696
      %v1698 = vsel %vm1494, %v1687, -inf
      %v1699 = vmax.f32 %v1691, %v1698
      %v1700 = vmax.f32 %v1693, %v1695
      %v1701 = vmax.f32 %v1697, %v1699
      %v1702 = vmax.f32 %v1700, %v1701
      %1703 = vmax.xlane.f32.xlu0 %v1702
      %v1704 = vpop.xlane.xlu0 %1703
      %v1705 = vrot.slane %v1704, 4
      %v1706 = vmax.f32 %v1704, %v1705
      %v1707 = vrot.slane %v1706, 2
      %v1708 = vmax.f32 %v1706, %v1707
      %v1709 = vrot.slane %v1708, 1
      %v1710 = vmax.f32 %v1708, %v1709
      %s1711 = vtos %v1710
      %v1712 = vstv %s1711
      %vm1713 = vcmp.eq.f32.partialorder %v1680, %v1712
      %vm1714 = vcmp.eq.f32.partialorder %v1681, %v1712
      %vm1715 = vcmp.eq.f32.partialorder %v1682, %v1712
      %vm1716 = vcmp.eq.f32.partialorder %v1683, %v1712
      %vm1717 = vcmp.eq.f32.partialorder %v1684, %v1712
      %vm1718 = vcmp.eq.f32.partialorder %v1685, %v1712
      %vm1719 = vcmp.eq.f32.partialorder %v1686, %v1712
      %vm1720 = vcmp.eq.f32.partialorder %v1687, %v1712
      %v1721 = vsel %vm1713, %v1476, 64.0
      %v1722 = vsel %vm1714, %v1477, 64.0
      %v1723 = vsel %vm1715, %v1478, 64.0
      %v1724 = vsel %vm1716, %v1479, 64.0
      %v1725 = vsel %vm1717, %v1480, 64.0
      %v1726 = vsel %vm1718, %v1481, 64.0
      %v1727 = vsel %vm1719, %v1482, 64.0
      %v1728 = vsel %vm1720, %v1483, 64.0
      %v1729 = vsel %vm1494, %v1721, inf
      %v1730 = vsel %vm1494, %v1722, inf
      %v1731 = vsel %vm1494, %v1723, inf
      %v1732 = vsel %vm1494, %v1724, inf
      %v1733 = vsel %vm1494, %v1725, inf
      %v1734 = vmin.f32 %v1729, %v1733
      %v1735 = vsel %vm1494, %v1726, inf
      %v1736 = vmin.f32 %v1730, %v1735
      %v1737 = vsel %vm1494, %v1727, inf
      %v1738 = vmin.f32 %v1731, %v1737
      %v1739 = vsel %vm1494, %v1728, inf
      %v1740 = vmin.f32 %v1732, %v1739
      %v1741 = vmin.f32 %v1734, %v1736
      %v1742 = vmin.f32 %v1738, %v1740
      %v1743 = vmin.f32 %v1741, %v1742
      %1744 = vmin.xlane.f32.xlu0 %v1743
      %v1745 = vpop.xlane.xlu0 %1744
      %v1746 = vrot.slane %v1745, 4
      %v1747 = vmin.f32 %v1745, %v1746
      %v1748 = vrot.slane %v1747, 2
      %v1749 = vmin.f32 %v1747, %v1748
      %v1750 = vrot.slane %v1749, 1
      %v1751 = vmin.f32 %v1749, %v1750
      %s1752 = vtos %v1751
      %s1753 = scvt.f32.s32.to.zero.pseudo %s1752
      %v1754 = vstv %s1753
      %vm1755 = vcmp.eq.s32.totalorder %v1468, %v1754
      %vm1756 = vcmp.eq.s32.totalorder %v1469, %v1754
      %vm1757 = vcmp.eq.s32.totalorder %v1470, %v1754
      %vm1758 = vcmp.eq.s32.totalorder %v1471, %v1754
      %vm1759 = vcmp.eq.s32.totalorder %v1472, %v1754
      %vm1760 = vcmp.eq.s32.totalorder %v1473, %v1754
      %vm1761 = vcmp.eq.s32.totalorder %v1474, %v1754
      %vm1762 = vcmp.eq.s32.totalorder %v1475, %v1754
      %v1763 = vsel %vm1755, 1.0, %v1667
      %v1764 = vsel %vm1756, 1.0, %v1668
      %v1765 = vsel %vm1757, 1.0, %v1669
      %v1766 = vsel %vm1758, 1.0, %v1670
      %v1767 = vsel %vm1759, 1.0, %v1671
      %v1768 = vsel %vm1760, 1.0, %v1672
      %v1769 = vsel %vm1761, 1.0, %v1673
      %v1770 = vsel %vm1762, 1.0, %v1674
      %vm1771 = vcmp.eq.s32.totalorder %v1485, %v1754
      %v1772 = vsel %vm1771, 1.0, %v1676
      %vm1773 = vcmp.eq.s32.totalorder %v1485, 2
      %vm1774 = vmand %vm1580, %vm1773
      %v1775 = vsel %vm1774, %v1754, %v1679
      %v1776 = vsel %vm1755, -inf, %v1680
      %v1777 = vsel %vm1756, -inf, %v1681
      %v1778 = vsel %vm1757, -inf, %v1682
      %v1779 = vsel %vm1758, -inf, %v1683
      %v1780 = vsel %vm1759, -inf, %v1684
      %v1781 = vsel %vm1760, -inf, %v1685
      %v1782 = vsel %vm1761, -inf, %v1686
      %v1783 = vsel %vm1762, -inf, %v1687
      %v1784 = vsel %vm1494, %v1776, -inf
      %v1785 = vsel %vm1494, %v1777, -inf
      %v1786 = vsel %vm1494, %v1778, -inf
      %v1787 = vsel %vm1494, %v1779, -inf
      %v1788 = vsel %vm1494, %v1780, -inf
      %v1789 = vmax.f32 %v1784, %v1788
      %v1790 = vsel %vm1494, %v1781, -inf
      %v1791 = vmax.f32 %v1785, %v1790
      %v1792 = vsel %vm1494, %v1782, -inf
      %v1793 = vmax.f32 %v1786, %v1792
      %v1794 = vsel %vm1494, %v1783, -inf
      %v1795 = vmax.f32 %v1787, %v1794
      %v1796 = vmax.f32 %v1789, %v1791
      %v1797 = vmax.f32 %v1793, %v1795
      %v1798 = vmax.f32 %v1796, %v1797
      %1799 = vmax.xlane.f32.xlu0 %v1798
      %v1800 = vpop.xlane.xlu0 %1799
      %v1801 = vrot.slane %v1800, 4
      %v1802 = vmax.f32 %v1800, %v1801
      %v1803 = vrot.slane %v1802, 2
      %v1804 = vmax.f32 %v1802, %v1803
      %v1805 = vrot.slane %v1804, 1
      %v1806 = vmax.f32 %v1804, %v1805
      %s1807 = vtos %v1806
      %v1808 = vstv %s1807
      %vm1809 = vcmp.eq.f32.partialorder %v1776, %v1808
      %vm1810 = vcmp.eq.f32.partialorder %v1777, %v1808
      %vm1811 = vcmp.eq.f32.partialorder %v1778, %v1808
      %vm1812 = vcmp.eq.f32.partialorder %v1779, %v1808
      %vm1813 = vcmp.eq.f32.partialorder %v1780, %v1808
      %vm1814 = vcmp.eq.f32.partialorder %v1781, %v1808
      %vm1815 = vcmp.eq.f32.partialorder %v1782, %v1808
      %vm1816 = vcmp.eq.f32.partialorder %v1783, %v1808
      %v1817 = vsel %vm1809, %v1476, 64.0
      %v1818 = vsel %vm1810, %v1477, 64.0
      %v1819 = vsel %vm1811, %v1478, 64.0
      %v1820 = vsel %vm1812, %v1479, 64.0
      %v1821 = vsel %vm1813, %v1480, 64.0
      %v1822 = vsel %vm1814, %v1481, 64.0
      %v1823 = vsel %vm1815, %v1482, 64.0
      %v1824 = vsel %vm1816, %v1483, 64.0
      %v1825 = vsel %vm1494, %v1817, inf
      %v1826 = vsel %vm1494, %v1818, inf
      %v1827 = vsel %vm1494, %v1819, inf
      %v1828 = vsel %vm1494, %v1820, inf
      %v1829 = vsel %vm1494, %v1821, inf
      %v1830 = vmin.f32 %v1825, %v1829
      %v1831 = vsel %vm1494, %v1822, inf
      %v1832 = vmin.f32 %v1826, %v1831
      %v1833 = vsel %vm1494, %v1823, inf
      %v1834 = vmin.f32 %v1827, %v1833
      %v1835 = vsel %vm1494, %v1824, inf
      %v1836 = vmin.f32 %v1828, %v1835
      %v1837 = vmin.f32 %v1830, %v1832
      %v1838 = vmin.f32 %v1834, %v1836
      %v1839 = vmin.f32 %v1837, %v1838
      %1840 = vmin.xlane.f32.xlu0 %v1839
      %v1841 = vpop.xlane.xlu0 %1840
      %v1842 = vrot.slane %v1841, 4
      %v1843 = vmin.f32 %v1841, %v1842
      %v1844 = vrot.slane %v1843, 2
      %v1845 = vmin.f32 %v1843, %v1844
      %v1846 = vrot.slane %v1845, 1
      %v1847 = vmin.f32 %v1845, %v1846
      %s1848 = vtos %v1847
      %s1849 = scvt.f32.s32.to.zero.pseudo %s1848
      %v1850 = vstv %s1849
      %vm1851 = vcmp.eq.s32.totalorder %v1468, %v1850
      %vm1852 = vcmp.eq.s32.totalorder %v1469, %v1850
      %vm1853 = vcmp.eq.s32.totalorder %v1470, %v1850
      %vm1854 = vcmp.eq.s32.totalorder %v1471, %v1850
      %vm1855 = vcmp.eq.s32.totalorder %v1472, %v1850
      %vm1856 = vcmp.eq.s32.totalorder %v1473, %v1850
      %vm1857 = vcmp.eq.s32.totalorder %v1474, %v1850
      %vm1858 = vcmp.eq.s32.totalorder %v1475, %v1850
      %v1859 = vsel %vm1851, 1.0, %v1763
      %v1860 = vsel %vm1852, 1.0, %v1764
      %v1861 = vsel %vm1853, 1.0, %v1765
      %v1862 = vsel %vm1854, 1.0, %v1766
      %v1863 = vsel %vm1855, 1.0, %v1767
      %v1864 = vsel %vm1856, 1.0, %v1768
      %v1865 = vsel %vm1857, 1.0, %v1769
      %v1866 = vsel %vm1858, 1.0, %v1770
      %vm1867 = vcmp.eq.s32.totalorder %v1485, %v1850
      %v1868 = vsel %vm1867, 1.0, %v1772
      %vm1869 = vcmp.eq.s32.totalorder %v1485, 3
      %vm1870 = vmand %vm1580, %vm1869
      %v1871 = vsel %vm1870, %v1850, %v1775
      %v1872 = vmax.f32 %v1859, 0.0
      %v1873 = vmax.f32 %v1860, 0.0
      %v1874 = vmax.f32 %v1861, 0.0
      %v1875 = vmax.f32 %v1862, 0.0
      %v1876 = vmax.f32 %v1863, 0.0
      %v1877 = vmax.f32 %v1864, 0.0
      %v1878 = vmax.f32 %v1865, 0.0
      %v1879 = vmax.f32 %v1866, 0.0
      %v1880 = vmax.f32 %v1486, %v1859
      %v1881 = vmax.f32 %v1487, %v1860
      %v1882 = vmax.f32 %v1488, %v1861
      %v1883 = vmax.f32 %v1489, %v1862
      %v1884 = vmax.f32 %v1490, %v1863
      %v1885 = vmax.f32 %v1491, %v1864
      %v1886 = vmax.f32 %v1492, %v1865
      %v1887 = vmax.f32 %v1493, %v1866
      %v1888 = vsel %vm1581, %v1880, %v1486
      %v1889 = vsel %vm1581, %v1881, %v1487
      %v1890 = vsel %vm1581, %v1882, %v1488
      %v1891 = vsel %vm1581, %v1883, %v1489
      %v1892 = vsel %vm1581, %v1884, %v1490
      %v1893 = vsel %vm1581, %v1885, %v1491
      %v1894 = vsel %vm1581, %v1886, %v1492
      %v1895 = vsel %vm1581, %v1887, %v1493
      %v1896 = vmul.f32 %v1868, 0.25
      %v1897 = vsel %vm1580, %v1896, 0.0
      %vm1898 = vcmask 15368
      %v1899 = vsel %vm1898, %v1459, -inf
      %v1900 = vsel %vm1898, %v1460, -inf
      %v1901 = vsel %vm1898, %v1461, -inf
      %v1902 = vsel %vm1898, %v1462, -inf
      %v1903 = vsel %vm1898, %v1463, -inf
      %v1904 = vmax.f32 %v1899, %v1903
      %v1905 = vsel %vm1898, %v1464, -inf
      %v1906 = vmax.f32 %v1900, %v1905
      %v1907 = vsel %vm1898, %v1465, -inf
      %v1908 = vmax.f32 %v1901, %v1907
      %v1909 = vsel %vm1898, %v1466, -inf
      %v1910 = vmax.f32 %v1902, %v1909
      %v1911 = vmax.f32 %v1904, %v1906
      %v1912 = vmax.f32 %v1908, %v1910
      %v1913 = vmax.f32 %v1911, %v1912
      %1914 = vmax.xlane.f32.xlu0 %v1913
      %v1915 = vpop.xlane.xlu0 %1914
      %v1916 = vrot.slane %v1915, 4
      %v1917 = vmax.f32 %v1915, %v1916
      %v1918 = vrot.slane %v1917, 2
      %v1919 = vmax.f32 %v1917, %v1918
      %v1920 = vrot.slane %v1919, 1
      %v1921 = vmax.f32 %v1919, %v1920
      %s1922 = vtos %v1921
      %v1923 = vstv %s1922
      %vm1924 = vcmp.eq.f32.partialorder %v1459, %v1923
      %vm1925 = vcmp.eq.f32.partialorder %v1460, %v1923
      %vm1926 = vcmp.eq.f32.partialorder %v1461, %v1923
      %vm1927 = vcmp.eq.f32.partialorder %v1462, %v1923
      %vm1928 = vcmp.eq.f32.partialorder %v1463, %v1923
      %vm1929 = vcmp.eq.f32.partialorder %v1464, %v1923
      %vm1930 = vcmp.eq.f32.partialorder %v1465, %v1923
      %vm1931 = vcmp.eq.f32.partialorder %v1466, %v1923
      %v1932 = vsel %vm1924, %v1476, 64.0
      %v1933 = vsel %vm1925, %v1477, 64.0
      %v1934 = vsel %vm1926, %v1478, 64.0
      %v1935 = vsel %vm1927, %v1479, 64.0
      %v1936 = vsel %vm1928, %v1480, 64.0
      %v1937 = vsel %vm1929, %v1481, 64.0
      %v1938 = vsel %vm1930, %v1482, 64.0
      %v1939 = vsel %vm1931, %v1483, 64.0
      %v1940 = vsel %vm1898, %v1932, inf
      %v1941 = vsel %vm1898, %v1933, inf
      %v1942 = vsel %vm1898, %v1934, inf
      %v1943 = vsel %vm1898, %v1935, inf
      %v1944 = vsel %vm1898, %v1936, inf
      %v1945 = vmin.f32 %v1940, %v1944
      %v1946 = vsel %vm1898, %v1937, inf
      %v1947 = vmin.f32 %v1941, %v1946
      %v1948 = vsel %vm1898, %v1938, inf
      %v1949 = vmin.f32 %v1942, %v1948
      %v1950 = vsel %vm1898, %v1939, inf
      %v1951 = vmin.f32 %v1943, %v1950
      %v1952 = vmin.f32 %v1945, %v1947
      %v1953 = vmin.f32 %v1949, %v1951
      %v1954 = vmin.f32 %v1952, %v1953
      %1955 = vmin.xlane.f32.xlu0 %v1954
      %v1956 = vpop.xlane.xlu0 %1955
      %v1957 = vrot.slane %v1956, 4
      %v1958 = vmin.f32 %v1956, %v1957
      %v1959 = vrot.slane %v1958, 2
      %v1960 = vmin.f32 %v1958, %v1959
      %v1961 = vrot.slane %v1960, 1
      %v1962 = vmin.f32 %v1960, %v1961
      %s1963 = vtos %v1962
      %s1964 = scvt.f32.s32.to.zero.pseudo %s1963
      %v1965 = vstv %s1964
      %vm1966 = vcmp.eq.s32.totalorder %v1468, %v1965
      %vm1967 = vcmp.eq.s32.totalorder %v1469, %v1965
      %vm1968 = vcmp.eq.s32.totalorder %v1470, %v1965
      %vm1969 = vcmp.eq.s32.totalorder %v1471, %v1965
      %vm1970 = vcmp.eq.s32.totalorder %v1472, %v1965
      %vm1971 = vcmp.eq.s32.totalorder %v1473, %v1965
      %vm1972 = vcmp.eq.s32.totalorder %v1474, %v1965
      %vm1973 = vcmp.eq.s32.totalorder %v1475, %v1965
      %v1974 = vsel %vm1966, 1.0, 0.0
      %v1975 = vsel %vm1967, 1.0, 0.0
      %v1976 = vsel %vm1968, 1.0, 0.0
      %v1977 = vsel %vm1969, 1.0, 0.0
      %v1978 = vsel %vm1970, 1.0, 0.0
      %v1979 = vsel %vm1971, 1.0, 0.0
      %v1980 = vsel %vm1972, 1.0, 0.0
      %v1981 = vsel %vm1973, 1.0, 0.0
      %vm1982 = vcmp.eq.s32.totalorder %v1485, %v1965
      %v1983 = vsel %vm1982, 1.0, 0.0
      %vm1984 = vcmp.eq.s32.totalorder %v1468, 1
      %vm1985 = vmand %vm1984, %vm1581
      %v1986 = vsel %vm1985, %v1965, %v1871
      %v1987 = vsel %vm1966, -inf, %v1459
      %v1988 = vsel %vm1967, -inf, %v1460
      %v1989 = vsel %vm1968, -inf, %v1461
      %v1990 = vsel %vm1969, -inf, %v1462
      %v1991 = vsel %vm1970, -inf, %v1463
      %v1992 = vsel %vm1971, -inf, %v1464
      %v1993 = vsel %vm1972, -inf, %v1465
      %v1994 = vsel %vm1973, -inf, %v1466
      %v1995 = vsel %vm1898, %v1987, -inf
      %v1996 = vsel %vm1898, %v1988, -inf
      %v1997 = vsel %vm1898, %v1989, -inf
      %v1998 = vsel %vm1898, %v1990, -inf
      %v1999 = vsel %vm1898, %v1991, -inf
      %v2000 = vmax.f32 %v1995, %v1999
      %v2001 = vsel %vm1898, %v1992, -inf
      %v2002 = vmax.f32 %v1996, %v2001
      %v2003 = vsel %vm1898, %v1993, -inf
      %v2004 = vmax.f32 %v1997, %v2003
      %v2005 = vsel %vm1898, %v1994, -inf
      %v2006 = vmax.f32 %v1998, %v2005
      %v2007 = vmax.f32 %v2000, %v2002
      %v2008 = vmax.f32 %v2004, %v2006
      %v2009 = vmax.f32 %v2007, %v2008
      %2010 = vmax.xlane.f32.xlu0 %v2009
      %v2011 = vpop.xlane.xlu0 %2010
      %v2012 = vrot.slane %v2011, 4
      %v2013 = vmax.f32 %v2011, %v2012
      %v2014 = vrot.slane %v2013, 2
      %v2015 = vmax.f32 %v2013, %v2014
      %v2016 = vrot.slane %v2015, 1
      %v2017 = vmax.f32 %v2015, %v2016
      %s2018 = vtos %v2017
      %v2019 = vstv %s2018
      %vm2020 = vcmp.eq.f32.partialorder %v1987, %v2019
      %vm2021 = vcmp.eq.f32.partialorder %v1988, %v2019
      %vm2022 = vcmp.eq.f32.partialorder %v1989, %v2019
      %vm2023 = vcmp.eq.f32.partialorder %v1990, %v2019
      %vm2024 = vcmp.eq.f32.partialorder %v1991, %v2019
      %vm2025 = vcmp.eq.f32.partialorder %v1992, %v2019
      %vm2026 = vcmp.eq.f32.partialorder %v1993, %v2019
      %vm2027 = vcmp.eq.f32.partialorder %v1994, %v2019
      %v2028 = vsel %vm2020, %v1476, 64.0
      %v2029 = vsel %vm2021, %v1477, 64.0
      %v2030 = vsel %vm2022, %v1478, 64.0
      %v2031 = vsel %vm2023, %v1479, 64.0
      %v2032 = vsel %vm2024, %v1480, 64.0
      %v2033 = vsel %vm2025, %v1481, 64.0
      %v2034 = vsel %vm2026, %v1482, 64.0
      %v2035 = vsel %vm2027, %v1483, 64.0
      %v2036 = vsel %vm1898, %v2028, inf
      %v2037 = vsel %vm1898, %v2029, inf
      %v2038 = vsel %vm1898, %v2030, inf
      %v2039 = vsel %vm1898, %v2031, inf
      %v2040 = vsel %vm1898, %v2032, inf
      %v2041 = vmin.f32 %v2036, %v2040
      %v2042 = vsel %vm1898, %v2033, inf
      %v2043 = vmin.f32 %v2037, %v2042
      %v2044 = vsel %vm1898, %v2034, inf
      %v2045 = vmin.f32 %v2038, %v2044
      %v2046 = vsel %vm1898, %v2035, inf
      %v2047 = vmin.f32 %v2039, %v2046
      %v2048 = vmin.f32 %v2041, %v2043
      %v2049 = vmin.f32 %v2045, %v2047
      %v2050 = vmin.f32 %v2048, %v2049
      %2051 = vmin.xlane.f32.xlu0 %v2050
      %v2052 = vpop.xlane.xlu0 %2051
      %v2053 = vrot.slane %v2052, 4
      %v2054 = vmin.f32 %v2052, %v2053
      %v2055 = vrot.slane %v2054, 2
      %v2056 = vmin.f32 %v2054, %v2055
      %v2057 = vrot.slane %v2056, 1
      %v2058 = vmin.f32 %v2056, %v2057
      %s2059 = vtos %v2058
      %s2060 = scvt.f32.s32.to.zero.pseudo %s2059
      %v2061 = vstv %s2060
      %vm2062 = vcmp.eq.s32.totalorder %v1468, %v2061
      %vm2063 = vcmp.eq.s32.totalorder %v1469, %v2061
      %vm2064 = vcmp.eq.s32.totalorder %v1470, %v2061
      %vm2065 = vcmp.eq.s32.totalorder %v1471, %v2061
      %vm2066 = vcmp.eq.s32.totalorder %v1472, %v2061
      %vm2067 = vcmp.eq.s32.totalorder %v1473, %v2061
      %vm2068 = vcmp.eq.s32.totalorder %v1474, %v2061
      %vm2069 = vcmp.eq.s32.totalorder %v1475, %v2061
      %v2070 = vsel %vm2062, 1.0, %v1974
      %v2071 = vsel %vm2063, 1.0, %v1975
      %v2072 = vsel %vm2064, 1.0, %v1976
      %v2073 = vsel %vm2065, 1.0, %v1977
      %v2074 = vsel %vm2066, 1.0, %v1978
      %v2075 = vsel %vm2067, 1.0, %v1979
      %v2076 = vsel %vm2068, 1.0, %v1980
      %v2077 = vsel %vm2069, 1.0, %v1981
      %vm2078 = vcmp.eq.s32.totalorder %v1485, %v2061
      %v2079 = vsel %vm2078, 1.0, %v1983
      %vm2080 = vmand %vm1984, %vm1677
      %v2081 = vsel %vm2080, %v2061, %v1986
      %v2082 = vsel %vm2062, -inf, %v1987
      %v2083 = vsel %vm2063, -inf, %v1988
      %v2084 = vsel %vm2064, -inf, %v1989
      %v2085 = vsel %vm2065, -inf, %v1990
      %v2086 = vsel %vm2066, -inf, %v1991
      %v2087 = vsel %vm2067, -inf, %v1992
      %v2088 = vsel %vm2068, -inf, %v1993
      %v2089 = vsel %vm2069, -inf, %v1994
      %v2090 = vsel %vm1898, %v2082, -inf
      %v2091 = vsel %vm1898, %v2083, -inf
      %v2092 = vsel %vm1898, %v2084, -inf
      %v2093 = vsel %vm1898, %v2085, -inf
      %v2094 = vsel %vm1898, %v2086, -inf
      %v2095 = vmax.f32 %v2090, %v2094
      %v2096 = vsel %vm1898, %v2087, -inf
      %v2097 = vmax.f32 %v2091, %v2096
      %v2098 = vsel %vm1898, %v2088, -inf
      %v2099 = vmax.f32 %v2092, %v2098
      %v2100 = vsel %vm1898, %v2089, -inf
      %v2101 = vmax.f32 %v2093, %v2100
      %v2102 = vmax.f32 %v2095, %v2097
      %v2103 = vmax.f32 %v2099, %v2101
      %v2104 = vmax.f32 %v2102, %v2103
      %2105 = vmax.xlane.f32.xlu0 %v2104
      %v2106 = vpop.xlane.xlu0 %2105
      %v2107 = vrot.slane %v2106, 4
      %v2108 = vmax.f32 %v2106, %v2107
      %v2109 = vrot.slane %v2108, 2
      %v2110 = vmax.f32 %v2108, %v2109
      %v2111 = vrot.slane %v2110, 1
      %v2112 = vmax.f32 %v2110, %v2111
      %s2113 = vtos %v2112
      %v2114 = vstv %s2113
      %vm2115 = vcmp.eq.f32.partialorder %v2082, %v2114
      %vm2116 = vcmp.eq.f32.partialorder %v2083, %v2114
      %vm2117 = vcmp.eq.f32.partialorder %v2084, %v2114
      %vm2118 = vcmp.eq.f32.partialorder %v2085, %v2114
      %vm2119 = vcmp.eq.f32.partialorder %v2086, %v2114
      %vm2120 = vcmp.eq.f32.partialorder %v2087, %v2114
      %vm2121 = vcmp.eq.f32.partialorder %v2088, %v2114
      %vm2122 = vcmp.eq.f32.partialorder %v2089, %v2114
      %v2123 = vsel %vm2115, %v1476, 64.0
      %v2124 = vsel %vm2116, %v1477, 64.0
      %v2125 = vsel %vm2117, %v1478, 64.0
      %v2126 = vsel %vm2118, %v1479, 64.0
      %v2127 = vsel %vm2119, %v1480, 64.0
      %v2128 = vsel %vm2120, %v1481, 64.0
      %v2129 = vsel %vm2121, %v1482, 64.0
      %v2130 = vsel %vm2122, %v1483, 64.0
      %v2131 = vsel %vm1898, %v2123, inf
      %v2132 = vsel %vm1898, %v2124, inf
      %v2133 = vsel %vm1898, %v2125, inf
      %v2134 = vsel %vm1898, %v2126, inf
      %v2135 = vsel %vm1898, %v2127, inf
      %v2136 = vmin.f32 %v2131, %v2135
      %v2137 = vsel %vm1898, %v2128, inf
      %v2138 = vmin.f32 %v2132, %v2137
      %v2139 = vsel %vm1898, %v2129, inf
      %v2140 = vmin.f32 %v2133, %v2139
      %v2141 = vsel %vm1898, %v2130, inf
      %v2142 = vmin.f32 %v2134, %v2141
      %v2143 = vmin.f32 %v2136, %v2138
      %v2144 = vmin.f32 %v2140, %v2142
      %v2145 = vmin.f32 %v2143, %v2144
      %2146 = vmin.xlane.f32.xlu0 %v2145
      %v2147 = vpop.xlane.xlu0 %2146
      %v2148 = vrot.slane %v2147, 4
      %v2149 = vmin.f32 %v2147, %v2148
      %v2150 = vrot.slane %v2149, 2
      %v2151 = vmin.f32 %v2149, %v2150
      %v2152 = vrot.slane %v2151, 1
      %v2153 = vmin.f32 %v2151, %v2152
      %s2154 = vtos %v2153
      %s2155 = scvt.f32.s32.to.zero.pseudo %s2154
      %v2156 = vstv %s2155
      %vm2157 = vcmp.eq.s32.totalorder %v1468, %v2156
      %vm2158 = vcmp.eq.s32.totalorder %v1469, %v2156
      %vm2159 = vcmp.eq.s32.totalorder %v1470, %v2156
      %vm2160 = vcmp.eq.s32.totalorder %v1471, %v2156
      %vm2161 = vcmp.eq.s32.totalorder %v1472, %v2156
      %vm2162 = vcmp.eq.s32.totalorder %v1473, %v2156
      %vm2163 = vcmp.eq.s32.totalorder %v1474, %v2156
      %vm2164 = vcmp.eq.s32.totalorder %v1475, %v2156
      %v2165 = vsel %vm2157, 1.0, %v2070
      %v2166 = vsel %vm2158, 1.0, %v2071
      %v2167 = vsel %vm2159, 1.0, %v2072
      %v2168 = vsel %vm2160, 1.0, %v2073
      %v2169 = vsel %vm2161, 1.0, %v2074
      %v2170 = vsel %vm2162, 1.0, %v2075
      %v2171 = vsel %vm2163, 1.0, %v2076
      %v2172 = vsel %vm2164, 1.0, %v2077
      %vm2173 = vcmp.eq.s32.totalorder %v1485, %v2156
      %v2174 = vsel %vm2173, 1.0, %v2079
      %vm2175 = vmand %vm1984, %vm1773
      %v2176 = vsel %vm2175, %v2156, %v2081
      %v2177 = vsel %vm2157, -inf, %v2082
      %v2178 = vsel %vm2158, -inf, %v2083
      %v2179 = vsel %vm2159, -inf, %v2084
      %v2180 = vsel %vm2160, -inf, %v2085
      %v2181 = vsel %vm2161, -inf, %v2086
      %v2182 = vsel %vm2162, -inf, %v2087
      %v2183 = vsel %vm2163, -inf, %v2088
      %v2184 = vsel %vm2164, -inf, %v2089
      %v2185 = vsel %vm1898, %v2177, -inf
      %v2186 = vsel %vm1898, %v2178, -inf
      %v2187 = vsel %vm1898, %v2179, -inf
      %v2188 = vsel %vm1898, %v2180, -inf
      %v2189 = vsel %vm1898, %v2181, -inf
      %v2190 = vmax.f32 %v2185, %v2189
      %v2191 = vsel %vm1898, %v2182, -inf
      %v2192 = vmax.f32 %v2186, %v2191
      %v2193 = vsel %vm1898, %v2183, -inf
      %v2194 = vmax.f32 %v2187, %v2193
      %v2195 = vsel %vm1898, %v2184, -inf
      %v2196 = vmax.f32 %v2188, %v2195
      %v2197 = vmax.f32 %v2190, %v2192
      %v2198 = vmax.f32 %v2194, %v2196
      %v2199 = vmax.f32 %v2197, %v2198
      %2200 = vmax.xlane.f32.xlu0 %v2199
      %v2201 = vpop.xlane.xlu0 %2200
      %v2202 = vrot.slane %v2201, 4
      %v2203 = vmax.f32 %v2201, %v2202
      %v2204 = vrot.slane %v2203, 2
      %v2205 = vmax.f32 %v2203, %v2204
      %v2206 = vrot.slane %v2205, 1
      %v2207 = vmax.f32 %v2205, %v2206
      %s2208 = vtos %v2207
      %v2209 = vstv %s2208
      %vm2210 = vcmp.eq.f32.partialorder %v2177, %v2209
      %vm2211 = vcmp.eq.f32.partialorder %v2178, %v2209
      %vm2212 = vcmp.eq.f32.partialorder %v2179, %v2209
      %vm2213 = vcmp.eq.f32.partialorder %v2180, %v2209
      %vm2214 = vcmp.eq.f32.partialorder %v2181, %v2209
      %vm2215 = vcmp.eq.f32.partialorder %v2182, %v2209
      %vm2216 = vcmp.eq.f32.partialorder %v2183, %v2209
      %vm2217 = vcmp.eq.f32.partialorder %v2184, %v2209
      %v2218 = vsel %vm2210, %v1476, 64.0
      %v2219 = vsel %vm2211, %v1477, 64.0
      %v2220 = vsel %vm2212, %v1478, 64.0
      %v2221 = vsel %vm2213, %v1479, 64.0
      %v2222 = vsel %vm2214, %v1480, 64.0
      %v2223 = vsel %vm2215, %v1481, 64.0
      %v2224 = vsel %vm2216, %v1482, 64.0
      %v2225 = vsel %vm2217, %v1483, 64.0
      %v2226 = vsel %vm1898, %v2218, inf
      %v2227 = vsel %vm1898, %v2219, inf
      %v2228 = vsel %vm1898, %v2220, inf
      %v2229 = vsel %vm1898, %v2221, inf
      %v2230 = vsel %vm1898, %v2222, inf
      %v2231 = vmin.f32 %v2226, %v2230
      %v2232 = vsel %vm1898, %v2223, inf
      %v2233 = vmin.f32 %v2227, %v2232
      %v2234 = vsel %vm1898, %v2224, inf
      %v2235 = vmin.f32 %v2228, %v2234
      %v2236 = vsel %vm1898, %v2225, inf
      %v2237 = vmin.f32 %v2229, %v2236
      %v2238 = vmin.f32 %v2231, %v2233
      %v2239 = vmin.f32 %v2235, %v2237
      %v2240 = vmin.f32 %v2238, %v2239
      %2241 = vmin.xlane.f32.xlu0 %v2240
      %v2242 = vpop.xlane.xlu0 %2241
      %v2243 = vrot.slane %v2242, 4
      %v2244 = vmin.f32 %v2242, %v2243
      %v2245 = vrot.slane %v2244, 2
      %v2246 = vmin.f32 %v2244, %v2245
      %v2247 = vrot.slane %v2246, 1
      %v2248 = vmin.f32 %v2246, %v2247
      %s2249 = vtos %v2248
      %s2250 = scvt.f32.s32.to.zero.pseudo %s2249
      %v2251 = vstv %s2250
      %vm2252 = vcmp.eq.s32.totalorder %v1468, %v2251
      %vm2253 = vcmp.eq.s32.totalorder %v1469, %v2251
      %vm2254 = vcmp.eq.s32.totalorder %v1470, %v2251
      %vm2255 = vcmp.eq.s32.totalorder %v1471, %v2251
      %vm2256 = vcmp.eq.s32.totalorder %v1472, %v2251
      %vm2257 = vcmp.eq.s32.totalorder %v1473, %v2251
      %vm2258 = vcmp.eq.s32.totalorder %v1474, %v2251
      %vm2259 = vcmp.eq.s32.totalorder %v1475, %v2251
      %v2260 = vsel %vm2252, 1.0, %v2165
      %v2261 = vsel %vm2253, 1.0, %v2166
      %v2262 = vsel %vm2254, 1.0, %v2167
      %v2263 = vsel %vm2255, 1.0, %v2168
      %v2264 = vsel %vm2256, 1.0, %v2169
      %v2265 = vsel %vm2257, 1.0, %v2170
      %v2266 = vsel %vm2258, 1.0, %v2171
      %v2267 = vsel %vm2259, 1.0, %v2172
      %vm2268 = vcmp.eq.s32.totalorder %v1485, %v2251
      %v2269 = vsel %vm2268, 1.0, %v2174
      %vm2270 = vmand %vm1984, %vm1869
      %v2271 = vsel %vm2270, %v2251, %v2176
      %v2272 = vmax.f32 %v1872, %v2260
      %v2273 = vmax.f32 %v1873, %v2261
      %v2274 = vmax.f32 %v1874, %v2262
      %v2275 = vmax.f32 %v1875, %v2263
      %v2276 = vmax.f32 %v1876, %v2264
      %v2277 = vmax.f32 %v1877, %v2265
      %v2278 = vmax.f32 %v1878, %v2266
      %v2279 = vmax.f32 %v1879, %v2267
      %v2280 = vmax.f32 %v1888, %v2260
      %v2281 = vmax.f32 %v1889, %v2261
      %v2282 = vmax.f32 %v1890, %v2262
      %v2283 = vmax.f32 %v1891, %v2263
      %v2284 = vmax.f32 %v1892, %v2264
      %v2285 = vmax.f32 %v1893, %v2265
      %v2286 = vmax.f32 %v1894, %v2266
      %v2287 = vmax.f32 %v1895, %v2267
      %v2288 = vsel %vm1677, %v2280, %v1888
      %v2289 = vsel %vm1677, %v2281, %v1889
      %v2290 = vsel %vm1677, %v2282, %v1890
      %v2291 = vsel %vm1677, %v2283, %v1891
      %v2292 = vsel %vm1677, %v2284, %v1892
      %v2293 = vsel %vm1677, %v2285, %v1893
      %v2294 = vsel %vm1677, %v2286, %v1894
      %v2295 = vsel %vm1677, %v2287, %v1895
      %v2296 = vmul.f32 %v2269, 0.25
      %v2297 = vsel %vm1984, %v2296, %v1897
      %2298 = vst.msk [vmem:[#allocation4] sm:$0xff] %vm1302, %v2288
      %2299 = vst.msk [vmem:[#allocation4 + $0x8] sm:$0xff] %vm1302, %v2289
      %2300 = vst.msk [vmem:[#allocation4 + $0x10] sm:$0xff] %vm1302, %v2290
      %2301 = vst.msk [vmem:[#allocation4 + $0x18] sm:$0xff] %vm1302, %v2291
      %2302 = vst.msk [vmem:[#allocation4 + $0x20] sm:$0xff] %vm1302, %v2292
      %2303 = vst.msk [vmem:[#allocation4 + $0x28] sm:$0xff] %vm1302, %v2293
      %2304 = vst.msk [vmem:[#allocation4 + $0x30] sm:$0xff] %vm1302, %v2294
      %2305 = vst.msk [vmem:[#allocation4 + $0x38] sm:$0xff] %vm1302, %v2295
      %2306 = vst.msk [vmem:[#allocation3] sm:$0xff] %vm518, %v2297
      %v2307 = vld [vmem:[#allocation5] sm:$0xff]
      %v2308 = vld [vmem:[#allocation5 + $0x8] sm:$0xff]
      %v2309 = vld [vmem:[#allocation5 + $0x10] sm:$0xff]
      %v2310 = vld [vmem:[#allocation5 + $0x18] sm:$0xff]
      %v2311 = vld [vmem:[#allocation5 + $0x20] sm:$0xff]
      %v2312 = vld [vmem:[#allocation5 + $0x28] sm:$0xff]
      %v2313 = vld [vmem:[#allocation5 + $0x30] sm:$0xff]
      %v2314 = vld [vmem:[#allocation5 + $0x38] sm:$0xff]
      %v2315 = vmax.f32 %v2307, %v2272
      %v2316 = vmax.f32 %v2308, %v2273
      %v2317 = vmax.f32 %v2309, %v2274
      %v2318 = vmax.f32 %v2310, %v2275
      %v2319 = vmax.f32 %v2311, %v2276
      %v2320 = vmax.f32 %v2312, %v2277
      %v2321 = vmax.f32 %v2313, %v2278
      %v2322 = vmax.f32 %v2314, %v2279
      %2323 = vst.msk [vmem:[#allocation5] sm:$0xff] %vm1494, %v2315
      %2324 = vst.msk [vmem:[#allocation5 + $0x8] sm:$0xff] %vm1494, %v2316
      %2325 = vst.msk [vmem:[#allocation5 + $0x10] sm:$0xff] %vm1494, %v2317
      %2326 = vst.msk [vmem:[#allocation5 + $0x18] sm:$0xff] %vm1494, %v2318
      %2327 = vst.msk [vmem:[#allocation5 + $0x20] sm:$0xff] %vm1494, %v2319
      %2328 = vst.msk [vmem:[#allocation5 + $0x28] sm:$0xff] %vm1494, %v2320
      %2329 = vst.msk [vmem:[#allocation5 + $0x30] sm:$0xff] %vm1494, %v2321
      %2330 = vst.msk [vmem:[#allocation5 + $0x38] sm:$0xff] %vm1494, %v2322
      %2331 = vst [vmem:[%s394] sm:$0xff] %v2271
      %p2332 = scmp.lt.s32.totalorder %s30, 1
      %s2333 = scalar_select %p2332, %s30, 1
      %s2334 = smul.addr %s2333, 8
      %s2335 = scalar_lea.vmem %s10, %s2334
      %p2336 = scmp.lt.s32.totalorder %s30, 1
      %s2337 = scalar_select %p2336, %s30, 1
      %s2338 = smul.addr %s2337, 8
      %s2339 = smul.addr %s2338, 8
      %s2340 = scalar_lea.vmem %s11, %s2339
      %p2341 = scmp.lt.s32.totalorder %s30, 1
      %s2342 = scalar_select %p2341, %s30, 1
      %s2343 = smul.addr %s2342, 8
      %s2344 = scalar_lea.vmem %s12, %s2343
      // Predicated region
      $region61: #{run.3} parent=55 // pred_check
        %p2345 = pneg %p237
      $region62: #{run.3} parent=55 // pred_check_branch
        %2347 = sbr.rel (%p2345) target = $region64
      $region63: #{run.3} parent=55 // pred_region
        _
      $region64: #{run.3} parent=55 // pred_fallthru
        _
      // Predicated region
      $region65: #{run.3} parent=55 // pred_check
        %p2348 = pneg %p263
      $region66: #{run.3} parent=55 // pred_check_branch
        %2350 = sbr.rel (%p2348) target = $region68
      $region67: #{run.3} parent=55 // pred_region
        _
      $region68: #{run.3} parent=55 // pred_fallthru
        _
      // Predicated region
      $region69: #{run.3} parent=55 // pred_check
        %p2351 = pneg %p289
      $region70: #{run.3} parent=55 // pred_check_branch
        %2353 = sbr.rel (%p2351) target = $region72
      $region71: #{run.3} parent=55 // pred_region
        _
      $region72: #{run.3} parent=55 // pred_fallthru
        _
    $region56: #{run.3} parent=5 // pred_fallthru
      _
    %p2354 = scmp.le.s32.totalorder 2, %s25
    // Predicated region
    $region73: #{run.3} parent=5 // pred_check
      %p2355 = pneg %p2354
    $region74: #{run.3} parent=5 // pred_check_branch
      %2357 = sbr.rel (%p2355) target = $region76
    $region75: #{run.3} parent=5 // pred_region
      %s2358 = ssub.s32 %s25, 2
      // Predicated region
      $region77: #{run.3} parent=75 // pred_check
        %p2359 = pneg %p243
      $region78: #{run.3} parent=75 // pred_check_branch
        %2361 = sbr.rel (%p2359) target = $region80
      $region79: #{run.3} parent=75 // pred_region
        %p2362 = scmp.lt.s32.totalorder %s31, 1
        %s2363 = scalar_select %p2362, %s31, 1
        %s2364 = smul.addr %s2363, 8
        %s2365 = scalar_lea.vmem %s10, %s2364
      $region80: #{run.3} parent=75 // pred_fallthru
        _
      // Predicated region
      $region81: #{run.3} parent=75 // pred_check
        %p2366 = pneg %p269
      $region82: #{run.3} parent=75 // pred_check_branch
        %2368 = sbr.rel (%p2366) target = $region84
      $region83: #{run.3} parent=75 // pred_region
        %p2369 = scmp.lt.s32.totalorder %s31, 1
        %s2370 = scalar_select %p2369, %s31, 1
        %s2371 = smul.addr %s2370, 8
        %s2372 = smul.addr %s2371, 8
        %s2373 = scalar_lea.vmem %s11, %s2372
      $region84: #{run.3} parent=75 // pred_fallthru
        _
      // Predicated region
      $region85: #{run.3} parent=75 // pred_check
        %p2374 = pneg %p295
      $region86: #{run.3} parent=75 // pred_check_branch
        %2376 = sbr.rel (%p2374) target = $region88
      $region87: #{run.3} parent=75 // pred_region
        %p2377 = scmp.lt.s32.totalorder %s31, 1
        %s2378 = scalar_select %p2377, %s31, 1
        %s2379 = smul.addr %s2378, 8
        %s2380 = scalar_lea.vmem %s12, %s2379
      $region88: #{run.3} parent=75 // pred_fallthru
        _
    $region76: #{run.3} parent=5 // pred_fallthru
      _
  $region6: #{run.3} parent=0 // loop_footer
    %s29 = sadd.s32 1, %s25
  $region7: #{run.3} parent=0 // loop_footer_branch
    %24 = sbr.rel target = $region3
  $region8: #{run.3} parent=0 // loop_exit
    _

</llo_original>
